<compile_context>
chip_gen: v6e
topology: v6e:2x2x1
jax: 0.10.0
libtpu: 0.0.40
codegen_flags: <defaults>
</compile_context>

<pallas_src>
import functools

import jax
import jax.numpy as jnp
from jax.experimental import pallas as pl
from jax.experimental.pallas import tpu as pltpu

EPS = 1e-5
_TOK_GRID = 7                    # SwinTransFER CAM hard-codes a 7x7 token grid
_L = _TOK_GRID * _TOK_GRID       # 49 real tokens per image
_LP = 56                         # padded tokens per image; Bt*56 % 128 == 0 when Bt % 16 == 0


def _round_up(x, m):
    return (x + m - 1) // m * m


def _pick_batch_block(B):
    """Big steps amortize the ~0.35us per-step overhead; >=2 steps keep both
    v7x TensorCores busy; the 128 cap keeps the per-step working set well
    under v7x's 64 MiB VMEM (and the 48 MiB limit set below)."""
    Bp = _round_up(B, 16)
    if Bp <= 16:
        return Bp
    return min(_round_up((Bp + 1) // 2, 16), 128)


# ----------------------------------------------------------------------------
# Kernel (one grid step = Bt images, R = Bt * 56 token rows):
#   tok_ref   : (R, Pq)    bf16  flattened image patches (stand-in encoder input)
#   w_e_ref   : (Pq, C)    bf16  patch-embed weight      (stand-in encoder)
#   b_e_ref   : (1, C)     f32   patch-embed bias
#   gamma_ref : (1, C)     f32   LayerNorm weight
#   beta_ref  : (1, C)     f32   LayerNorm bias
#   w_h_ref   : (Kp8, C)   bf16  head weight, zero-padded rows (K-major)
#   b_h_ref   : (1, Kp8)   f32   head bias, zero-padded
#   logit_ref : (Bt, Kp8)  f32   logits
#   hm_ref    : (Kp8, R)   f32   K-major CAM (reshaped/sliced in wrapper)
# ----------------------------------------------------------------------------
def _encode_and_norm(tok_ref, w_e_ref, b_e_ref, gamma_ref, beta_ref):
    """Stand-in encoder (linear patch embed) + nn.LayerNorm(C), f32 stats."""
    # TODO(synk): linear patch embedding stands in for encoder.forward_features.
    x = jnp.dot(tok_ref[...], w_e_ref[...],
                preferred_element_type=jnp.float32) + b_e_ref[...]        # (R, C)
    c = x.shape[-1]
    # one-pass statistics: the two XLU reductions no longer serialize behind
    # a (x - mu) subtraction.
    s1 = jnp.sum(x, axis=-1, keepdims=True)
    s2 = jnp.sum(x * x, axis=-1, keepdims=True)
    mu = s1 * (1.0 / c)
    var = s2 * (1.0 / c) - mu * mu
    xn = (x - mu) * jax.lax.rsqrt(var + EPS)
    return xn * gamma_ref[...] + beta_ref[...]                            # (R, C)


def _pooled_logits(xn_b, w_h_ref, b_h_ref, bt, lp, l):
    """Per-image mean over the 49 real token rows, then the Linear head."""
    r = xn_b.shape[0]
    col = jax.lax.broadcasted_iota(jnp.int32, (bt, r), 1)
    row = jax.lax.broadcasted_iota(jnp.int32, (bt, r), 0)
    start = row * lp
    sel = jnp.where((col >= start) & (col < start + l), 1.0, 0.0)         # 0/1 mask
    feat = jnp.dot(sel.astype(jnp.bfloat16), xn_b,
                   preferred_element_type=jnp.float32) * (1.0 / l)        # (Bt, C)
    logits = jax.lax.dot_general(
        feat.astype(jnp.bfloat16), w_h_ref[...],
        (((1,), (1,)), ((), ())), preferred_element_type=jnp.float32)     # (Bt, Kp8)
    return logits + b_h_ref[...]


def _swinfer_cam_kernel(tok_ref, w_e_ref, b_e_ref, gamma_ref, beta_ref,
                        w_h_ref, b_h_ref, logit_ref, hm_ref, *, bt, lp, l):
    xn = _encode_and_norm(tok_ref, w_e_ref, b_e_ref, gamma_ref, beta_ref)
    xn_b = xn.astype(jnp.bfloat16)
    # K-major CAM: hm[k, b*lp + t] = sum_c w_h[k, c] * xn[b, t, c]
    hm_ref[...] = jax.lax.dot_general(
        w_h_ref[...], xn_b, (((1,), (1,)), ((), ())),
        preferred_element_type=jnp.float32)                               # (Kp8, R)
    logit_ref[...] = _pooled_logits(xn_b, w_h_ref, b_h_ref, bt, lp, l)


def _swinfer_nocam_kernel(tok_ref, w_e_ref, b_e_ref, gamma_ref, beta_ref,
                          w_h_ref, b_h_ref, logit_ref, *, bt, lp, l):
    xn = _encode_and_norm(tok_ref, w_e_ref, b_e_ref, gamma_ref, beta_ref)
    logit_ref[...] = _pooled_logits(xn.astype(jnp.bfloat16), w_h_ref, b_h_ref,
                                    bt, lp, l)


@functools.partial(jax.jit, static_argnames=("patch", "cam", "batch_block"))
def swin_trans_fer_forward(img, params, *, patch=4, cam=True, batch_block=None):
    """img: (B, Cin, H, W) f32 NCHW. Returns (logits, hm) (or logits if cam=False)."""
    B, Cin, H, W = img.shape
    hp, wp = H // patch, W // patch
    L = hp * wp
    assert L == _L, "SwinTransFER CAM reshape hard-codes a 7x7 token grid"
    P = Cin * patch * patch

    w_e, b_e, gamma, beta, w_h, b_h = params
    C = w_e.shape[1]
    K = w_h.shape[0]
    assert C % 128 == 0, "feature dim should be lane-aligned"

    Bt = batch_block if batch_block is not None else _pick_batch_block(B)
    assert Bt % 16 == 0, "batch block must be a multiple of 16 (keeps Bt*56 lane-aligned)"

    Lp = _LP
    Pq = _round_up(P, 8)          # sublane-align only; no P->128 contraction padding
    Bp = _round_up(B, Bt)
    Kp = _round_up(K, 8)          # K-major CAM rows / padded head width
    R = Bt * Lp                   # token rows per grid step (multiple of 128)

    # ---- wrapper-side layout plumbing (bf16 end-to-end; no f32 staging) ----
    x = img.reshape(B, Cin, hp, patch, wp, patch)
    x = jnp.transpose(x, (0, 2, 4, 1, 3, 5)).reshape(B, L, P).astype(jnp.bfloat16)
    tok = jnp.zeros((Bp, Lp, Pq), jnp.bfloat16).at[:B, :L, :P].set(x)
    tok = tok.reshape(Bp * Lp, Pq)

    if Pq == P:
        w_e_p = w_e.astype(jnp.bfloat16)
    else:
        w_e_p = jnp.zeros((Pq, C), w_e.dtype).at[:P, :].set(w_e).astype(jnp.bfloat16)
    w_h_p = jnp.zeros((Kp, C), jnp.float32).at[:K, :].set(w_h).astype(jnp.bfloat16)
    b_h_p = jnp.zeros((1, Kp), jnp.float32).at[:, :K].set(b_h.reshape(1, K))
    b_e_p = b_e.reshape(1, C).astype(jnp.float32)
    gamma_p = gamma.reshape(1, C).astype(jnp.float32)
    beta_p = beta.reshape(1, C).astype(jnp.float32)

    grid = (Bp // Bt,)
    in_specs = [
        pl.BlockSpec((R, Pq), lambda i: (i, 0)),      # tokens (per-step tile)
        pl.BlockSpec((Pq, C), lambda i: (0, 0)),      # patch-embed weight (fetched once)
        pl.BlockSpec((1, C), lambda i: (0, 0)),       # patch-embed bias
        pl.BlockSpec((1, C), lambda i: (0, 0)),       # LN gamma
        pl.BlockSpec((1, C), lambda i: (0, 0)),       # LN beta
        pl.BlockSpec((Kp, C), lambda i: (0, 0)),      # head weight rows (K-major)
        pl.BlockSpec((1, Kp), lambda i: (0, 0)),      # head bias (padded)
    ]
    logit_spec = pl.BlockSpec((Bt, Kp), lambda i: (i, 0))
    logit_shape = jax.ShapeDtypeStruct((Bp, Kp), jnp.float32)
    compiler_params = pltpu.CompilerParams(
        dimension_semantics=("parallel",),
        vmem_limit_bytes=48 * 1024 * 1024,            # above 16/32 MiB defaults, < v7x 64 MiB
    )
    args = (tok, w_e_p, b_e_p, gamma_p, beta_p, w_h_p, b_h_p)

    if cam:
        kernel = functools.partial(_swinfer_cam_kernel, bt=Bt, lp=Lp, l=L)
        logits_p, hm_p = pl.pallas_call(
            kernel,
            grid_spec=pltpu.PrefetchScalarGridSpec(
                num_scalar_prefetch=0, grid=grid,
                in_specs=in_specs,
                out_specs=(logit_spec,
                           pl.BlockSpec((Kp, R), lambda i: (0, i))),
            ),
            out_shape=(logit_shape,
                       jax.ShapeDtypeStruct((Kp, Bp * Lp), jnp.float32)),
            compiler_params=compiler_params,
        )(*args)
        logits = logits_p[:B, :K]
        # (Kp, Bp*Lp) -> (K, B, L) -> (B, K, 7, 7); padded rows/images (which hold
        # LayerNorm-of-zeros garbage) are dropped here and never read downstream.
        hm = hm_p.reshape(Kp, Bp, Lp)[:K, :B, :L]
        hm = jnp.transpose(hm, (1, 0, 2)).reshape(B, K, _TOK_GRID, _TOK_GRID)
        return logits, hm

    kernel = functools.partial(_swinfer_nocam_kernel, bt=Bt, lp=Lp, l=L)
    logits_p = pl.pallas_call(
        kernel,
        grid_spec=pltpu.PrefetchScalarGridSpec(
            num_scalar_prefetch=0, grid=grid,
            in_specs=in_specs, out_specs=logit_spec,
        ),
        out_shape=logit_shape,
        compiler_params=compiler_params,
    )(*args)
    return logits_p[:B, :K]


def make_params(key, P, C, K):
    ks = jax.random.split(key, 4)
    w_e = jax.random.normal(ks[0], (P, C), jnp.float32) * 0.02
    b_e = jnp.zeros((1, C), jnp.float32)
    gamma = jnp.ones((1, C), jnp.float32)
    beta = jnp.zeros((1, C), jnp.float32)
    w_h = jax.random.normal(ks[1], (K, C), jnp.float32) * 0.05
    b_h = jax.random.normal(ks[2], (1, K), jnp.float32) * 0.01
    return w_e, b_e, gamma, beta, w_h, b_h


def reference_forward(img, params, *, patch=4):
    """Pure-JAX f32 reference of the same math, for a correctness check."""
    B, Cin, H, W = img.shape
    hp, wp = H // patch, W // patch
    L, P = hp * wp, Cin * patch * patch
    w_e, b_e, gamma, beta, w_h, b_h = params
    x = img.reshape(B, Cin, hp, patch, wp, patch)
    x = jnp.transpose(x, (0, 2, 4, 1, 3, 5)).reshape(B, L, P).astype(jnp.float32)
    x = x @ w_e + b_e                                          # (B, L, C)
    mu = jnp.mean(x, -1, keepdims=True)
    var = jnp.mean(jnp.square(x - mu), -1, keepdims=True)
    xn = (x - mu) / jnp.sqrt(var + EPS) * gamma + beta
    feat = jnp.mean(xn, axis=1)                                # (B, C)
    logits = feat @ w_h.T + b_h
    hm = jnp.einsum('blc,kc->bkl', xn, w_h).reshape(B, w_h.shape[0], 7, 7)
    return logits, hm


if __name__ == "__main__":
    key = jax.random.PRNGKey(0)
    k_img, k_par = jax.random.split(key)

    # 28x28 input with patch=4 -> 7x7 token grid, as required by the CAM view.
    B, Cin, H, W = 32, 4, 28, 28
    patch, C, K = 4, 128, 7
    P = Cin * patch * patch

    img = jax.random.normal(k_img, (B, Cin, H, W), jnp.float32)
    params = make_params(k_par, P, C, K)

    logits, hm = swin_trans_fer_forward(img, params, patch=patch, cam=True)
    logits, hm = jax.block_until_ready((logits, hm))
    logits_nc = swin_trans_fer_forward(img, params, patch=patch, cam=False)
    logits_nc = jax.block_until_ready(logits_nc)

    ref_logits, ref_hm = reference_forward(img, params, patch=patch)
    assert logits.shape == (B, K) and hm.shape == (B, K, 7, 7)
    assert logits_nc.shape == (B, K)
    # bf16 MXU operands (f32 accumulation) -> slightly looser tolerances.
    assert jnp.allclose(logits, ref_logits, rtol=2e-2, atol=2e-2)
    assert jnp.allclose(logits_nc, ref_logits, rtol=2e-2, atol=2e-2)
    assert jnp.allclose(hm, ref_hm, rtol=2e-2, atol=2e-2)

    print("KERNEL_OK")
</pallas_src>

<mosaic_0001>
module attributes {stable_mosaic.version = 11 : i64} {
  func.func @_swinfer_cam_kernel(%arg0: i32, %arg1: memref<896x64xbf16, #tpu.memory_space<vmem>>, %arg2: memref<64x128xbf16, #tpu.memory_space<vmem>>, %arg3: memref<1x128xf32, #tpu.memory_space<vmem>>, %arg4: memref<1x128xf32, #tpu.memory_space<vmem>>, %arg5: memref<1x128xf32, #tpu.memory_space<vmem>>, %arg6: memref<8x128xbf16, #tpu.memory_space<vmem>>, %arg7: memref<1x8xf32, #tpu.memory_space<vmem>>, %arg8: memref<16x8xf32, #tpu.memory_space<vmem>>, %arg9: memref<8x896xf32, #tpu.memory_space<vmem>>) attributes {dimension_semantics = [#tpu.dimension_semantics<parallel>], iteration_bounds = array<i64: 2>, scalar_prefetch = 0 : i64, scratch_operands = 0 : i64, tpu.core_type = #tpu.core_type<tc>, window_params = [{transform_indices = @transform_0, window_bounds = array<i64: 896, 64>}, {pipeline_mode = #tpu.pipeline_mode<synchronous>, transform_indices = @transform_1, window_bounds = array<i64: 64, 128>}, {pipeline_mode = #tpu.pipeline_mode<synchronous>, transform_indices = @transform_2, window_bounds = array<i64: 1, 128>}, {pipeline_mode = #tpu.pipeline_mode<synchronous>, transform_indices = @transform_3, window_bounds = array<i64: 1, 128>}, {pipeline_mode = #tpu.pipeline_mode<synchronous>, transform_indices = @transform_4, window_bounds = array<i64: 1, 128>}, {pipeline_mode = #tpu.pipeline_mode<synchronous>, transform_indices = @transform_5, window_bounds = array<i64: 8, 128>}, {pipeline_mode = #tpu.pipeline_mode<synchronous>, transform_indices = @transform_6, window_bounds = array<i64: 1, 8>}, {transform_indices = @transform_7, window_bounds = array<i64: 16, 8>}, {transform_indices = @transform_8, window_bounds = array<i64: 8, 896>}]} {
    %c0 = arith.constant 0 : index
    %c0_0 = arith.constant 0 : index
    %0 = vector.load %arg1[%c0, %c0_0] : memref<896x64xbf16, #tpu.memory_space<vmem>>, vector<896x64xbf16>
    %c0_1 = arith.constant 0 : index
    %c0_2 = arith.constant 0 : index
    %1 = vector.load %arg2[%c0_1, %c0_2] : memref<64x128xbf16, #tpu.memory_space<vmem>>, vector<64x128xbf16>
    %cst = arith.constant dense<0.000000e+00> : vector<896x128xf32>
    %2 = tpu.matmul %0, %1, %cst {dimension_numbers = #tpu.dot_dimension_numbers<[1], [0], [0], [1], [0, 0, 1, 1], [], []>} : vector<896x64xbf16>, vector<64x128xbf16>, vector<896x128xf32> -> vector<896x128xf32>
    %c0_3 = arith.constant 0 : index
    %c0_4 = arith.constant 0 : index
    %3 = vector.load %arg3[%c0_3, %c0_4] : memref<1x128xf32, #tpu.memory_space<vmem>>, vector<1x128xf32>
    %4 = vector.broadcast %3 : vector<1x128xf32> to vector<896x128xf32>
    %5 = arith.addf %2, %4 : vector<896x128xf32>
    %cst_5 = arith.constant dense<0.000000e+00> : vector<896xf32>
    %6 = vector.multi_reduction <add>, %5, %cst_5 [1] : vector<896x128xf32> to vector<896xf32>
    %7 = vector.shape_cast %6 : vector<896xf32> to vector<896x1xf32>
    %8 = arith.mulf %5, %5 : vector<896x128xf32>
    %cst_6 = arith.constant dense<0.000000e+00> : vector<896xf32>
    %9 = vector.multi_reduction <add>, %8, %cst_6 [1] : vector<896x128xf32> to vector<896xf32>
    %10 = vector.shape_cast %9 : vector<896xf32> to vector<896x1xf32>
    %cst_7 = arith.constant 7.812500e-03 : f32
    %11 = vector.broadcast %cst_7 : f32 to vector<896x1xf32>
    %12 = arith.mulf %7, %11 : vector<896x1xf32>
    %cst_8 = arith.constant 7.812500e-03 : f32
    %13 = vector.broadcast %cst_8 : f32 to vector<896x1xf32>
    %14 = arith.mulf %10, %13 : vector<896x1xf32>
    %15 = arith.mulf %12, %12 : vector<896x1xf32>
    %16 = arith.subf %14, %15 : vector<896x1xf32>
    %17 = vector.broadcast %12 : vector<896x1xf32> to vector<896x128xf32>
    %18 = arith.subf %5, %17 : vector<896x128xf32>
    %cst_9 = arith.constant 9.99999974E-6 : f32
    %19 = vector.broadcast %cst_9 : f32 to vector<896x1xf32>
    %20 = arith.addf %16, %19 : vector<896x1xf32>
    %21 = math.rsqrt %20 : vector<896x1xf32>
    %22 = vector.broadcast %21 : vector<896x1xf32> to vector<896x128xf32>
    %23 = arith.mulf %18, %22 : vector<896x128xf32>
    %c0_10 = arith.constant 0 : index
    %c0_11 = arith.constant 0 : index
    %24 = vector.load %arg4[%c0_10, %c0_11] : memref<1x128xf32, #tpu.memory_space<vmem>>, vector<1x128xf32>
    %25 = vector.broadcast %24 : vector<1x128xf32> to vector<896x128xf32>
    %26 = arith.mulf %23, %25 : vector<896x128xf32>
    %c0_12 = arith.constant 0 : index
    %c0_13 = arith.constant 0 : index
    %27 = vector.load %arg5[%c0_12, %c0_13] : memref<1x128xf32, #tpu.memory_space<vmem>>, vector<1x128xf32>
    %28 = vector.broadcast %27 : vector<1x128xf32> to vector<896x128xf32>
    %29 = arith.addf %26, %28 : vector<896x128xf32>
    %30 = arith.truncf %29 : vector<896x128xf32> to vector<896x128xbf16>
    %c0_14 = arith.constant 0 : index
    %c0_15 = arith.constant 0 : index
    %31 = vector.load %arg6[%c0_14, %c0_15] : memref<8x128xbf16, #tpu.memory_space<vmem>>, vector<8x128xbf16>
    %cst_16 = arith.constant dense<0.000000e+00> : vector<8x896xf32>
    %32 = tpu.matmul %31, %30, %cst_16 {dimension_numbers = #tpu.dot_dimension_numbers<[1], [1], [0], [0], [0, 0, 1, 0], [], []>} : vector<8x128xbf16>, vector<896x128xbf16>, vector<8x896xf32> -> vector<8x896xf32>
    %c0_17 = arith.constant 0 : index
    %c0_18 = arith.constant 0 : index
    %33 = vector.load %arg9[%c0_17, %c0_18] : memref<8x896xf32, #tpu.memory_space<vmem>>, vector<8x896xf32>
    tpu.vector_store %arg9[%c0_17, %c0_18], %32 {strides = array<i32>} : memref<8x896xf32, #tpu.memory_space<vmem>>, vector<8x896xf32>,
    %34 = tpu.iota {dimensions = array<i32: 1>} : vector<16x896xi32>
    %35 = tpu.iota {dimensions = array<i32: 0>} : vector<16x896xi32>
    %c56_i32 = arith.constant 56 : i32
    %36 = vector.broadcast %c56_i32 : i32 to vector<16x896xi32>
    %37 = arith.muli %35, %36 : vector<16x896xi32>
    %38 = arith.cmpi sge, %34, %37 : vector<16x896xi32>
    %c49_i32 = arith.constant 49 : i32
    %39 = vector.broadcast %c49_i32 : i32 to vector<16x896xi32>
    %40 = arith.addi %37, %39 : vector<16x896xi32>
    %41 = arith.cmpi slt, %34, %40 : vector<16x896xi32>
    %42 = arith.andi %38, %41 : vector<16x896xi1>
    %cst_19 = arith.constant 1.000000e+00 : f32
    %cst_20 = arith.constant 0.000000e+00 : f32
    %43 = vector.broadcast %cst_19 : f32 to vector<16x896xf32>
    %44 = vector.broadcast %cst_20 : f32 to vector<16x896xf32>
    %45 = arith.select %42, %43, %44 : vector<16x896xi1>, vector<16x896xf32>
    %46 = arith.truncf %45 : vector<16x896xf32> to vector<16x896xbf16>
    %cst_21 = arith.constant dense<0.000000e+00> : vector<16x128xf32>
    %47 = tpu.matmul %46, %30, %cst_21 {dimension_numbers = #tpu.dot_dimension_numbers<[1], [0], [0], [1], [0, 0, 1, 1], [], []>} : vector<16x896xbf16>, vector<896x128xbf16>, vector<16x128xf32> -> vector<16x128xf32>
    %cst_22 = arith.constant 0.0204081628 : f32
    %48 = vector.broadcast %cst_22 : f32 to vector<16x128xf32>
    %49 = arith.mulf %47, %48 : vector<16x128xf32>
    %50 = arith.truncf %49 : vector<16x128xf32> to vector<16x128xbf16>
    %c0_23 = arith.constant 0 : index
    %c0_24 = arith.constant 0 : index
    %51 = vector.load %arg6[%c0_23, %c0_24] : memref<8x128xbf16, #tpu.memory_space<vmem>>, vector<8x128xbf16>
    %cst_25 = arith.constant dense<0.000000e+00> : vector<16x8xf32>
    %52 = tpu.matmul %50, %51, %cst_25 {dimension_numbers = #tpu.dot_dimension_numbers<[1], [1], [0], [0], [0, 0, 1, 0], [], []>} : vector<16x128xbf16>, vector<8x128xbf16>, vector<16x8xf32> -> vector<16x8xf32>
    %c0_26 = arith.constant 0 : index
    %c0_27 = arith.constant 0 : index
    %53 = vector.load %arg7[%c0_26, %c0_27] : memref<1x8xf32, #tpu.memory_space<vmem>>, vector<1x8xf32>
    %54 = vector.broadcast %53 : vector<1x8xf32> to vector<16x8xf32>
    %55 = arith.addf %52, %54 : vector<16x8xf32>
    %c0_28 = arith.constant 0 : index
    %c0_29 = arith.constant 0 : index
    %56 = vector.load %arg8[%c0_28, %c0_29] : memref<16x8xf32, #tpu.memory_space<vmem>>, vector<16x8xf32>
    tpu.vector_store %arg8[%c0_28, %c0_29], %55 {strides = array<i32>} : memref<16x8xf32, #tpu.memory_space<vmem>>, vector<16x8xf32>,
    return
  }
  func.func @transform_0(%arg0: i32) -> (i32, i32) {
    %c0_i32 = arith.constant 0 : i32
    %c0_i32_0 = arith.constant 0 : i32
    return %arg0, %c0_i32 : i32, i32
  }
  func.func @transform_1(%arg0: i32) -> (i32, i32) {
    %c0_i32 = arith.constant 0 : i32
    %c0_i32_0 = arith.constant 0 : i32
    %c0_i32_1 = arith.constant 0 : i32
    return %c0_i32, %c0_i32_0 : i32, i32
  }
  func.func @transform_2(%arg0: i32) -> (i32, i32) {
    %c0_i32 = arith.constant 0 : i32
    %c0_i32_0 = arith.constant 0 : i32
    %c0_i32_1 = arith.constant 0 : i32
    return %c0_i32, %c0_i32_0 : i32, i32
  }
  func.func @transform_3(%arg0: i32) -> (i32, i32) {
    %c0_i32 = arith.constant 0 : i32
    %c0_i32_0 = arith.constant 0 : i32
    %c0_i32_1 = arith.constant 0 : i32
    return %c0_i32, %c0_i32_0 : i32, i32
  }
  func.func @transform_4(%arg0: i32) -> (i32, i32) {
    %c0_i32 = arith.constant 0 : i32
    %c0_i32_0 = arith.constant 0 : i32
    %c0_i32_1 = arith.constant 0 : i32
    return %c0_i32, %c0_i32_0 : i32, i32
  }
  func.func @transform_5(%arg0: i32) -> (i32, i32) {
    %c0_i32 = arith.constant 0 : i32
    %c0_i32_0 = arith.constant 0 : i32
    %c0_i32_1 = arith.constant 0 : i32
    return %c0_i32, %c0_i32_0 : i32, i32
  }
  func.func @transform_6(%arg0: i32) -> (i32, i32) {
    %c0_i32 = arith.constant 0 : i32
    %c0_i32_0 = arith.constant 0 : i32
    %c0_i32_1 = arith.constant 0 : i32
    return %c0_i32, %c0_i32_0 : i32, i32
  }
  func.func @transform_7(%arg0: i32) -> (i32, i32) {
    %c0_i32 = arith.constant 0 : i32
    %c0_i32_0 = arith.constant 0 : i32
    return %arg0, %c0_i32 : i32, i32
  }
  func.func @transform_8(%arg0: i32) -> (i32, i32) {
    %c0_i32 = arith.constant 0 : i32
    %c0_i32_0 = arith.constant 0 : i32
    return %c0_i32, %arg0 : i32, i32
  }
}

</mosaic_0001>

<llo_original>
// kernel: swin_trans_fer_forward.1
$region0: #{swin_trans_fer_forward.1}
  #allocation0 [shape = 'u32[]', space=smem, size = 0x4, offset = 0x4, fixed_abs, tag = 'smem constant byte address 0x4 - core index']
  #allocation1 [shape = 'u32[144,128]{1,0:T(1,128)}', space=vmem, size = 0x12000, scoped, tag = 'internal scratch']
  %s0 = inlined_call_operand.vmem [shape: bf16[1792,64], index: 0, kind: input, shape index: {}]
  %s1 = inlined_call_operand.vmem [shape: bf16[64,128], index: 1, kind: input, shape index: {}]
  %s2 = inlined_call_operand.vmem [shape: f32[1,128], index: 2, kind: input, shape index: {}]
  %s3 = inlined_call_operand.vmem [shape: f32[1,128], index: 3, kind: input, shape index: {}]
  %s4 = inlined_call_operand.vmem [shape: f32[1,128], index: 4, kind: input, shape index: {}]
  %s5 = inlined_call_operand.vmem [shape: bf16[8,128], index: 5, kind: input, shape index: {}]
  %s6 = inlined_call_operand.vmem [shape: f32[1,8], index: 6, kind: input, shape index: {}]
  %s7 = inlined_call_operand.vmem [shape: f32[32,8], index: 7, kind: output, shape index: {0}]
  %s8 = inlined_call_operand.vmem [shape: f32[8,1792], index: 8, kind: output, shape index: {1}]
  %9 = xla_tuple %s7, %s8
  %s10 = sld [smem:[#allocation0]]
  $region69: #{swin_trans_fer_forward.1} parent=0
    _
  %s12 = ssub.s32 1, %s10
  %s13 = scalar_select 0, %s12, %s10
  loop: start=0, step=1, limit=4
  $region2: #{swin_trans_fer_forward.1} parent=0 // loop_pre_header
    _
  $region3: #{swin_trans_fer_forward.1} parent=0 // loop_header
    %s15 = sphi 0, %s19
    %p16 = scmp.ge.s32.totalorder %s15, 4
    %s25 = sphi 0, %s27
    %s28 = sphi 0, %s25
    %s29 = sphi 0, %s28
    %s45 = sphi 0, %s29
    %s49 = sphi 0, %s49
    %s51 = sphi 0, %s49
    %s52 = sphi 0, %s51
    %s66 = sphi 0, %s52
    %s70 = sphi 0, %s70
    %s72 = sphi 0, %s70
    %s73 = sphi 0, %s72
    %s87 = sphi 0, %s73
    %s91 = sphi 0, %s91
    %s93 = sphi 0, %s91
    %s94 = sphi 0, %s93
    %s108 = sphi 0, %s94
    %s112 = sphi 0, %s112
    %s114 = sphi 0, %s112
    %s115 = sphi 0, %s114
    %s129 = sphi 0, %s115
    %s133 = sphi 0, %s133
    %s135 = sphi 0, %s133
    %s136 = sphi 0, %s135
    %s150 = sphi 0, %s136
    %s154 = sphi 0, %s154
    %s156 = sphi 0, %s154
    %s157 = sphi 0, %s156
    %s171 = sphi 0, %s157
    %s177 = sphi 0, %s179
    %s180 = sphi 0, %s177
    %s181 = sphi 0, %s180
    %s197 = sphi 0, %s181
    %s203 = sphi 0, %s205
    %s206 = sphi 0, %s203
    %s207 = sphi 0, %s206
    %s223 = sphi 0, %s207
  $region4: #{swin_trans_fer_forward.1} parent=0 // loop_header_branch
    %18 = sbr.rel (%p16) target = $region8
  $region5: #{swin_trans_fer_forward.1} parent=0 // loop_body
    %s20 = ssub.s32 %s15, 1
    %s21 = ssub.s32 %s15, 2
    %s22 = sadd.s32 %s15, 1
    %s23 = ssub.s32 %s15, %s22
    %p24 = scmp.eq.s32.totalorder %s23, 0
    %s26 = sadd.s32 %s25, 1
    %s27 = scalar_select %p24, %s25, %s26
    %p30 = pneg %p24
    %p31 = scmp.eq.s32.totalorder %s15, 1
    %p32 = por %p30, %p31
    %p33 = scmp.ne.s32.totalorder %s25, %s28
    %p34 = scmp.eq.s32.totalorder %s15, 0
    %p35 = por %p33, %p34
    %p36 = scmp.ne.s32.totalorder %s25, %s28
    %p37 = scmp.eq.s32.totalorder %s20, 1
    %p38 = por %p36, %p37
    %p39 = scmp.ne.s32.totalorder %s28, %s29
    %p40 = scmp.eq.s32.totalorder %s20, 0
    %p41 = por %p39, %p40
    %p42 = scmp.ne.s32.totalorder %s28, %s29
    %p43 = scmp.eq.s32.totalorder %s21, 1
    %p44 = por %p42, %p43
    %p46 = scmp.ne.s32.totalorder %s29, %s45
    %p47 = scmp.eq.s32.totalorder %s21, 0
    %p48 = por %p46, %p47
    %s50 = sadd.s32 %s49, 1
    %p53 = scmp.eq.s32.totalorder %s15, 1
    %p54 = scmp.ne.s32.totalorder %s49, %s51
    %p55 = scmp.eq.s32.totalorder %s15, 0
    %p56 = por %p54, %p55
    %p57 = scmp.ne.s32.totalorder %s49, %s51
    %p58 = scmp.eq.s32.totalorder %s20, 1
    %p59 = por %p57, %p58
    %p60 = scmp.ne.s32.totalorder %s51, %s52
    %p61 = scmp.eq.s32.totalorder %s20, 0
    %p62 = por %p60, %p61
    %p63 = scmp.ne.s32.totalorder %s51, %s52
    %p64 = scmp.eq.s32.totalorder %s21, 1
    %p65 = por %p63, %p64
    %p67 = scmp.ne.s32.totalorder %s52, %s66
    %p68 = scmp.eq.s32.totalorder %s21, 0
    %p69 = por %p67, %p68
    %s71 = sadd.s32 %s70, 1
    %p74 = scmp.eq.s32.totalorder %s15, 1
    %p75 = scmp.ne.s32.totalorder %s70, %s72
    %p76 = scmp.eq.s32.totalorder %s15, 0
    %p77 = por %p75, %p76
    %p78 = scmp.ne.s32.totalorder %s70, %s72
    %p79 = scmp.eq.s32.totalorder %s20, 1
    %p80 = por %p78, %p79
    %p81 = scmp.ne.s32.totalorder %s72, %s73
    %p82 = scmp.eq.s32.totalorder %s20, 0
    %p83 = por %p81, %p82
    %p84 = scmp.ne.s32.totalorder %s72, %s73
    %p85 = scmp.eq.s32.totalorder %s21, 1
    %p86 = por %p84, %p85
    %p88 = scmp.ne.s32.totalorder %s73, %s87
    %p89 = scmp.eq.s32.totalorder %s21, 0
    %p90 = por %p88, %p89
    %s92 = sadd.s32 %s91, 1
    %p95 = scmp.eq.s32.totalorder %s15, 1
    %p96 = scmp.ne.s32.totalorder %s91, %s93
    %p97 = scmp.eq.s32.totalorder %s15, 0
    %p98 = por %p96, %p97
    %p99 = scmp.ne.s32.totalorder %s91, %s93
    %p100 = scmp.eq.s32.totalorder %s20, 1
    %p101 = por %p99, %p100
    %p102 = scmp.ne.s32.totalorder %s93, %s94
    %p103 = scmp.eq.s32.totalorder %s20, 0
    %p104 = por %p102, %p103
    %p105 = scmp.ne.s32.totalorder %s93, %s94
    %p106 = scmp.eq.s32.totalorder %s21, 1
    %p107 = por %p105, %p106
    %p109 = scmp.ne.s32.totalorder %s94, %s108
    %p110 = scmp.eq.s32.totalorder %s21, 0
    %p111 = por %p109, %p110
    %s113 = sadd.s32 %s112, 1
    %p116 = scmp.eq.s32.totalorder %s15, 1
    %p117 = scmp.ne.s32.totalorder %s112, %s114
    %p118 = scmp.eq.s32.totalorder %s15, 0
    %p119 = por %p117, %p118
    %p120 = scmp.ne.s32.totalorder %s112, %s114
    %p121 = scmp.eq.s32.totalorder %s20, 1
    %p122 = por %p120, %p121
    %p123 = scmp.ne.s32.totalorder %s114, %s115
    %p124 = scmp.eq.s32.totalorder %s20, 0
    %p125 = por %p123, %p124
    %p126 = scmp.ne.s32.totalorder %s114, %s115
    %p127 = scmp.eq.s32.totalorder %s21, 1
    %p128 = por %p126, %p127
    %p130 = scmp.ne.s32.totalorder %s115, %s129
    %p131 = scmp.eq.s32.totalorder %s21, 0
    %p132 = por %p130, %p131
    %s134 = sadd.s32 %s133, 1
    %p137 = scmp.eq.s32.totalorder %s15, 1
    %p138 = scmp.ne.s32.totalorder %s133, %s135
    %p139 = scmp.eq.s32.totalorder %s15, 0
    %p140 = por %p138, %p139
    %p141 = scmp.ne.s32.totalorder %s133, %s135
    %p142 = scmp.eq.s32.totalorder %s20, 1
    %p143 = por %p141, %p142
    %p144 = scmp.ne.s32.totalorder %s135, %s136
    %p145 = scmp.eq.s32.totalorder %s20, 0
    %p146 = por %p144, %p145
    %p147 = scmp.ne.s32.totalorder %s135, %s136
    %p148 = scmp.eq.s32.totalorder %s21, 1
    %p149 = por %p147, %p148
    %p151 = scmp.ne.s32.totalorder %s136, %s150
    %p152 = scmp.eq.s32.totalorder %s21, 0
    %p153 = por %p151, %p152
    %s155 = sadd.s32 %s154, 1
    %p158 = scmp.eq.s32.totalorder %s15, 1
    %p159 = scmp.ne.s32.totalorder %s154, %s156
    %p160 = scmp.eq.s32.totalorder %s15, 0
    %p161 = por %p159, %p160
    %p162 = scmp.ne.s32.totalorder %s154, %s156
    %p163 = scmp.eq.s32.totalorder %s20, 1
    %p164 = por %p162, %p163
    %p165 = scmp.ne.s32.totalorder %s156, %s157
    %p166 = scmp.eq.s32.totalorder %s20, 0
    %p167 = por %p165, %p166
    %p168 = scmp.ne.s32.totalorder %s156, %s157
    %p169 = scmp.eq.s32.totalorder %s21, 1
    %p170 = por %p168, %p169
    %p172 = scmp.ne.s32.totalorder %s157, %s171
    %p173 = scmp.eq.s32.totalorder %s21, 0
    %p174 = por %p172, %p173
    %s175 = ssub.s32 %s15, %s22
    %p176 = scmp.eq.s32.totalorder %s175, 0
    %s178 = sadd.s32 %s177, 1
    %s179 = scalar_select %p176, %s177, %s178
    %p182 = pneg %p176
    %p183 = scmp.eq.s32.totalorder %s15, 1
    %p184 = por %p182, %p183
    %p185 = scmp.ne.s32.totalorder %s177, %s180
    %p186 = scmp.eq.s32.totalorder %s15, 0
    %p187 = por %p185, %p186
    %p188 = scmp.ne.s32.totalorder %s177, %s180
    %p189 = scmp.eq.s32.totalorder %s20, 1
    %p190 = por %p188, %p189
    %p191 = scmp.ne.s32.totalorder %s180, %s181
    %p192 = scmp.eq.s32.totalorder %s20, 0
    %p193 = por %p191, %p192
    %p194 = scmp.ne.s32.totalorder %s180, %s181
    %p195 = scmp.eq.s32.totalorder %s21, 1
    %p196 = por %p194, %p195
    %p198 = scmp.ne.s32.totalorder %s181, %s197
    %p199 = scmp.eq.s32.totalorder %s21, 0
    %p200 = por %p198, %p199
    %s201 = ssub.s32 %s15, %s22
    %p202 = scmp.eq.s32.totalorder %s201, 0
    %s204 = sadd.s32 %s203, 1
    %s205 = scalar_select %p202, %s203, %s204
    %p208 = pneg %p202
    %p209 = scmp.eq.s32.totalorder %s15, 1
    %p210 = por %p208, %p209
    %p211 = scmp.ne.s32.totalorder %s203, %s206
    %p212 = scmp.eq.s32.totalorder %s15, 0
    %p213 = por %p211, %p212
    %p214 = scmp.ne.s32.totalorder %s203, %s206
    %p215 = scmp.eq.s32.totalorder %s20, 1
    %p216 = por %p214, %p215
    %p217 = scmp.ne.s32.totalorder %s206, %s207
    %p218 = scmp.eq.s32.totalorder %s20, 0
    %p219 = por %p217, %p218
    %p220 = scmp.ne.s32.totalorder %s206, %s207
    %p221 = scmp.eq.s32.totalorder %s21, 1
    %p222 = por %p220, %p221
    %p224 = scmp.ne.s32.totalorder %s207, %s223
    %p225 = scmp.eq.s32.totalorder %s21, 0
    %p226 = por %p224, %p225
    %p227 = scmp.le.s32.totalorder 1, %s15
    %p228 = scmp.lt.s32.totalorder %s15, 3
    %p229 = pnand %p227, %p228
    %p230 = pneg %p229
    // Predicated region
    $region9: #{swin_trans_fer_forward.1} parent=5 // pred_check
      _
    $region10: #{swin_trans_fer_forward.1} parent=5 // pred_check_branch
      %232 = sbr.rel (%p229) target = $region12
    $region11: #{swin_trans_fer_forward.1} parent=5 // pred_region
      %s233 = ssub.s32 %s15, 1
      // Predicated region
      $region13: #{swin_trans_fer_forward.1} parent=11 // pred_check
        %p234 = pneg %p62
      $region14: #{swin_trans_fer_forward.1} parent=11 // pred_check_branch
        %236 = sbr.rel (%p234) target = $region16
      $region15: #{swin_trans_fer_forward.1} parent=11 // pred_region
        _
      $region16: #{swin_trans_fer_forward.1} parent=11 // pred_fallthru
        _
      // Predicated region
      $region17: #{swin_trans_fer_forward.1} parent=11 // pred_check
        %p237 = pneg %p83
      $region18: #{swin_trans_fer_forward.1} parent=11 // pred_check_branch
        %239 = sbr.rel (%p237) target = $region20
      $region19: #{swin_trans_fer_forward.1} parent=11 // pred_region
        _
      $region20: #{swin_trans_fer_forward.1} parent=11 // pred_fallthru
        _
      // Predicated region
      $region21: #{swin_trans_fer_forward.1} parent=11 // pred_check
        %p240 = pneg %p104
      $region22: #{swin_trans_fer_forward.1} parent=11 // pred_check_branch
        %242 = sbr.rel (%p240) target = $region24
      $region23: #{swin_trans_fer_forward.1} parent=11 // pred_region
        _
      $region24: #{swin_trans_fer_forward.1} parent=11 // pred_fallthru
        _
      // Predicated region
      $region25: #{swin_trans_fer_forward.1} parent=11 // pred_check
        %p243 = pneg %p125
      $region26: #{swin_trans_fer_forward.1} parent=11 // pred_check_branch
        %245 = sbr.rel (%p243) target = $region28
      $region27: #{swin_trans_fer_forward.1} parent=11 // pred_region
        _
      $region28: #{swin_trans_fer_forward.1} parent=11 // pred_fallthru
        _
      // Predicated region
      $region29: #{swin_trans_fer_forward.1} parent=11 // pred_check
        %p246 = pneg %p146
      $region30: #{swin_trans_fer_forward.1} parent=11 // pred_check_branch
        %248 = sbr.rel (%p246) target = $region32
      $region31: #{swin_trans_fer_forward.1} parent=11 // pred_region
        _
      $region32: #{swin_trans_fer_forward.1} parent=11 // pred_fallthru
        _
      // Predicated region
      $region33: #{swin_trans_fer_forward.1} parent=11 // pred_check
        %p249 = pneg %p167
      $region34: #{swin_trans_fer_forward.1} parent=11 // pred_check_branch
        %251 = sbr.rel (%p249) target = $region36
      $region35: #{swin_trans_fer_forward.1} parent=11 // pred_region
        _
      $region36: #{swin_trans_fer_forward.1} parent=11 // pred_fallthru
        _
    $region12: #{swin_trans_fer_forward.1} parent=5 // pred_fallthru
      _
    %p252 = scmp.lt.s32.totalorder %s15, 2
    // Predicated region
    $region37: #{swin_trans_fer_forward.1} parent=5 // pred_check
      %p253 = pneg %p252
    $region38: #{swin_trans_fer_forward.1} parent=5 // pred_check_branch
      %255 = sbr.rel (%p253) target = $region40
    $region39: #{swin_trans_fer_forward.1} parent=5 // pred_region
      // Predicated region
      $region41: #{swin_trans_fer_forward.1} parent=39 // pred_check
        %p256 = pneg %p35
      $region42: #{swin_trans_fer_forward.1} parent=39 // pred_check_branch
        %258 = sbr.rel (%p256) target = $region44
      $region43: #{swin_trans_fer_forward.1} parent=39 // pred_region
        %s259 = smul.u32 112, %s15
        %p260 = scmp.lt.s32.totalorder %s259, 223
        %s261 = scalar_select %p260, %s259, 223
        %s262 = smul.addr %s261, 4
        %s263 = scalar_lea.vmem %s0, %s262
        %s264 = smul.u32 112, %s15
      $region44: #{swin_trans_fer_forward.1} parent=39 // pred_fallthru
        _
    $region40: #{swin_trans_fer_forward.1} parent=5 // pred_fallthru
      _
    %p265 = scmp.le.s32.totalorder 1, %s15
    %p266 = scmp.lt.s32.totalorder %s15, 3
    %p267 = pnand %p265, %p266
    %p268 = pneg %p267
    // Predicated region
    $region45: #{swin_trans_fer_forward.1} parent=5 // pred_check
      _
    $region46: #{swin_trans_fer_forward.1} parent=5 // pred_check_branch
      %270 = sbr.rel (%p267) target = $region48
    $region47: #{swin_trans_fer_forward.1} parent=5 // pred_region
      %s271 = ssub.s32 %s15, 1
      %s272 = smul.u32 112, %s20
      %p273 = scmp.lt.s32.totalorder %s272, 223
      %s274 = scalar_select %p273, %s272, 223
      %s275 = smul.addr %s274, 4
      %s276 = scalar_lea.vmem %s0, %s275
      %p277 = pneg %p41
      %p278 = pneg %p38
      %p279 = pneg %p62
      %p280 = pneg %p59
      %p281 = pneg %p83
      %p282 = pneg %p80
      %p283 = pneg %p104
      %p284 = pneg %p101
      %p285 = pneg %p125
      %p286 = pneg %p122
      %p287 = pneg %p146
      %p288 = pneg %p143
      %p289 = pneg %p167
      %p290 = pneg %p164
      %p291 = pneg %p193
      %p292 = pneg %p190
      %s293 = smul.u32 2, %s20
      %p294 = scmp.lt.s32.totalorder %s293, 3
      %s295 = scalar_select %p294, %s293, 3
      %s296 = smul.addr %s295, 8
      %s297 = scalar_lea.vmem %s7, %s296
      %p298 = pneg %p219
      %p299 = pneg %p216
      %s300 = smul.u32 7, %s20
      %p301 = scmp.lt.s32.totalorder %s300, 13
      %s302 = scalar_select %p301, %s300, 13
      %s303 = smul.addr %s302, 8
      %s304 = scalar_lea.vmem %s8, %s303
      %s305 = smul.u32 112, %s20
      %p306 = scmp.lt.s32.totalorder %s305, 223
      %s307 = scalar_select %p306, %s305, 223
      %s308 = smul.addr %s307, 4
      %s309 = scalar_lea.vmem %s0, %s308
      %s310 = smul.u32 112, %s20
      %s311 = smul.u32 2, %s20
      %p312 = scmp.lt.s32.totalorder %s311, 3
      %s313 = scalar_select %p312, %s311, 3
      %s314 = smul.addr %s313, 8
      %s315 = scalar_lea.vmem %s7, %s314
      %s316 = smul.u32 2, %s20
      %s317 = smul.u32 7, %s20
      %p318 = scmp.lt.s32.totalorder %s317, 13
      %s319 = scalar_select %p318, %s317, 13
      %s320 = smul.addr %s319, 8
      %s321 = scalar_lea.vmem %s8, %s320
      %s322 = smul.u32 7, %s20
      %v324 = vld [vmem:[%s309] sm:$0xf]
      %v325 = vld [vmem:[%s309 + $0x4] sm:$0xf]
      %v326 = vld [vmem:[%s309 + $0x8] sm:$0xf]
      %v327 = vld [vmem:[%s309 + $0xc] sm:$0xf]
      %v328 = vld [vmem:[%s309 + $0x10] sm:$0xf]
      %v329 = vld [vmem:[%s309 + $0x14] sm:$0xf]
      %v330 = vld [vmem:[%s309 + $0x18] sm:$0xf]
      %v331 = vld [vmem:[%s309 + $0x1c] sm:$0xf]
      %v332 = vld [vmem:[%s309 + $0x20] sm:$0xf]
      %v333 = vld [vmem:[%s309 + $0x24] sm:$0xf]
      %v334 = vld [vmem:[%s309 + $0x28] sm:$0xf]
      %v335 = vld [vmem:[%s309 + $0x2c] sm:$0xf]
      %v336 = vld [vmem:[%s309 + $0x30] sm:$0xf]
      %v337 = vld [vmem:[%s309 + $0x34] sm:$0xf]
      %v338 = vld [vmem:[%s309 + $0x38] sm:$0xf]
      %v339 = vld [vmem:[%s309 + $0x3c] sm:$0xf]
      %v340 = vld [vmem:[%s309 + $0x40] sm:$0xf]
      %v341 = vld [vmem:[%s309 + $0x44] sm:$0xf]
      %v342 = vld [vmem:[%s309 + $0x48] sm:$0xf]
      %v343 = vld [vmem:[%s309 + $0x4c] sm:$0xf]
      %v344 = vld [vmem:[%s309 + $0x50] sm:$0xf]
      %v345 = vld [vmem:[%s309 + $0x54] sm:$0xf]
      %v346 = vld [vmem:[%s309 + $0x58] sm:$0xf]
      %v347 = vld [vmem:[%s309 + $0x5c] sm:$0xf]
      %v348 = vld [vmem:[%s309 + $0x60] sm:$0xf]
      %v349 = vld [vmem:[%s309 + $0x64] sm:$0xf]
      %v350 = vld [vmem:[%s309 + $0x68] sm:$0xf]
      %v351 = vld [vmem:[%s309 + $0x6c] sm:$0xf]
      %v352 = vld [vmem:[%s309 + $0x70] sm:$0xf]
      %v353 = vld [vmem:[%s309 + $0x74] sm:$0xf]
      %v354 = vld [vmem:[%s309 + $0x78] sm:$0xf]
      %v355 = vld [vmem:[%s309 + $0x7c] sm:$0xf]
      %v356 = vld [vmem:[%s309 + $0x80] sm:$0xf]
      %v357 = vld [vmem:[%s309 + $0x84] sm:$0xf]
      %v358 = vld [vmem:[%s309 + $0x88] sm:$0xf]
      %v359 = vld [vmem:[%s309 + $0x8c] sm:$0xf]
      %v360 = vld [vmem:[%s309 + $0x90] sm:$0xf]
      %v361 = vld [vmem:[%s309 + $0x94] sm:$0xf]
      %v362 = vld [vmem:[%s309 + $0x98] sm:$0xf]
      %v363 = vld [vmem:[%s309 + $0x9c] sm:$0xf]
      %v364 = vld [vmem:[%s309 + $0xa0] sm:$0xf]
      %v365 = vld [vmem:[%s309 + $0xa4] sm:$0xf]
      %v366 = vld [vmem:[%s309 + $0xa8] sm:$0xf]
      %v367 = vld [vmem:[%s309 + $0xac] sm:$0xf]
      %v368 = vld [vmem:[%s309 + $0xb0] sm:$0xf]
      %v369 = vld [vmem:[%s309 + $0xb4] sm:$0xf]
      %v370 = vld [vmem:[%s309 + $0xb8] sm:$0xf]
      %v371 = vld [vmem:[%s309 + $0xbc] sm:$0xf]
      %v372 = vld [vmem:[%s309 + $0xc0] sm:$0xf]
      %v373 = vld [vmem:[%s309 + $0xc4] sm:$0xf]
      %v374 = vld [vmem:[%s309 + $0xc8] sm:$0xf]
      %v375 = vld [vmem:[%s309 + $0xcc] sm:$0xf]
      %v376 = vld [vmem:[%s309 + $0xd0] sm:$0xf]
      %v377 = vld [vmem:[%s309 + $0xd4] sm:$0xf]
      %v378 = vld [vmem:[%s309 + $0xd8] sm:$0xf]
      %v379 = vld [vmem:[%s309 + $0xdc] sm:$0xf]
      %v380 = vld [vmem:[%s309 + $0xe0] sm:$0xf]
      %v381 = vld [vmem:[%s309 + $0xe4] sm:$0xf]
      %v382 = vld [vmem:[%s309 + $0xe8] sm:$0xf]
      %v383 = vld [vmem:[%s309 + $0xec] sm:$0xf]
      %v384 = vld [vmem:[%s309 + $0xf0] sm:$0xf]
      %v385 = vld [vmem:[%s309 + $0xf4] sm:$0xf]
      %v386 = vld [vmem:[%s309 + $0xf8] sm:$0xf]
      %v387 = vld [vmem:[%s309 + $0xfc] sm:$0xf]
      %v388 = vld [vmem:[%s309 + $0x100] sm:$0xf]
      %v389 = vld [vmem:[%s309 + $0x104] sm:$0xf]
      %v390 = vld [vmem:[%s309 + $0x108] sm:$0xf]
      %v391 = vld [vmem:[%s309 + $0x10c] sm:$0xf]
      %v392 = vld [vmem:[%s309 + $0x110] sm:$0xf]
      %v393 = vld [vmem:[%s309 + $0x114] sm:$0xf]
      %v394 = vld [vmem:[%s309 + $0x118] sm:$0xf]
      %v395 = vld [vmem:[%s309 + $0x11c] sm:$0xf]
      %v396 = vld [vmem:[%s309 + $0x120] sm:$0xf]
      %v397 = vld [vmem:[%s309 + $0x124] sm:$0xf]
      %v398 = vld [vmem:[%s309 + $0x128] sm:$0xf]
      %v399 = vld [vmem:[%s309 + $0x12c] sm:$0xf]
      %v400 = vld [vmem:[%s309 + $0x130] sm:$0xf]
      %v401 = vld [vmem:[%s309 + $0x134] sm:$0xf]
      %v402 = vld [vmem:[%s309 + $0x138] sm:$0xf]
      %v403 = vld [vmem:[%s309 + $0x13c] sm:$0xf]
      %v404 = vld [vmem:[%s309 + $0x140] sm:$0xf]
      %v405 = vld [vmem:[%s309 + $0x144] sm:$0xf]
      %v406 = vld [vmem:[%s309 + $0x148] sm:$0xf]
      %v407 = vld [vmem:[%s309 + $0x14c] sm:$0xf]
      %v408 = vld [vmem:[%s309 + $0x150] sm:$0xf]
      %v409 = vld [vmem:[%s309 + $0x154] sm:$0xf]
      %v410 = vld [vmem:[%s309 + $0x158] sm:$0xf]
      %v411 = vld [vmem:[%s309 + $0x15c] sm:$0xf]
      %v412 = vld [vmem:[%s309 + $0x160] sm:$0xf]
      %v413 = vld [vmem:[%s309 + $0x164] sm:$0xf]
      %v414 = vld [vmem:[%s309 + $0x168] sm:$0xf]
      %v415 = vld [vmem:[%s309 + $0x16c] sm:$0xf]
      %v416 = vld [vmem:[%s309 + $0x170] sm:$0xf]
      %v417 = vld [vmem:[%s309 + $0x174] sm:$0xf]
      %v418 = vld [vmem:[%s309 + $0x178] sm:$0xf]
      %v419 = vld [vmem:[%s309 + $0x17c] sm:$0xf]
      %v420 = vld [vmem:[%s309 + $0x180] sm:$0xf]
      %v421 = vld [vmem:[%s309 + $0x184] sm:$0xf]
      %v422 = vld [vmem:[%s309 + $0x188] sm:$0xf]
      %v423 = vld [vmem:[%s309 + $0x18c] sm:$0xf]
      %v424 = vld [vmem:[%s309 + $0x190] sm:$0xf]
      %v425 = vld [vmem:[%s309 + $0x194] sm:$0xf]
      %v426 = vld [vmem:[%s309 + $0x198] sm:$0xf]
      %v427 = vld [vmem:[%s309 + $0x19c] sm:$0xf]
      %v428 = vld [vmem:[%s309 + $0x1a0] sm:$0xf]
      %v429 = vld [vmem:[%s309 + $0x1a4] sm:$0xf]
      %v430 = vld [vmem:[%s309 + $0x1a8] sm:$0xf]
      %v431 = vld [vmem:[%s309 + $0x1ac] sm:$0xf]
      %v432 = vld [vmem:[%s309 + $0x1b0] sm:$0xf]
      %v433 = vld [vmem:[%s309 + $0x1b4] sm:$0xf]
      %v434 = vld [vmem:[%s309 + $0x1b8] sm:$0xf]
      %v435 = vld [vmem:[%s309 + $0x1bc] sm:$0xf]
      %v436 = vld [vmem:[%s1] sm:$0xf]
      %v437 = vld [vmem:[%s1 + $0x4] sm:$0xf]
      %v438 = vld [vmem:[%s1 + $0x8] sm:$0xf]
      %v439 = vld [vmem:[%s1 + $0xc] sm:$0xf]
      %v440 = vld [vmem:[%s1 + $0x10] sm:$0xf]
      %v441 = vld [vmem:[%s1 + $0x14] sm:$0xf]
      %v442 = vld [vmem:[%s1 + $0x18] sm:$0xf]
      %v443 = vld [vmem:[%s1 + $0x1c] sm:$0xf]
      %v444 = vld [vmem:[%s2] sm:$0x1]
      %v446 = vlaneseq
      %v447 = vshrl.u32 %v446, 7
      %v448 = vsub.s32 0, %v447
      %v449 = vrot.slane %v444, %v448
      %v563 = vunpack.c.l.b16 %v324
      %v564 = vunpack.c.l.b16 %v325
      %v565 = vunpack.c.l.b16 %v326
      %v566 = vunpack.c.l.b16 %v327
      %v567 = vunpack.c.l.b16 %v328
      %v568 = vunpack.c.l.b16 %v329
      %v569 = vunpack.c.l.b16 %v330
      %v570 = vunpack.c.l.b16 %v331
      %v571 = vunpack.c.l.b16 %v332
      %v572 = vunpack.c.l.b16 %v333
      %v573 = vunpack.c.l.b16 %v334
      %v574 = vunpack.c.l.b16 %v335
      %v575 = vunpack.c.l.b16 %v336
      %v576 = vunpack.c.l.b16 %v337
      %v577 = vunpack.c.l.b16 %v338
      %v578 = vunpack.c.l.b16 %v339
      %v579 = vunpack.c.l.b16 %v340
      %v580 = vunpack.c.l.b16 %v341
      %v581 = vunpack.c.l.b16 %v342
      %v582 = vunpack.c.l.b16 %v343
      %v583 = vunpack.c.l.b16 %v344
      %v584 = vunpack.c.l.b16 %v345
      %v585 = vunpack.c.l.b16 %v346
      %v586 = vunpack.c.l.b16 %v347
      %v587 = vunpack.c.l.b16 %v348
      %v588 = vunpack.c.l.b16 %v349
      %v589 = vunpack.c.l.b16 %v350
      %v590 = vunpack.c.l.b16 %v351
      %v591 = vunpack.c.l.b16 %v352
      %v592 = vunpack.c.l.b16 %v353
      %v593 = vunpack.c.l.b16 %v354
      %v594 = vunpack.c.l.b16 %v355
      %v595 = vunpack.c.l.b16 %v356
      %v596 = vunpack.c.l.b16 %v357
      %v597 = vunpack.c.l.b16 %v358
      %v598 = vunpack.c.l.b16 %v359
      %v599 = vunpack.c.l.b16 %v360
      %v600 = vunpack.c.l.b16 %v361
      %v601 = vunpack.c.l.b16 %v362
      %v602 = vunpack.c.l.b16 %v363
      %v603 = vunpack.c.l.b16 %v364
      %v604 = vunpack.c.l.b16 %v365
      %v605 = vunpack.c.l.b16 %v366
      %v606 = vunpack.c.l.b16 %v367
      %v607 = vunpack.c.l.b16 %v368
      %v608 = vunpack.c.l.b16 %v369
      %v609 = vunpack.c.l.b16 %v370
      %v610 = vunpack.c.l.b16 %v371
      %v611 = vunpack.c.l.b16 %v372
      %v612 = vunpack.c.l.b16 %v373
      %v613 = vunpack.c.l.b16 %v374
      %v614 = vunpack.c.l.b16 %v375
      %v615 = vunpack.c.l.b16 %v376
      %v616 = vunpack.c.l.b16 %v377
      %v617 = vunpack.c.l.b16 %v378
      %v618 = vunpack.c.l.b16 %v379
      %v619 = vunpack.c.l.b16 %v380
      %v620 = vunpack.c.l.b16 %v381
      %v621 = vunpack.c.l.b16 %v382
      %v622 = vunpack.c.l.b16 %v383
      %v623 = vunpack.c.l.b16 %v384
      %v624 = vunpack.c.l.b16 %v385
      %v625 = vunpack.c.l.b16 %v386
      %v626 = vunpack.c.l.b16 %v387
      %v627 = vunpack.c.l.b16 %v388
      %v628 = vunpack.c.l.b16 %v389
      %v629 = vunpack.c.l.b16 %v390
      %v630 = vunpack.c.l.b16 %v391
      %v631 = vunpack.c.l.b16 %v392
      %v632 = vunpack.c.l.b16 %v393
      %v633 = vunpack.c.l.b16 %v394
      %v634 = vunpack.c.l.b16 %v395
      %v635 = vunpack.c.l.b16 %v396
      %v636 = vunpack.c.l.b16 %v397
      %v637 = vunpack.c.l.b16 %v398
      %v638 = vunpack.c.l.b16 %v399
      %v639 = vunpack.c.l.b16 %v400
      %v640 = vunpack.c.l.b16 %v401
      %v641 = vunpack.c.l.b16 %v402
      %v642 = vunpack.c.l.b16 %v403
      %v643 = vunpack.c.l.b16 %v404
      %v644 = vunpack.c.l.b16 %v405
      %v645 = vunpack.c.l.b16 %v406
      %v646 = vunpack.c.l.b16 %v407
      %v647 = vunpack.c.l.b16 %v408
      %v648 = vunpack.c.l.b16 %v409
      %v649 = vunpack.c.l.b16 %v410
      %v650 = vunpack.c.l.b16 %v411
      %v651 = vunpack.c.l.b16 %v412
      %v652 = vunpack.c.l.b16 %v413
      %v653 = vunpack.c.l.b16 %v414
      %v654 = vunpack.c.l.b16 %v415
      %v655 = vunpack.c.l.b16 %v416
      %v656 = vunpack.c.l.b16 %v417
      %v657 = vunpack.c.l.b16 %v418
      %v658 = vunpack.c.l.b16 %v419
      %v659 = vunpack.c.l.b16 %v420
      %v660 = vunpack.c.l.b16 %v421
      %v661 = vunpack.c.l.b16 %v422
      %v662 = vunpack.c.l.b16 %v423
      %v663 = vunpack.c.l.b16 %v424
      %v664 = vunpack.c.l.b16 %v425
      %v665 = vunpack.c.l.b16 %v426
      %v666 = vunpack.c.l.b16 %v427
      %v667 = vunpack.c.l.b16 %v428
      %v668 = vunpack.c.l.b16 %v429
      %v669 = vunpack.c.l.b16 %v430
      %v670 = vunpack.c.l.b16 %v431
      %v671 = vunpack.c.l.b16 %v432
      %v672 = vunpack.c.l.b16 %v433
      %v673 = vunpack.c.l.b16 %v434
      %v674 = vunpack.c.l.b16 %v435
      %v675 = vpack.c.b16 %v564, %v563
      %v676 = vpack.c.b16 %v566, %v565
      %v677 = vpack.c.b16 %v568, %v567
      %v678 = vpack.c.b16 %v570, %v569
      %v679 = vpack.c.b16 %v572, %v571
      %v680 = vpack.c.b16 %v574, %v573
      %v681 = vpack.c.b16 %v576, %v575
      %v682 = vpack.c.b16 %v578, %v577
      %v683 = vpack.c.b16 %v580, %v579
      %v684 = vpack.c.b16 %v582, %v581
      %v685 = vpack.c.b16 %v584, %v583
      %v686 = vpack.c.b16 %v586, %v585
      %v687 = vpack.c.b16 %v588, %v587
      %v688 = vpack.c.b16 %v590, %v589
      %v689 = vpack.c.b16 %v592, %v591
      %v690 = vpack.c.b16 %v594, %v593
      %v691 = vpack.c.b16 %v596, %v595
      %v692 = vpack.c.b16 %v598, %v597
      %v693 = vpack.c.b16 %v600, %v599
      %v694 = vpack.c.b16 %v602, %v601
      %v695 = vpack.c.b16 %v604, %v603
      %v696 = vpack.c.b16 %v606, %v605
      %v697 = vpack.c.b16 %v608, %v607
      %v698 = vpack.c.b16 %v610, %v609
      %v699 = vpack.c.b16 %v612, %v611
      %v700 = vpack.c.b16 %v614, %v613
      %v701 = vpack.c.b16 %v616, %v615
      %v702 = vpack.c.b16 %v618, %v617
      %v703 = vpack.c.b16 %v620, %v619
      %v704 = vpack.c.b16 %v622, %v621
      %v705 = vpack.c.b16 %v624, %v623
      %v706 = vpack.c.b16 %v626, %v625
      %v707 = vpack.c.b16 %v628, %v627
      %v708 = vpack.c.b16 %v630, %v629
      %v709 = vpack.c.b16 %v632, %v631
      %v710 = vpack.c.b16 %v634, %v633
      %v711 = vpack.c.b16 %v636, %v635
      %v712 = vpack.c.b16 %v638, %v637
      %v713 = vpack.c.b16 %v640, %v639
      %v714 = vpack.c.b16 %v642, %v641
      %v715 = vpack.c.b16 %v644, %v643
      %v716 = vpack.c.b16 %v646, %v645
      %v717 = vpack.c.b16 %v648, %v647
      %v718 = vpack.c.b16 %v650, %v649
      %v719 = vpack.c.b16 %v652, %v651
      %v720 = vpack.c.b16 %v654, %v653
      %v721 = vpack.c.b16 %v656, %v655
      %v722 = vpack.c.b16 %v658, %v657
      %v723 = vpack.c.b16 %v660, %v659
      %v724 = vpack.c.b16 %v662, %v661
      %v725 = vpack.c.b16 %v664, %v663
      %v726 = vpack.c.b16 %v666, %v665
      %v727 = vpack.c.b16 %v668, %v667
      %v728 = vpack.c.b16 %v670, %v669
      %v729 = vpack.c.b16 %v672, %v671
      %v730 = vpack.c.b16 %v674, %v673
      %v739 = vunpack.c.l.b16 %v436
      %v740 = vunpack.c.l.b16 %v437
      %v741 = vunpack.c.l.b16 %v438
      %v742 = vunpack.c.l.b16 %v439
      %v743 = vunpack.c.l.b16 %v440
      %v744 = vunpack.c.l.b16 %v441
      %v745 = vunpack.c.l.b16 %v442
      %v746 = vunpack.c.l.b16 %v443
      %v747 = vpack.c.b16 %v740, %v739
      %v748 = vpack.c.b16 %v742, %v741
      %v749 = vpack.c.b16 %v744, %v743
      %v750 = vpack.c.b16 %v746, %v745
      %vm755 = vcmask 523264
      %v757 = vsel %vm755, %v675, 0
      %v760 = vsel %vm755, %v676, 0
      %v763 = vsel %vm755, %v677, 0
      %v766 = vsel %vm755, %v678, 0
      %v769 = vsel %vm755, %v679, 0
      %v772 = vsel %vm755, %v680, 0
      %v775 = vsel %vm755, %v681, 0
      %v778 = vsel %vm755, %v682, 0
      %v781 = vsel %vm755, %v683, 0
      %v784 = vsel %vm755, %v684, 0
      %v787 = vsel %vm755, %v685, 0
      %v790 = vsel %vm755, %v686, 0
      %v793 = vsel %vm755, %v687, 0
      %v796 = vsel %vm755, %v688, 0
      %v799 = vsel %vm755, %v689, 0
      %v802 = vsel %vm755, %v690, 0
      %v805 = vsel %vm755, %v691, 0
      %v808 = vsel %vm755, %v692, 0
      %v811 = vsel %vm755, %v693, 0
      %v814 = vsel %vm755, %v694, 0
      %v817 = vsel %vm755, %v695, 0
      %v820 = vsel %vm755, %v696, 0
      %v823 = vsel %vm755, %v697, 0
      %v826 = vsel %vm755, %v698, 0
      %v829 = vsel %vm755, %v699, 0
      %v832 = vsel %vm755, %v700, 0
      %v835 = vsel %vm755, %v701, 0
      %v838 = vsel %vm755, %v702, 0
      %v841 = vsel %vm755, %v703, 0
      %v844 = vsel %vm755, %v704, 0
      %v847 = vsel %vm755, %v705, 0
      %v850 = vsel %vm755, %v706, 0
      %v853 = vsel %vm755, %v707, 0
      %v856 = vsel %vm755, %v708, 0
      %v859 = vsel %vm755, %v709, 0
      %v862 = vsel %vm755, %v710, 0
      %v865 = vsel %vm755, %v711, 0
      %v868 = vsel %vm755, %v712, 0
      %v871 = vsel %vm755, %v713, 0
      %v874 = vsel %vm755, %v714, 0
      %v877 = vsel %vm755, %v715, 0
      %v880 = vsel %vm755, %v716, 0
      %v883 = vsel %vm755, %v717, 0
      %v886 = vsel %vm755, %v718, 0
      %v889 = vsel %vm755, %v719, 0
      %v892 = vsel %vm755, %v720, 0
      %v895 = vsel %vm755, %v721, 0
      %v898 = vsel %vm755, %v722, 0
      %v901 = vsel %vm755, %v723, 0
      %v904 = vsel %vm755, %v724, 0
      %v907 = vsel %vm755, %v725, 0
      %v910 = vsel %vm755, %v726, 0
      %v913 = vsel %vm755, %v727, 0
      %v916 = vsel %vm755, %v728, 0
      %v919 = vsel %vm755, %v729, 0
      %v922 = vsel %vm755, %v730, 0
      %924 = vmatprep.subr.bf16.mxu0 0
      %925 = vmatpush1.bf16.msra.mxu0 0
      %926 = vmatprep.subr.bf16.mxu0 0
      %927 = vmatpush1.bf16.msra.mxu0 0
      %928 = vmatprep.subr.bf16.mxu0 0
      %929 = vmatpush1.bf16.msra.mxu0 0
      %930 = vmatprep.subr.bf16.mxu0 0
      %931 = vmatpush1.bf16.msra.mxu0 0
      %932 = vmatprep.subr.bf16.mxu0 0
      %933 = vmatpush1.bf16.msra.mxu0 %v750
      %934 = vmatprep.subr.bf16.mxu0 0
      %935 = vmatpush1.bf16.msra.mxu0 %v749
      %936 = vmatprep.subr.bf16.mxu0 0
      %937 = vmatpush1.bf16.msra.mxu0 %v748
      %938 = vmatprep.subr.bf16.mxu0 0
      %939 = vmatpush1.bf16.msra.mxu0 %v747
      %940 = vmatprep.subr.bf16.mxu0 0
      %941 = vmatpush2.bf16.msra.mxu0 0
      %942 = vmatprep.subr.bf16.mxu0 0
      %943 = vmatpush2.bf16.msra.mxu0 0
      %944 = vmatprep.subr.bf16.mxu0 0
      %945 = vmatpush2.bf16.msra.mxu0 0
      %946 = vmatprep.subr.bf16.mxu0 0
      %947 = vmatpush2.bf16.msra.mxu0 0
      %948 = vmatprep.subr.bf16.mxu0 0
      %949 = vmatpush2.bf16.msra.mxu0 0
      %950 = vmatprep.subr.bf16.mxu0 0
      %951 = vmatpush2.bf16.msra.mxu0 0
      %952 = vmatprep.subr.bf16.mxu0 0
      %953 = vmatpush2.bf16.msra.mxu0 0
      %954 = vmatprep.subr.bf16.mxu0 0
      %955 = vmatpush2.bf16.msra.mxu0 0
      %956 = vmatprep.mubr.bf16.mxu0 0
      %957 = vmatmul.mubr.bf16.gmra.mxu0 %v757
      %v958 = vpop.f32.mrf.mxu0
      %v959 = vadd.f32 %v449, %v958
      %v960 = vpop.f32.mrf.mxu0
      %v961 = vpop.f32.mrf.mxu0
      %v962 = vadd.f32 %v449, %v961
      %v963 = vpop.f32.mrf.mxu0
      %964 = vmatprep.mubr.bf16.mxu0 0
      %965 = vmatmul.mubr.bf16.gmra.mxu0 %v760
      %v966 = vpop.f32.mrf.mxu0
      %v967 = vadd.f32 %v449, %v966
      %v968 = vpop.f32.mrf.mxu0
      %v969 = vpop.f32.mrf.mxu0
      %v970 = vadd.f32 %v449, %v969
      %v971 = vpop.f32.mrf.mxu0
      %972 = vmatprep.mubr.bf16.mxu0 0
      %973 = vmatmul.mubr.bf16.gmra.mxu0 %v763
      %v974 = vpop.f32.mrf.mxu0
      %v975 = vadd.f32 %v449, %v974
      %v976 = vpop.f32.mrf.mxu0
      %v977 = vpop.f32.mrf.mxu0
      %v978 = vadd.f32 %v449, %v977
      %v979 = vpop.f32.mrf.mxu0
      %980 = vmatprep.mubr.bf16.mxu0 0
      %981 = vmatmul.mubr.bf16.gmra.mxu0 %v766
      %v982 = vpop.f32.mrf.mxu0
      %v983 = vadd.f32 %v449, %v982
      %v984 = vpop.f32.mrf.mxu0
      %v985 = vpop.f32.mrf.mxu0
      %v986 = vadd.f32 %v449, %v985
      %v987 = vpop.f32.mrf.mxu0
      %988 = vmatprep.mubr.bf16.mxu0 0
      %989 = vmatmul.mubr.bf16.gmra.mxu0 %v769
      %v990 = vpop.f32.mrf.mxu0
      %v991 = vadd.f32 %v449, %v990
      %v992 = vpop.f32.mrf.mxu0
      %v993 = vpop.f32.mrf.mxu0
      %v994 = vadd.f32 %v449, %v993
      %v995 = vpop.f32.mrf.mxu0
      %996 = vmatprep.mubr.bf16.mxu0 0
      %997 = vmatmul.mubr.bf16.gmra.mxu0 %v772
      %v998 = vpop.f32.mrf.mxu0
      %v999 = vadd.f32 %v449, %v998
      %v1000 = vpop.f32.mrf.mxu0
      %v1001 = vpop.f32.mrf.mxu0
      %v1002 = vadd.f32 %v449, %v1001
      %v1003 = vpop.f32.mrf.mxu0
      %1004 = vmatprep.mubr.bf16.mxu0 0
      %1005 = vmatmul.mubr.bf16.gmra.mxu0 %v775
      %v1006 = vpop.f32.mrf.mxu0
      %v1007 = vadd.f32 %v449, %v1006
      %v1008 = vpop.f32.mrf.mxu0
      %v1009 = vpop.f32.mrf.mxu0
      %v1010 = vadd.f32 %v449, %v1009
      %v1011 = vpop.f32.mrf.mxu0
      %1012 = vmatprep.mubr.bf16.mxu0 0
      %1013 = vmatmul.mubr.bf16.gmra.mxu0 %v778
      %v1014 = vpop.f32.mrf.mxu0
      %v1015 = vadd.f32 %v449, %v1014
      %v1016 = vpop.f32.mrf.mxu0
      %v1017 = vpop.f32.mrf.mxu0
      %v1018 = vadd.f32 %v449, %v1017
      %v1019 = vpop.f32.mrf.mxu0
      %1020 = vmatprep.mubr.bf16.mxu0 0
      %1021 = vmatmul.mubr.bf16.gmra.mxu0 %v781
      %v1022 = vpop.f32.mrf.mxu0
      %v1023 = vadd.f32 %v449, %v1022
      %v1024 = vpop.f32.mrf.mxu0
      %v1025 = vpop.f32.mrf.mxu0
      %v1026 = vadd.f32 %v449, %v1025
      %v1027 = vpop.f32.mrf.mxu0
      %1028 = vmatprep.mubr.bf16.mxu0 0
      %1029 = vmatmul.mubr.bf16.gmra.mxu0 %v784
      %v1030 = vpop.f32.mrf.mxu0
      %v1031 = vadd.f32 %v449, %v1030
      %v1032 = vpop.f32.mrf.mxu0
      %v1033 = vpop.f32.mrf.mxu0
      %v1034 = vadd.f32 %v449, %v1033
      %v1035 = vpop.f32.mrf.mxu0
      %1036 = vmatprep.mubr.bf16.mxu0 0
      %1037 = vmatmul.mubr.bf16.gmra.mxu0 %v787
      %v1038 = vpop.f32.mrf.mxu0
      %v1039 = vadd.f32 %v449, %v1038
      %v1040 = vpop.f32.mrf.mxu0
      %v1041 = vpop.f32.mrf.mxu0
      %v1042 = vadd.f32 %v449, %v1041
      %v1043 = vpop.f32.mrf.mxu0
      %1044 = vmatprep.mubr.bf16.mxu0 0
      %1045 = vmatmul.mubr.bf16.gmra.mxu0 %v790
      %v1046 = vpop.f32.mrf.mxu0
      %v1047 = vadd.f32 %v449, %v1046
      %v1048 = vpop.f32.mrf.mxu0
      %v1049 = vpop.f32.mrf.mxu0
      %v1050 = vadd.f32 %v449, %v1049
      %v1051 = vpop.f32.mrf.mxu0
      %1052 = vmatprep.mubr.bf16.mxu0 0
      %1053 = vmatmul.mubr.bf16.gmra.mxu0 %v793
      %v1054 = vpop.f32.mrf.mxu0
      %v1055 = vadd.f32 %v449, %v1054
      %v1056 = vpop.f32.mrf.mxu0
      %v1057 = vpop.f32.mrf.mxu0
      %v1058 = vadd.f32 %v449, %v1057
      %v1059 = vpop.f32.mrf.mxu0
      %1060 = vmatprep.mubr.bf16.mxu0 0
      %1061 = vmatmul.mubr.bf16.gmra.mxu0 %v796
      %v1062 = vpop.f32.mrf.mxu0
      %v1063 = vadd.f32 %v449, %v1062
      %v1064 = vpop.f32.mrf.mxu0
      %v1065 = vpop.f32.mrf.mxu0
      %v1066 = vadd.f32 %v449, %v1065
      %v1067 = vpop.f32.mrf.mxu0
      %1068 = vmatprep.mubr.bf16.mxu0 0
      %1069 = vmatmul.mubr.bf16.gmra.mxu0 %v799
      %v1070 = vpop.f32.mrf.mxu0
      %v1071 = vadd.f32 %v449, %v1070
      %v1072 = vpop.f32.mrf.mxu0
      %v1073 = vpop.f32.mrf.mxu0
      %v1074 = vadd.f32 %v449, %v1073
      %v1075 = vpop.f32.mrf.mxu0
      %1076 = vmatprep.mubr.bf16.mxu0 0
      %1077 = vmatmul.mubr.bf16.gmra.mxu0 %v802
      %v1078 = vpop.f32.mrf.mxu0
      %v1079 = vadd.f32 %v449, %v1078
      %v1080 = vpop.f32.mrf.mxu0
      %v1081 = vpop.f32.mrf.mxu0
      %v1082 = vadd.f32 %v449, %v1081
      %v1083 = vpop.f32.mrf.mxu0
      %1084 = vmatprep.mubr.bf16.mxu0 0
      %1085 = vmatmul.mubr.bf16.gmra.mxu0 %v805
      %v1086 = vpop.f32.mrf.mxu0
      %v1087 = vadd.f32 %v449, %v1086
      %v1088 = vpop.f32.mrf.mxu0
      %v1089 = vpop.f32.mrf.mxu0
      %v1090 = vadd.f32 %v449, %v1089
      %v1091 = vpop.f32.mrf.mxu0
      %1092 = vmatprep.mubr.bf16.mxu0 0
      %1093 = vmatmul.mubr.bf16.gmra.mxu0 %v808
      %v1094 = vpop.f32.mrf.mxu0
      %v1095 = vadd.f32 %v449, %v1094
      %v1096 = vpop.f32.mrf.mxu0
      %v1097 = vpop.f32.mrf.mxu0
      %v1098 = vadd.f32 %v449, %v1097
      %v1099 = vpop.f32.mrf.mxu0
      %1100 = vmatprep.mubr.bf16.mxu0 0
      %1101 = vmatmul.mubr.bf16.gmra.mxu0 %v811
      %v1102 = vpop.f32.mrf.mxu0
      %v1103 = vadd.f32 %v449, %v1102
      %v1104 = vpop.f32.mrf.mxu0
      %v1105 = vpop.f32.mrf.mxu0
      %v1106 = vadd.f32 %v449, %v1105
      %v1107 = vpop.f32.mrf.mxu0
      %1108 = vmatprep.mubr.bf16.mxu0 0
      %1109 = vmatmul.mubr.bf16.gmra.mxu0 %v814
      %v1110 = vpop.f32.mrf.mxu0
      %v1111 = vadd.f32 %v449, %v1110
      %v1112 = vpop.f32.mrf.mxu0
      %v1113 = vpop.f32.mrf.mxu0
      %v1114 = vadd.f32 %v449, %v1113
      %v1115 = vpop.f32.mrf.mxu0
      %1116 = vmatprep.mubr.bf16.mxu0 0
      %1117 = vmatmul.mubr.bf16.gmra.mxu0 %v817
      %v1118 = vpop.f32.mrf.mxu0
      %v1119 = vadd.f32 %v449, %v1118
      %v1120 = vpop.f32.mrf.mxu0
      %v1121 = vpop.f32.mrf.mxu0
      %v1122 = vadd.f32 %v449, %v1121
      %v1123 = vpop.f32.mrf.mxu0
      %1124 = vmatprep.mubr.bf16.mxu0 0
      %1125 = vmatmul.mubr.bf16.gmra.mxu0 %v820
      %v1126 = vpop.f32.mrf.mxu0
      %v1127 = vadd.f32 %v449, %v1126
      %v1128 = vpop.f32.mrf.mxu0
      %v1129 = vpop.f32.mrf.mxu0
      %v1130 = vadd.f32 %v449, %v1129
      %v1131 = vpop.f32.mrf.mxu0
      %1132 = vmatprep.mubr.bf16.mxu0 0
      %1133 = vmatmul.mubr.bf16.gmra.mxu0 %v823
      %v1134 = vpop.f32.mrf.mxu0
      %v1135 = vadd.f32 %v449, %v1134
      %v1136 = vpop.f32.mrf.mxu0
      %v1137 = vpop.f32.mrf.mxu0
      %v1138 = vadd.f32 %v449, %v1137
      %v1139 = vpop.f32.mrf.mxu0
      %1140 = vmatprep.mubr.bf16.mxu0 0
      %1141 = vmatmul.mubr.bf16.gmra.mxu0 %v826
      %v1142 = vpop.f32.mrf.mxu0
      %v1143 = vadd.f32 %v449, %v1142
      %v1144 = vpop.f32.mrf.mxu0
      %v1145 = vpop.f32.mrf.mxu0
      %v1146 = vadd.f32 %v449, %v1145
      %v1147 = vpop.f32.mrf.mxu0
      %1148 = vmatprep.mubr.bf16.mxu0 0
      %1149 = vmatmul.mubr.bf16.gmra.mxu0 %v829
      %v1150 = vpop.f32.mrf.mxu0
      %v1151 = vadd.f32 %v449, %v1150
      %v1152 = vpop.f32.mrf.mxu0
      %v1153 = vpop.f32.mrf.mxu0
      %v1154 = vadd.f32 %v449, %v1153
      %v1155 = vpop.f32.mrf.mxu0
      %1156 = vmatprep.mubr.bf16.mxu0 0
      %1157 = vmatmul.mubr.bf16.gmra.mxu0 %v832
      %v1158 = vpop.f32.mrf.mxu0
      %v1159 = vadd.f32 %v449, %v1158
      %v1160 = vpop.f32.mrf.mxu0
      %v1161 = vpop.f32.mrf.mxu0
      %v1162 = vadd.f32 %v449, %v1161
      %v1163 = vpop.f32.mrf.mxu0
      %1164 = vmatprep.mubr.bf16.mxu0 0
      %1165 = vmatmul.mubr.bf16.gmra.mxu0 %v835
      %v1166 = vpop.f32.mrf.mxu0
      %v1167 = vadd.f32 %v449, %v1166
      %v1168 = vpop.f32.mrf.mxu0
      %v1169 = vpop.f32.mrf.mxu0
      %v1170 = vadd.f32 %v449, %v1169
      %v1171 = vpop.f32.mrf.mxu0
      %1172 = vmatprep.mubr.bf16.mxu0 0
      %1173 = vmatmul.mubr.bf16.gmra.mxu0 %v838
      %v1174 = vpop.f32.mrf.mxu0
      %v1175 = vadd.f32 %v449, %v1174
      %v1176 = vpop.f32.mrf.mxu0
      %v1177 = vpop.f32.mrf.mxu0
      %v1178 = vadd.f32 %v449, %v1177
      %v1179 = vpop.f32.mrf.mxu0
      %1180 = vmatprep.mubr.bf16.mxu0 0
      %1181 = vmatmul.mubr.bf16.gmra.mxu0 %v841
      %v1182 = vpop.f32.mrf.mxu0
      %v1183 = vadd.f32 %v449, %v1182
      %v1184 = vpop.f32.mrf.mxu0
      %v1185 = vpop.f32.mrf.mxu0
      %v1186 = vadd.f32 %v449, %v1185
      %v1187 = vpop.f32.mrf.mxu0
      %1188 = vmatprep.mubr.bf16.mxu0 0
      %1189 = vmatmul.mubr.bf16.gmra.mxu0 %v844
      %v1190 = vpop.f32.mrf.mxu0
      %v1191 = vadd.f32 %v449, %v1190
      %v1192 = vpop.f32.mrf.mxu0
      %v1193 = vpop.f32.mrf.mxu0
      %v1194 = vadd.f32 %v449, %v1193
      %v1195 = vpop.f32.mrf.mxu0
      %1196 = vmatprep.mubr.bf16.mxu0 0
      %1197 = vmatmul.mubr.bf16.gmra.mxu0 %v847
      %v1198 = vpop.f32.mrf.mxu0
      %v1199 = vadd.f32 %v449, %v1198
      %v1200 = vpop.f32.mrf.mxu0
      %v1201 = vpop.f32.mrf.mxu0
      %v1202 = vadd.f32 %v449, %v1201
      %v1203 = vpop.f32.mrf.mxu0
      %1204 = vmatprep.mubr.bf16.mxu0 0
      %1205 = vmatmul.mubr.bf16.gmra.mxu0 %v850
      %v1206 = vpop.f32.mrf.mxu0
      %v1207 = vadd.f32 %v449, %v1206
      %v1208 = vpop.f32.mrf.mxu0
      %v1209 = vpop.f32.mrf.mxu0
      %v1210 = vadd.f32 %v449, %v1209
      %v1211 = vpop.f32.mrf.mxu0
      %1212 = vmatprep.mubr.bf16.mxu0 0
      %1213 = vmatmul.mubr.bf16.gmra.mxu0 %v853
      %v1214 = vpop.f32.mrf.mxu0
      %v1215 = vadd.f32 %v449, %v1214
      %v1216 = vpop.f32.mrf.mxu0
      %v1217 = vpop.f32.mrf.mxu0
      %v1218 = vadd.f32 %v449, %v1217
      %v1219 = vpop.f32.mrf.mxu0
      %1220 = vmatprep.mubr.bf16.mxu0 0
      %1221 = vmatmul.mubr.bf16.gmra.mxu0 %v856
      %v1222 = vpop.f32.mrf.mxu0
      %v1223 = vadd.f32 %v449, %v1222
      %v1224 = vpop.f32.mrf.mxu0
      %v1225 = vpop.f32.mrf.mxu0
      %v1226 = vadd.f32 %v449, %v1225
      %v1227 = vpop.f32.mrf.mxu0
      %1228 = vmatprep.mubr.bf16.mxu0 0
      %1229 = vmatmul.mubr.bf16.gmra.mxu0 %v859
      %v1230 = vpop.f32.mrf.mxu0
      %v1231 = vadd.f32 %v449, %v1230
      %v1232 = vpop.f32.mrf.mxu0
      %v1233 = vpop.f32.mrf.mxu0
      %v1234 = vadd.f32 %v449, %v1233
      %v1235 = vpop.f32.mrf.mxu0
      %1236 = vmatprep.mubr.bf16.mxu0 0
      %1237 = vmatmul.mubr.bf16.gmra.mxu0 %v862
      %v1238 = vpop.f32.mrf.mxu0
      %v1239 = vadd.f32 %v449, %v1238
      %v1240 = vpop.f32.mrf.mxu0
      %v1241 = vpop.f32.mrf.mxu0
      %v1242 = vadd.f32 %v449, %v1241
      %v1243 = vpop.f32.mrf.mxu0
      %1244 = vmatprep.mubr.bf16.mxu0 0
      %1245 = vmatmul.mubr.bf16.gmra.mxu0 %v865
      %v1246 = vpop.f32.mrf.mxu0
      %v1247 = vadd.f32 %v449, %v1246
      %v1248 = vpop.f32.mrf.mxu0
      %v1249 = vpop.f32.mrf.mxu0
      %v1250 = vadd.f32 %v449, %v1249
      %v1251 = vpop.f32.mrf.mxu0
      %1252 = vmatprep.mubr.bf16.mxu0 0
      %1253 = vmatmul.mubr.bf16.gmra.mxu0 %v868
      %v1254 = vpop.f32.mrf.mxu0
      %v1255 = vadd.f32 %v449, %v1254
      %v1256 = vpop.f32.mrf.mxu0
      %v1257 = vpop.f32.mrf.mxu0
      %v1258 = vadd.f32 %v449, %v1257
      %v1259 = vpop.f32.mrf.mxu0
      %1260 = vmatprep.mubr.bf16.mxu0 0
      %1261 = vmatmul.mubr.bf16.gmra.mxu0 %v871
      %v1262 = vpop.f32.mrf.mxu0
      %v1263 = vadd.f32 %v449, %v1262
      %v1264 = vpop.f32.mrf.mxu0
      %v1265 = vpop.f32.mrf.mxu0
      %v1266 = vadd.f32 %v449, %v1265
      %v1267 = vpop.f32.mrf.mxu0
      %1268 = vmatprep.mubr.bf16.mxu0 0
      %1269 = vmatmul.mubr.bf16.gmra.mxu0 %v874
      %v1270 = vpop.f32.mrf.mxu0
      %v1271 = vadd.f32 %v449, %v1270
      %v1272 = vpop.f32.mrf.mxu0
      %v1273 = vpop.f32.mrf.mxu0
      %v1274 = vadd.f32 %v449, %v1273
      %v1275 = vpop.f32.mrf.mxu0
      %1276 = vmatprep.mubr.bf16.mxu0 0
      %1277 = vmatmul.mubr.bf16.gmra.mxu0 %v877
      %v1278 = vpop.f32.mrf.mxu0
      %v1279 = vadd.f32 %v449, %v1278
      %v1280 = vpop.f32.mrf.mxu0
      %v1281 = vpop.f32.mrf.mxu0
      %v1282 = vadd.f32 %v449, %v1281
      %v1283 = vpop.f32.mrf.mxu0
      %1284 = vmatprep.mubr.bf16.mxu0 0
      %1285 = vmatmul.mubr.bf16.gmra.mxu0 %v880
      %v1286 = vpop.f32.mrf.mxu0
      %v1287 = vadd.f32 %v449, %v1286
      %v1288 = vpop.f32.mrf.mxu0
      %v1289 = vpop.f32.mrf.mxu0
      %v1290 = vadd.f32 %v449, %v1289
      %v1291 = vpop.f32.mrf.mxu0
      %1292 = vmatprep.mubr.bf16.mxu0 0
      %1293 = vmatmul.mubr.bf16.gmra.mxu0 %v883
      %v1294 = vpop.f32.mrf.mxu0
      %v1295 = vadd.f32 %v449, %v1294
      %v1296 = vpop.f32.mrf.mxu0
      %v1297 = vpop.f32.mrf.mxu0
      %v1298 = vadd.f32 %v449, %v1297
      %v1299 = vpop.f32.mrf.mxu0
      %1300 = vmatprep.mubr.bf16.mxu0 0
      %1301 = vmatmul.mubr.bf16.gmra.mxu0 %v886
      %v1302 = vpop.f32.mrf.mxu0
      %v1303 = vadd.f32 %v449, %v1302
      %v1304 = vpop.f32.mrf.mxu0
      %v1305 = vpop.f32.mrf.mxu0
      %v1306 = vadd.f32 %v449, %v1305
      %v1307 = vpop.f32.mrf.mxu0
      %1308 = vmatprep.mubr.bf16.mxu0 0
      %1309 = vmatmul.mubr.bf16.gmra.mxu0 %v889
      %v1310 = vpop.f32.mrf.mxu0
      %v1311 = vadd.f32 %v449, %v1310
      %v1312 = vpop.f32.mrf.mxu0
      %v1313 = vpop.f32.mrf.mxu0
      %v1314 = vadd.f32 %v449, %v1313
      %v1315 = vpop.f32.mrf.mxu0
      %1316 = vmatprep.mubr.bf16.mxu0 0
      %1317 = vmatmul.mubr.bf16.gmra.mxu0 %v892
      %v1318 = vpop.f32.mrf.mxu0
      %v1319 = vadd.f32 %v449, %v1318
      %v1320 = vpop.f32.mrf.mxu0
      %v1321 = vpop.f32.mrf.mxu0
      %v1322 = vadd.f32 %v449, %v1321
      %v1323 = vpop.f32.mrf.mxu0
      %1324 = vmatprep.mubr.bf16.mxu0 0
      %1325 = vmatmul.mubr.bf16.gmra.mxu0 %v895
      %v1326 = vpop.f32.mrf.mxu0
      %v1327 = vadd.f32 %v449, %v1326
      %v1328 = vpop.f32.mrf.mxu0
      %v1329 = vpop.f32.mrf.mxu0
      %v1330 = vadd.f32 %v449, %v1329
      %v1331 = vpop.f32.mrf.mxu0
      %1332 = vmatprep.mubr.bf16.mxu0 0
      %1333 = vmatmul.mubr.bf16.gmra.mxu0 %v898
      %v1334 = vpop.f32.mrf.mxu0
      %v1335 = vadd.f32 %v449, %v1334
      %v1336 = vpop.f32.mrf.mxu0
      %v1337 = vpop.f32.mrf.mxu0
      %v1338 = vadd.f32 %v449, %v1337
      %v1339 = vpop.f32.mrf.mxu0
      %1340 = vmatprep.mubr.bf16.mxu0 0
      %1341 = vmatmul.mubr.bf16.gmra.mxu0 %v901
      %v1342 = vpop.f32.mrf.mxu0
      %v1343 = vadd.f32 %v449, %v1342
      %v1344 = vpop.f32.mrf.mxu0
      %v1345 = vpop.f32.mrf.mxu0
      %v1346 = vadd.f32 %v449, %v1345
      %v1347 = vpop.f32.mrf.mxu0
      %1348 = vmatprep.mubr.bf16.mxu0 0
      %1349 = vmatmul.mubr.bf16.gmra.mxu0 %v904
      %v1350 = vpop.f32.mrf.mxu0
      %v1351 = vadd.f32 %v449, %v1350
      %v1352 = vpop.f32.mrf.mxu0
      %v1353 = vpop.f32.mrf.mxu0
      %v1354 = vadd.f32 %v449, %v1353
      %v1355 = vpop.f32.mrf.mxu0
      %1356 = vmatprep.mubr.bf16.mxu0 0
      %1357 = vmatmul.mubr.bf16.gmra.mxu0 %v907
      %v1358 = vpop.f32.mrf.mxu0
      %v1359 = vadd.f32 %v449, %v1358
      %v1360 = vpop.f32.mrf.mxu0
      %v1361 = vpop.f32.mrf.mxu0
      %v1362 = vadd.f32 %v449, %v1361
      %v1363 = vpop.f32.mrf.mxu0
      %1364 = vmatprep.mubr.bf16.mxu0 0
      %1365 = vmatmul.mubr.bf16.gmra.mxu0 %v910
      %v1366 = vpop.f32.mrf.mxu0
      %v1367 = vadd.f32 %v449, %v1366
      %v1368 = vpop.f32.mrf.mxu0
      %v1369 = vpop.f32.mrf.mxu0
      %v1370 = vadd.f32 %v449, %v1369
      %v1371 = vpop.f32.mrf.mxu0
      %1372 = vmatprep.mubr.bf16.mxu0 0
      %1373 = vmatmul.mubr.bf16.gmra.mxu0 %v913
      %v1374 = vpop.f32.mrf.mxu0
      %v1375 = vadd.f32 %v449, %v1374
      %v1376 = vpop.f32.mrf.mxu0
      %v1377 = vpop.f32.mrf.mxu0
      %v1378 = vadd.f32 %v449, %v1377
      %v1379 = vpop.f32.mrf.mxu0
      %1380 = vmatprep.mubr.bf16.mxu0 0
      %1381 = vmatmul.mubr.bf16.gmra.mxu0 %v916
      %v1382 = vpop.f32.mrf.mxu0
      %v1383 = vadd.f32 %v449, %v1382
      %v1384 = vpop.f32.mrf.mxu0
      %v1385 = vpop.f32.mrf.mxu0
      %v1386 = vadd.f32 %v449, %v1385
      %v1387 = vpop.f32.mrf.mxu0
      %1388 = vmatprep.mubr.bf16.mxu0 0
      %1389 = vmatmul.mubr.bf16.gmra.mxu0 %v919
      %v1390 = vpop.f32.mrf.mxu0
      %v1391 = vadd.f32 %v449, %v1390
      %v1392 = vpop.f32.mrf.mxu0
      %v1393 = vpop.f32.mrf.mxu0
      %v1394 = vadd.f32 %v449, %v1393
      %v1395 = vpop.f32.mrf.mxu0
      %1396 = vmatprep.mubr.bf16.mxu0 0
      %1397 = vmatmul.mubr.bf16.gmra.mxu0 %v922
      %v1398 = vpop.f32.mrf.mxu0
      %v1399 = vadd.f32 %v449, %v1398
      %v1400 = vpop.f32.mrf.mxu0
      %v1401 = vpop.f32.mrf.mxu0
      %v1402 = vadd.f32 %v449, %v1401
      %v1403 = vpop.f32.mrf.mxu0
      %1404 = vdwg.mxu0
      %1405 = vadd.xlane.f32.xlu0 %v959
      %v1406 = vpop.xlane.xlu0 %1405
      %1407 = vadd.xlane.f32.xlu0 %v962
      %v1408 = vpop.xlane.xlu0 %1407
      %1409 = vadd.xlane.f32.xlu0 %v967
      %v1410 = vpop.xlane.xlu0 %1409
      %1411 = vadd.xlane.f32.xlu0 %v970
      %v1412 = vpop.xlane.xlu0 %1411
      %1413 = vadd.xlane.f32.xlu0 %v975
      %v1414 = vpop.xlane.xlu0 %1413
      %1415 = vadd.xlane.f32.xlu0 %v978
      %v1416 = vpop.xlane.xlu0 %1415
      %1417 = vadd.xlane.f32.xlu0 %v983
      %v1418 = vpop.xlane.xlu0 %1417
      %1419 = vadd.xlane.f32.xlu0 %v986
      %v1420 = vpop.xlane.xlu0 %1419
      %1421 = vadd.xlane.f32.xlu0 %v991
      %v1422 = vpop.xlane.xlu0 %1421
      %1423 = vadd.xlane.f32.xlu0 %v994
      %v1424 = vpop.xlane.xlu0 %1423
      %1425 = vadd.xlane.f32.xlu0 %v999
      %v1426 = vpop.xlane.xlu0 %1425
      %1427 = vadd.xlane.f32.xlu0 %v1002
      %v1428 = vpop.xlane.xlu0 %1427
      %1429 = vadd.xlane.f32.xlu0 %v1007
      %v1430 = vpop.xlane.xlu0 %1429
      %1431 = vadd.xlane.f32.xlu0 %v1010
      %v1432 = vpop.xlane.xlu0 %1431
      %1433 = vadd.xlane.f32.xlu0 %v1015
      %v1434 = vpop.xlane.xlu0 %1433
      %1435 = vadd.xlane.f32.xlu0 %v1018
      %v1436 = vpop.xlane.xlu0 %1435
      %1437 = vadd.xlane.f32.xlu0 %v1023
      %v1438 = vpop.xlane.xlu0 %1437
      %1439 = vadd.xlane.f32.xlu0 %v1026
      %v1440 = vpop.xlane.xlu0 %1439
      %1441 = vadd.xlane.f32.xlu0 %v1031
      %v1442 = vpop.xlane.xlu0 %1441
      %1443 = vadd.xlane.f32.xlu0 %v1034
      %v1444 = vpop.xlane.xlu0 %1443
      %1445 = vadd.xlane.f32.xlu0 %v1039
      %v1446 = vpop.xlane.xlu0 %1445
      %1447 = vadd.xlane.f32.xlu0 %v1042
      %v1448 = vpop.xlane.xlu0 %1447
      %1449 = vadd.xlane.f32.xlu0 %v1047
      %v1450 = vpop.xlane.xlu0 %1449
      %1451 = vadd.xlane.f32.xlu0 %v1050
      %v1452 = vpop.xlane.xlu0 %1451
      %1453 = vadd.xlane.f32.xlu0 %v1055
      %v1454 = vpop.xlane.xlu0 %1453
      %1455 = vadd.xlane.f32.xlu0 %v1058
      %v1456 = vpop.xlane.xlu0 %1455
      %1457 = vadd.xlane.f32.xlu0 %v1063
      %v1458 = vpop.xlane.xlu0 %1457
      %1459 = vadd.xlane.f32.xlu0 %v1066
      %v1460 = vpop.xlane.xlu0 %1459
      %1461 = vadd.xlane.f32.xlu0 %v1071
      %v1462 = vpop.xlane.xlu0 %1461
      %1463 = vadd.xlane.f32.xlu0 %v1074
      %v1464 = vpop.xlane.xlu0 %1463
      %1465 = vadd.xlane.f32.xlu0 %v1079
      %v1466 = vpop.xlane.xlu0 %1465
      %1467 = vadd.xlane.f32.xlu0 %v1082
      %v1468 = vpop.xlane.xlu0 %1467
      %1469 = vadd.xlane.f32.xlu0 %v1087
      %v1470 = vpop.xlane.xlu0 %1469
      %1471 = vadd.xlane.f32.xlu0 %v1090
      %v1472 = vpop.xlane.xlu0 %1471
      %1473 = vadd.xlane.f32.xlu0 %v1095
      %v1474 = vpop.xlane.xlu0 %1473
      %1475 = vadd.xlane.f32.xlu0 %v1098
      %v1476 = vpop.xlane.xlu0 %1475
      %1477 = vadd.xlane.f32.xlu0 %v1103
      %v1478 = vpop.xlane.xlu0 %1477
      %1479 = vadd.xlane.f32.xlu0 %v1106
      %v1480 = vpop.xlane.xlu0 %1479
      %1481 = vadd.xlane.f32.xlu0 %v1111
      %v1482 = vpop.xlane.xlu0 %1481
      %1483 = vadd.xlane.f32.xlu0 %v1114
      %v1484 = vpop.xlane.xlu0 %1483
      %1485 = vadd.xlane.f32.xlu0 %v1119
      %v1486 = vpop.xlane.xlu0 %1485
      %1487 = vadd.xlane.f32.xlu0 %v1122
      %v1488 = vpop.xlane.xlu0 %1487
      %1489 = vadd.xlane.f32.xlu0 %v1127
      %v1490 = vpop.xlane.xlu0 %1489
      %1491 = vadd.xlane.f32.xlu0 %v1130
      %v1492 = vpop.xlane.xlu0 %1491
      %1493 = vadd.xlane.f32.xlu0 %v1135
      %v1494 = vpop.xlane.xlu0 %1493
      %1495 = vadd.xlane.f32.xlu0 %v1138
      %v1496 = vpop.xlane.xlu0 %1495
      %1497 = vadd.xlane.f32.xlu0 %v1143
      %v1498 = vpop.xlane.xlu0 %1497
      %1499 = vadd.xlane.f32.xlu0 %v1146
      %v1500 = vpop.xlane.xlu0 %1499
      %1501 = vadd.xlane.f32.xlu0 %v1151
      %v1502 = vpop.xlane.xlu0 %1501
      %1503 = vadd.xlane.f32.xlu0 %v1154
      %v1504 = vpop.xlane.xlu0 %1503
      %1505 = vadd.xlane.f32.xlu0 %v1159
      %v1506 = vpop.xlane.xlu0 %1505
      %1507 = vadd.xlane.f32.xlu0 %v1162
      %v1508 = vpop.xlane.xlu0 %1507
      %1509 = vadd.xlane.f32.xlu0 %v1167
      %v1510 = vpop.xlane.xlu0 %1509
      %1511 = vadd.xlane.f32.xlu0 %v1170
      %v1512 = vpop.xlane.xlu0 %1511
      %1513 = vadd.xlane.f32.xlu0 %v1175
      %v1514 = vpop.xlane.xlu0 %1513
      %1515 = vadd.xlane.f32.xlu0 %v1178
      %v1516 = vpop.xlane.xlu0 %1515
      %1517 = vadd.xlane.f32.xlu0 %v1183
      %v1518 = vpop.xlane.xlu0 %1517
      %1519 = vadd.xlane.f32.xlu0 %v1186
      %v1520 = vpop.xlane.xlu0 %1519
      %1521 = vadd.xlane.f32.xlu0 %v1191
      %v1522 = vpop.xlane.xlu0 %1521
      %1523 = vadd.xlane.f32.xlu0 %v1194
      %v1524 = vpop.xlane.xlu0 %1523
      %1525 = vadd.xlane.f32.xlu0 %v1199
      %v1526 = vpop.xlane.xlu0 %1525
      %1527 = vadd.xlane.f32.xlu0 %v1202
      %v1528 = vpop.xlane.xlu0 %1527
      %1529 = vadd.xlane.f32.xlu0 %v1207
      %v1530 = vpop.xlane.xlu0 %1529
      %1531 = vadd.xlane.f32.xlu0 %v1210
      %v1532 = vpop.xlane.xlu0 %1531
      %1533 = vadd.xlane.f32.xlu0 %v1215
      %v1534 = vpop.xlane.xlu0 %1533
      %1535 = vadd.xlane.f32.xlu0 %v1218
      %v1536 = vpop.xlane.xlu0 %1535
      %1537 = vadd.xlane.f32.xlu0 %v1223
      %v1538 = vpop.xlane.xlu0 %1537
      %1539 = vadd.xlane.f32.xlu0 %v1226
      %v1540 = vpop.xlane.xlu0 %1539
      %1541 = vadd.xlane.f32.xlu0 %v1231
      %v1542 = vpop.xlane.xlu0 %1541
      %1543 = vadd.xlane.f32.xlu0 %v1234
      %v1544 = vpop.xlane.xlu0 %1543
      %1545 = vadd.xlane.f32.xlu0 %v1239
      %v1546 = vpop.xlane.xlu0 %1545
      %1547 = vadd.xlane.f32.xlu0 %v1242
      %v1548 = vpop.xlane.xlu0 %1547
      %1549 = vadd.xlane.f32.xlu0 %v1247
      %v1550 = vpop.xlane.xlu0 %1549
      %1551 = vadd.xlane.f32.xlu0 %v1250
      %v1552 = vpop.xlane.xlu0 %1551
      %1553 = vadd.xlane.f32.xlu0 %v1255
      %v1554 = vpop.xlane.xlu0 %1553
      %1555 = vadd.xlane.f32.xlu0 %v1258
      %v1556 = vpop.xlane.xlu0 %1555
      %1557 = vadd.xlane.f32.xlu0 %v1263
      %v1558 = vpop.xlane.xlu0 %1557
      %1559 = vadd.xlane.f32.xlu0 %v1266
      %v1560 = vpop.xlane.xlu0 %1559
      %1561 = vadd.xlane.f32.xlu0 %v1271
      %v1562 = vpop.xlane.xlu0 %1561
      %1563 = vadd.xlane.f32.xlu0 %v1274
      %v1564 = vpop.xlane.xlu0 %1563
      %1565 = vadd.xlane.f32.xlu0 %v1279
      %v1566 = vpop.xlane.xlu0 %1565
      %1567 = vadd.xlane.f32.xlu0 %v1282
      %v1568 = vpop.xlane.xlu0 %1567
      %1569 = vadd.xlane.f32.xlu0 %v1287
      %v1570 = vpop.xlane.xlu0 %1569
      %1571 = vadd.xlane.f32.xlu0 %v1290
      %v1572 = vpop.xlane.xlu0 %1571
      %1573 = vadd.xlane.f32.xlu0 %v1295
      %v1574 = vpop.xlane.xlu0 %1573
      %1575 = vadd.xlane.f32.xlu0 %v1298
      %v1576 = vpop.xlane.xlu0 %1575
      %1577 = vadd.xlane.f32.xlu0 %v1303
      %v1578 = vpop.xlane.xlu0 %1577
      %1579 = vadd.xlane.f32.xlu0 %v1306
      %v1580 = vpop.xlane.xlu0 %1579
      %1581 = vadd.xlane.f32.xlu0 %v1311
      %v1582 = vpop.xlane.xlu0 %1581
      %1583 = vadd.xlane.f32.xlu0 %v1314
      %v1584 = vpop.xlane.xlu0 %1583
      %1585 = vadd.xlane.f32.xlu0 %v1319
      %v1586 = vpop.xlane.xlu0 %1585
      %1587 = vadd.xlane.f32.xlu0 %v1322
      %v1588 = vpop.xlane.xlu0 %1587
      %1589 = vadd.xlane.f32.xlu0 %v1327
      %v1590 = vpop.xlane.xlu0 %1589
      %1591 = vadd.xlane.f32.xlu0 %v1330
      %v1592 = vpop.xlane.xlu0 %1591
      %1593 = vadd.xlane.f32.xlu0 %v1335
      %v1594 = vpop.xlane.xlu0 %1593
      %1595 = vadd.xlane.f32.xlu0 %v1338
      %v1596 = vpop.xlane.xlu0 %1595
      %1597 = vadd.xlane.f32.xlu0 %v1343
      %v1598 = vpop.xlane.xlu0 %1597
      %1599 = vadd.xlane.f32.xlu0 %v1346
      %v1600 = vpop.xlane.xlu0 %1599
      %1601 = vadd.xlane.f32.xlu0 %v1351
      %v1602 = vpop.xlane.xlu0 %1601
      %1603 = vadd.xlane.f32.xlu0 %v1354
      %v1604 = vpop.xlane.xlu0 %1603
      %1605 = vadd.xlane.f32.xlu0 %v1359
      %v1606 = vpop.xlane.xlu0 %1605
      %1607 = vadd.xlane.f32.xlu0 %v1362
      %v1608 = vpop.xlane.xlu0 %1607
      %1609 = vadd.xlane.f32.xlu0 %v1367
      %v1610 = vpop.xlane.xlu0 %1609
      %1611 = vadd.xlane.f32.xlu0 %v1370
      %v1612 = vpop.xlane.xlu0 %1611
      %1613 = vadd.xlane.f32.xlu0 %v1375
      %v1614 = vpop.xlane.xlu0 %1613
      %1615 = vadd.xlane.f32.xlu0 %v1378
      %v1616 = vpop.xlane.xlu0 %1615
      %1617 = vadd.xlane.f32.xlu0 %v1383
      %v1618 = vpop.xlane.xlu0 %1617
      %1619 = vadd.xlane.f32.xlu0 %v1386
      %v1620 = vpop.xlane.xlu0 %1619
      %1621 = vadd.xlane.f32.xlu0 %v1391
      %v1622 = vpop.xlane.xlu0 %1621
      %1623 = vadd.xlane.f32.xlu0 %v1394
      %v1624 = vpop.xlane.xlu0 %1623
      %1625 = vadd.xlane.f32.xlu0 %v1399
      %v1626 = vpop.xlane.xlu0 %1625
      %1627 = vadd.xlane.f32.xlu0 %v1402
      %v1628 = vpop.xlane.xlu0 %1627
      %v1629 = vmul.f32 %v959, %v959
      %v1630 = vmul.f32 %v962, %v962
      %v1631 = vmul.f32 %v967, %v967
      %v1632 = vmul.f32 %v970, %v970
      %v1633 = vmul.f32 %v975, %v975
      %v1634 = vmul.f32 %v978, %v978
      %v1635 = vmul.f32 %v983, %v983
      %v1636 = vmul.f32 %v986, %v986
      %v1637 = vmul.f32 %v991, %v991
      %v1638 = vmul.f32 %v994, %v994
      %v1639 = vmul.f32 %v999, %v999
      %v1640 = vmul.f32 %v1002, %v1002
      %v1641 = vmul.f32 %v1007, %v1007
      %v1642 = vmul.f32 %v1010, %v1010
      %v1643 = vmul.f32 %v1015, %v1015
      %v1644 = vmul.f32 %v1018, %v1018
      %v1645 = vmul.f32 %v1023, %v1023
      %v1646 = vmul.f32 %v1026, %v1026
      %v1647 = vmul.f32 %v1031, %v1031
      %v1648 = vmul.f32 %v1034, %v1034
      %v1649 = vmul.f32 %v1039, %v1039
      %v1650 = vmul.f32 %v1042, %v1042
      %v1651 = vmul.f32 %v1047, %v1047
      %v1652 = vmul.f32 %v1050, %v1050
      %v1653 = vmul.f32 %v1055, %v1055
      %v1654 = vmul.f32 %v1058, %v1058
      %v1655 = vmul.f32 %v1063, %v1063
      %v1656 = vmul.f32 %v1066, %v1066
      %v1657 = vmul.f32 %v1071, %v1071
      %v1658 = vmul.f32 %v1074, %v1074
      %v1659 = vmul.f32 %v1079, %v1079
      %v1660 = vmul.f32 %v1082, %v1082
      %v1661 = vmul.f32 %v1087, %v1087
      %v1662 = vmul.f32 %v1090, %v1090
      %v1663 = vmul.f32 %v1095, %v1095
      %v1664 = vmul.f32 %v1098, %v1098
      %v1665 = vmul.f32 %v1103, %v1103
      %v1666 = vmul.f32 %v1106, %v1106
      %v1667 = vmul.f32 %v1111, %v1111
      %v1668 = vmul.f32 %v1114, %v1114
      %v1669 = vmul.f32 %v1119, %v1119
      %v1670 = vmul.f32 %v1122, %v1122
      %v1671 = vmul.f32 %v1127, %v1127
      %v1672 = vmul.f32 %v1130, %v1130
      %v1673 = vmul.f32 %v1135, %v1135
      %v1674 = vmul.f32 %v1138, %v1138
      %v1675 = vmul.f32 %v1143, %v1143
      %v1676 = vmul.f32 %v1146, %v1146
      %v1677 = vmul.f32 %v1151, %v1151
      %v1678 = vmul.f32 %v1154, %v1154
      %v1679 = vmul.f32 %v1159, %v1159
      %v1680 = vmul.f32 %v1162, %v1162
      %v1681 = vmul.f32 %v1167, %v1167
      %v1682 = vmul.f32 %v1170, %v1170
      %v1683 = vmul.f32 %v1175, %v1175
      %v1684 = vmul.f32 %v1178, %v1178
      %v1685 = vmul.f32 %v1183, %v1183
      %v1686 = vmul.f32 %v1186, %v1186
      %v1687 = vmul.f32 %v1191, %v1191
      %v1688 = vmul.f32 %v1194, %v1194
      %v1689 = vmul.f32 %v1199, %v1199
      %v1690 = vmul.f32 %v1202, %v1202
      %v1691 = vmul.f32 %v1207, %v1207
      %v1692 = vmul.f32 %v1210, %v1210
      %v1693 = vmul.f32 %v1215, %v1215
      %v1694 = vmul.f32 %v1218, %v1218
      %v1695 = vmul.f32 %v1223, %v1223
      %v1696 = vmul.f32 %v1226, %v1226
      %v1697 = vmul.f32 %v1231, %v1231
      %v1698 = vmul.f32 %v1234, %v1234
      %v1699 = vmul.f32 %v1239, %v1239
      %v1700 = vmul.f32 %v1242, %v1242
      %v1701 = vmul.f32 %v1247, %v1247
      %v1702 = vmul.f32 %v1250, %v1250
      %v1703 = vmul.f32 %v1255, %v1255
      %v1704 = vmul.f32 %v1258, %v1258
      %v1705 = vmul.f32 %v1263, %v1263
      %v1706 = vmul.f32 %v1266, %v1266
      %v1707 = vmul.f32 %v1271, %v1271
      %v1708 = vmul.f32 %v1274, %v1274
      %v1709 = vmul.f32 %v1279, %v1279
      %v1710 = vmul.f32 %v1282, %v1282
      %v1711 = vmul.f32 %v1287, %v1287
      %v1712 = vmul.f32 %v1290, %v1290
      %v1713 = vmul.f32 %v1295, %v1295
      %v1714 = vmul.f32 %v1298, %v1298
      %v1715 = vmul.f32 %v1303, %v1303
      %v1716 = vmul.f32 %v1306, %v1306
      %v1717 = vmul.f32 %v1311, %v1311
      %v1718 = vmul.f32 %v1314, %v1314
      %v1719 = vmul.f32 %v1319, %v1319
      %v1720 = vmul.f32 %v1322, %v1322
      %v1721 = vmul.f32 %v1327, %v1327
      %v1722 = vmul.f32 %v1330, %v1330
      %v1723 = vmul.f32 %v1335, %v1335
      %v1724 = vmul.f32 %v1338, %v1338
      %v1725 = vmul.f32 %v1343, %v1343
      %v1726 = vmul.f32 %v1346, %v1346
      %v1727 = vmul.f32 %v1351, %v1351
      %v1728 = vmul.f32 %v1354, %v1354
      %v1729 = vmul.f32 %v1359, %v1359
      %v1730 = vmul.f32 %v1362, %v1362
      %v1731 = vmul.f32 %v1367, %v1367
      %v1732 = vmul.f32 %v1370, %v1370
      %v1733 = vmul.f32 %v1375, %v1375
      %v1734 = vmul.f32 %v1378, %v1378
      %v1735 = vmul.f32 %v1383, %v1383
      %v1736 = vmul.f32 %v1386, %v1386
      %v1737 = vmul.f32 %v1391, %v1391
      %v1738 = vmul.f32 %v1394, %v1394
      %v1739 = vmul.f32 %v1399, %v1399
      %v1740 = vmul.f32 %v1402, %v1402
      %1741 = vadd.xlane.f32.xlu0 %v1629
      %v1742 = vpop.xlane.xlu0 %1741
      %1743 = vadd.xlane.f32.xlu0 %v1630
      %v1744 = vpop.xlane.xlu0 %1743
      %1745 = vadd.xlane.f32.xlu0 %v1631
      %v1746 = vpop.xlane.xlu0 %1745
      %1747 = vadd.xlane.f32.xlu0 %v1632
      %v1748 = vpop.xlane.xlu0 %1747
      %1749 = vadd.xlane.f32.xlu0 %v1633
      %v1750 = vpop.xlane.xlu0 %1749
      %1751 = vadd.xlane.f32.xlu0 %v1634
      %v1752 = vpop.xlane.xlu0 %1751
      %1753 = vadd.xlane.f32.xlu0 %v1635
      %v1754 = vpop.xlane.xlu0 %1753
      %1755 = vadd.xlane.f32.xlu0 %v1636
      %v1756 = vpop.xlane.xlu0 %1755
      %1757 = vadd.xlane.f32.xlu0 %v1637
      %v1758 = vpop.xlane.xlu0 %1757
      %1759 = vadd.xlane.f32.xlu0 %v1638
      %v1760 = vpop.xlane.xlu0 %1759
      %1761 = vadd.xlane.f32.xlu0 %v1639
      %v1762 = vpop.xlane.xlu0 %1761
      %1763 = vadd.xlane.f32.xlu0 %v1640
      %v1764 = vpop.xlane.xlu0 %1763
      %1765 = vadd.xlane.f32.xlu0 %v1641
      %v1766 = vpop.xlane.xlu0 %1765
      %1767 = vadd.xlane.f32.xlu0 %v1642
      %v1768 = vpop.xlane.xlu0 %1767
      %1769 = vadd.xlane.f32.xlu0 %v1643
      %v1770 = vpop.xlane.xlu0 %1769
      %1771 = vadd.xlane.f32.xlu0 %v1644
      %v1772 = vpop.xlane.xlu0 %1771
      %1773 = vadd.xlane.f32.xlu0 %v1645
      %v1774 = vpop.xlane.xlu0 %1773
      %1775 = vadd.xlane.f32.xlu0 %v1646
      %v1776 = vpop.xlane.xlu0 %1775
      %1777 = vadd.xlane.f32.xlu0 %v1647
      %v1778 = vpop.xlane.xlu0 %1777
      %1779 = vadd.xlane.f32.xlu0 %v1648
      %v1780 = vpop.xlane.xlu0 %1779
      %1781 = vadd.xlane.f32.xlu0 %v1649
      %v1782 = vpop.xlane.xlu0 %1781
      %1783 = vadd.xlane.f32.xlu0 %v1650
      %v1784 = vpop.xlane.xlu0 %1783
      %1785 = vadd.xlane.f32.xlu0 %v1651
      %v1786 = vpop.xlane.xlu0 %1785
      %1787 = vadd.xlane.f32.xlu0 %v1652
      %v1788 = vpop.xlane.xlu0 %1787
      %1789 = vadd.xlane.f32.xlu0 %v1653
      %v1790 = vpop.xlane.xlu0 %1789
      %1791 = vadd.xlane.f32.xlu0 %v1654
      %v1792 = vpop.xlane.xlu0 %1791
      %1793 = vadd.xlane.f32.xlu0 %v1655
      %v1794 = vpop.xlane.xlu0 %1793
      %1795 = vadd.xlane.f32.xlu0 %v1656
      %v1796 = vpop.xlane.xlu0 %1795
      %1797 = vadd.xlane.f32.xlu0 %v1657
      %v1798 = vpop.xlane.xlu0 %1797
      %1799 = vadd.xlane.f32.xlu0 %v1658
      %v1800 = vpop.xlane.xlu0 %1799
      %1801 = vadd.xlane.f32.xlu0 %v1659
      %v1802 = vpop.xlane.xlu0 %1801
      %1803 = vadd.xlane.f32.xlu0 %v1660
      %v1804 = vpop.xlane.xlu0 %1803
      %1805 = vadd.xlane.f32.xlu0 %v1661
      %v1806 = vpop.xlane.xlu0 %1805
      %1807 = vadd.xlane.f32.xlu0 %v1662
      %v1808 = vpop.xlane.xlu0 %1807
      %1809 = vadd.xlane.f32.xlu0 %v1663
      %v1810 = vpop.xlane.xlu0 %1809
      %1811 = vadd.xlane.f32.xlu0 %v1664
      %v1812 = vpop.xlane.xlu0 %1811
      %1813 = vadd.xlane.f32.xlu0 %v1665
      %v1814 = vpop.xlane.xlu0 %1813
      %1815 = vadd.xlane.f32.xlu0 %v1666
      %v1816 = vpop.xlane.xlu0 %1815
      %1817 = vadd.xlane.f32.xlu0 %v1667
      %v1818 = vpop.xlane.xlu0 %1817
      %1819 = vadd.xlane.f32.xlu0 %v1668
      %v1820 = vpop.xlane.xlu0 %1819
      %1821 = vadd.xlane.f32.xlu0 %v1669
      %v1822 = vpop.xlane.xlu0 %1821
      %1823 = vadd.xlane.f32.xlu0 %v1670
      %v1824 = vpop.xlane.xlu0 %1823
      %1825 = vadd.xlane.f32.xlu0 %v1671
      %v1826 = vpop.xlane.xlu0 %1825
      %1827 = vadd.xlane.f32.xlu0 %v1672
      %v1828 = vpop.xlane.xlu0 %1827
      %1829 = vadd.xlane.f32.xlu0 %v1673
      %v1830 = vpop.xlane.xlu0 %1829
      %1831 = vadd.xlane.f32.xlu0 %v1674
      %v1832 = vpop.xlane.xlu0 %1831
      %1833 = vadd.xlane.f32.xlu0 %v1675
      %v1834 = vpop.xlane.xlu0 %1833
      %1835 = vadd.xlane.f32.xlu0 %v1676
      %v1836 = vpop.xlane.xlu0 %1835
      %1837 = vadd.xlane.f32.xlu0 %v1677
      %v1838 = vpop.xlane.xlu0 %1837
      %1839 = vadd.xlane.f32.xlu0 %v1678
      %v1840 = vpop.xlane.xlu0 %1839
      %1841 = vadd.xlane.f32.xlu0 %v1679
      %v1842 = vpop.xlane.xlu0 %1841
      %1843 = vadd.xlane.f32.xlu0 %v1680
      %v1844 = vpop.xlane.xlu0 %1843
      %1845 = vadd.xlane.f32.xlu0 %v1681
      %v1846 = vpop.xlane.xlu0 %1845
      %1847 = vadd.xlane.f32.xlu0 %v1682
      %v1848 = vpop.xlane.xlu0 %1847
      %1849 = vadd.xlane.f32.xlu0 %v1683
      %v1850 = vpop.xlane.xlu0 %1849
      %1851 = vadd.xlane.f32.xlu0 %v1684
      %v1852 = vpop.xlane.xlu0 %1851
      %1853 = vadd.xlane.f32.xlu0 %v1685
      %v1854 = vpop.xlane.xlu0 %1853
      %1855 = vadd.xlane.f32.xlu0 %v1686
      %v1856 = vpop.xlane.xlu0 %1855
      %1857 = vadd.xlane.f32.xlu0 %v1687
      %v1858 = vpop.xlane.xlu0 %1857
      %1859 = vadd.xlane.f32.xlu0 %v1688
      %v1860 = vpop.xlane.xlu0 %1859
      %1861 = vadd.xlane.f32.xlu0 %v1689
      %v1862 = vpop.xlane.xlu0 %1861
      %1863 = vadd.xlane.f32.xlu0 %v1690
      %v1864 = vpop.xlane.xlu0 %1863
      %1865 = vadd.xlane.f32.xlu0 %v1691
      %v1866 = vpop.xlane.xlu0 %1865
      %1867 = vadd.xlane.f32.xlu0 %v1692
      %v1868 = vpop.xlane.xlu0 %1867
      %1869 = vadd.xlane.f32.xlu0 %v1693
      %v1870 = vpop.xlane.xlu0 %1869
      %1871 = vadd.xlane.f32.xlu0 %v1694
      %v1872 = vpop.xlane.xlu0 %1871
      %1873 = vadd.xlane.f32.xlu0 %v1695
      %v1874 = vpop.xlane.xlu0 %1873
      %1875 = vadd.xlane.f32.xlu0 %v1696
      %v1876 = vpop.xlane.xlu0 %1875
      %1877 = vadd.xlane.f32.xlu0 %v1697
      %v1878 = vpop.xlane.xlu0 %1877
      %1879 = vadd.xlane.f32.xlu0 %v1698
      %v1880 = vpop.xlane.xlu0 %1879
      %1881 = vadd.xlane.f32.xlu0 %v1699
      %v1882 = vpop.xlane.xlu0 %1881
      %1883 = vadd.xlane.f32.xlu0 %v1700
      %v1884 = vpop.xlane.xlu0 %1883
      %1885 = vadd.xlane.f32.xlu0 %v1701
      %v1886 = vpop.xlane.xlu0 %1885
      %1887 = vadd.xlane.f32.xlu0 %v1702
      %v1888 = vpop.xlane.xlu0 %1887
      %1889 = vadd.xlane.f32.xlu0 %v1703
      %v1890 = vpop.xlane.xlu0 %1889
      %1891 = vadd.xlane.f32.xlu0 %v1704
      %v1892 = vpop.xlane.xlu0 %1891
      %1893 = vadd.xlane.f32.xlu0 %v1705
      %v1894 = vpop.xlane.xlu0 %1893
      %1895 = vadd.xlane.f32.xlu0 %v1706
      %v1896 = vpop.xlane.xlu0 %1895
      %1897 = vadd.xlane.f32.xlu0 %v1707
      %v1898 = vpop.xlane.xlu0 %1897
      %1899 = vadd.xlane.f32.xlu0 %v1708
      %v1900 = vpop.xlane.xlu0 %1899
      %1901 = vadd.xlane.f32.xlu0 %v1709
      %v1902 = vpop.xlane.xlu0 %1901
      %1903 = vadd.xlane.f32.xlu0 %v1710
      %v1904 = vpop.xlane.xlu0 %1903
      %1905 = vadd.xlane.f32.xlu0 %v1711
      %v1906 = vpop.xlane.xlu0 %1905
      %1907 = vadd.xlane.f32.xlu0 %v1712
      %v1908 = vpop.xlane.xlu0 %1907
      %1909 = vadd.xlane.f32.xlu0 %v1713
      %v1910 = vpop.xlane.xlu0 %1909
      %1911 = vadd.xlane.f32.xlu0 %v1714
      %v1912 = vpop.xlane.xlu0 %1911
      %1913 = vadd.xlane.f32.xlu0 %v1715
      %v1914 = vpop.xlane.xlu0 %1913
      %1915 = vadd.xlane.f32.xlu0 %v1716
      %v1916 = vpop.xlane.xlu0 %1915
      %1917 = vadd.xlane.f32.xlu0 %v1717
      %v1918 = vpop.xlane.xlu0 %1917
      %1919 = vadd.xlane.f32.xlu0 %v1718
      %v1920 = vpop.xlane.xlu0 %1919
      %1921 = vadd.xlane.f32.xlu0 %v1719
      %v1922 = vpop.xlane.xlu0 %1921
      %1923 = vadd.xlane.f32.xlu0 %v1720
      %v1924 = vpop.xlane.xlu0 %1923
      %1925 = vadd.xlane.f32.xlu0 %v1721
      %v1926 = vpop.xlane.xlu0 %1925
      %1927 = vadd.xlane.f32.xlu0 %v1722
      %v1928 = vpop.xlane.xlu0 %1927
      %1929 = vadd.xlane.f32.xlu0 %v1723
      %v1930 = vpop.xlane.xlu0 %1929
      %1931 = vadd.xlane.f32.xlu0 %v1724
      %v1932 = vpop.xlane.xlu0 %1931
      %1933 = vadd.xlane.f32.xlu0 %v1725
      %v1934 = vpop.xlane.xlu0 %1933
      %1935 = vadd.xlane.f32.xlu0 %v1726
      %v1936 = vpop.xlane.xlu0 %1935
      %1937 = vadd.xlane.f32.xlu0 %v1727
      %v1938 = vpop.xlane.xlu0 %1937
      %1939 = vadd.xlane.f32.xlu0 %v1728
      %v1940 = vpop.xlane.xlu0 %1939
      %1941 = vadd.xlane.f32.xlu0 %v1729
      %v1942 = vpop.xlane.xlu0 %1941
      %1943 = vadd.xlane.f32.xlu0 %v1730
      %v1944 = vpop.xlane.xlu0 %1943
      %1945 = vadd.xlane.f32.xlu0 %v1731
      %v1946 = vpop.xlane.xlu0 %1945
      %1947 = vadd.xlane.f32.xlu0 %v1732
      %v1948 = vpop.xlane.xlu0 %1947
      %1949 = vadd.xlane.f32.xlu0 %v1733
      %v1950 = vpop.xlane.xlu0 %1949
      %1951 = vadd.xlane.f32.xlu0 %v1734
      %v1952 = vpop.xlane.xlu0 %1951
      %1953 = vadd.xlane.f32.xlu0 %v1735
      %v1954 = vpop.xlane.xlu0 %1953
      %1955 = vadd.xlane.f32.xlu0 %v1736
      %v1956 = vpop.xlane.xlu0 %1955
      %1957 = vadd.xlane.f32.xlu0 %v1737
      %v1958 = vpop.xlane.xlu0 %1957
      %1959 = vadd.xlane.f32.xlu0 %v1738
      %v1960 = vpop.xlane.xlu0 %1959
      %1961 = vadd.xlane.f32.xlu0 %v1739
      %v1962 = vpop.xlane.xlu0 %1961
      %1963 = vadd.xlane.f32.xlu0 %v1740
      %v1964 = vpop.xlane.xlu0 %1963
      %v1965 = vmul.f32 %v1406, 0.0078125
      %v1966 = vmul.f32 %v1408, 0.0078125
      %v1967 = vmul.f32 %v1410, 0.0078125
      %v1968 = vmul.f32 %v1412, 0.0078125
      %v1969 = vmul.f32 %v1414, 0.0078125
      %v1970 = vmul.f32 %v1416, 0.0078125
      %v1971 = vmul.f32 %v1418, 0.0078125
      %v1972 = vmul.f32 %v1420, 0.0078125
      %v1973 = vmul.f32 %v1422, 0.0078125
      %v1974 = vmul.f32 %v1424, 0.0078125
      %v1975 = vmul.f32 %v1426, 0.0078125
      %v1976 = vmul.f32 %v1428, 0.0078125
      %v1977 = vmul.f32 %v1430, 0.0078125
      %v1978 = vmul.f32 %v1432, 0.0078125
      %v1979 = vmul.f32 %v1434, 0.0078125
      %v1980 = vmul.f32 %v1436, 0.0078125
      %v1981 = vmul.f32 %v1438, 0.0078125
      %v1982 = vmul.f32 %v1440, 0.0078125
      %v1983 = vmul.f32 %v1442, 0.0078125
      %v1984 = vmul.f32 %v1444, 0.0078125
      %v1985 = vmul.f32 %v1446, 0.0078125
      %v1986 = vmul.f32 %v1448, 0.0078125
      %v1987 = vmul.f32 %v1450, 0.0078125
      %v1988 = vmul.f32 %v1452, 0.0078125
      %v1989 = vmul.f32 %v1454, 0.0078125
      %v1990 = vmul.f32 %v1456, 0.0078125
      %v1991 = vmul.f32 %v1458, 0.0078125
      %v1992 = vmul.f32 %v1460, 0.0078125
      %v1993 = vmul.f32 %v1462, 0.0078125
      %v1994 = vmul.f32 %v1464, 0.0078125
      %v1995 = vmul.f32 %v1466, 0.0078125
      %v1996 = vmul.f32 %v1468, 0.0078125
      %v1997 = vmul.f32 %v1470, 0.0078125
      %v1998 = vmul.f32 %v1472, 0.0078125
      %v1999 = vmul.f32 %v1474, 0.0078125
      %v2000 = vmul.f32 %v1476, 0.0078125
      %v2001 = vmul.f32 %v1478, 0.0078125
      %v2002 = vmul.f32 %v1480, 0.0078125
      %v2003 = vmul.f32 %v1482, 0.0078125
      %v2004 = vmul.f32 %v1484, 0.0078125
      %v2005 = vmul.f32 %v1486, 0.0078125
      %v2006 = vmul.f32 %v1488, 0.0078125
      %v2007 = vmul.f32 %v1490, 0.0078125
      %v2008 = vmul.f32 %v1492, 0.0078125
      %v2009 = vmul.f32 %v1494, 0.0078125
      %v2010 = vmul.f32 %v1496, 0.0078125
      %v2011 = vmul.f32 %v1498, 0.0078125
      %v2012 = vmul.f32 %v1500, 0.0078125
      %v2013 = vmul.f32 %v1502, 0.0078125
      %v2014 = vmul.f32 %v1504, 0.0078125
      %v2015 = vmul.f32 %v1506, 0.0078125
      %v2016 = vmul.f32 %v1508, 0.0078125
      %v2017 = vmul.f32 %v1510, 0.0078125
      %v2018 = vmul.f32 %v1512, 0.0078125
      %v2019 = vmul.f32 %v1514, 0.0078125
      %v2020 = vmul.f32 %v1516, 0.0078125
      %v2021 = vmul.f32 %v1518, 0.0078125
      %v2022 = vmul.f32 %v1520, 0.0078125
      %v2023 = vmul.f32 %v1522, 0.0078125
      %v2024 = vmul.f32 %v1524, 0.0078125
      %v2025 = vmul.f32 %v1526, 0.0078125
      %v2026 = vmul.f32 %v1528, 0.0078125
      %v2027 = vmul.f32 %v1530, 0.0078125
      %v2028 = vmul.f32 %v1532, 0.0078125
      %v2029 = vmul.f32 %v1534, 0.0078125
      %v2030 = vmul.f32 %v1536, 0.0078125
      %v2031 = vmul.f32 %v1538, 0.0078125
      %v2032 = vmul.f32 %v1540, 0.0078125
      %v2033 = vmul.f32 %v1542, 0.0078125
      %v2034 = vmul.f32 %v1544, 0.0078125
      %v2035 = vmul.f32 %v1546, 0.0078125
      %v2036 = vmul.f32 %v1548, 0.0078125
      %v2037 = vmul.f32 %v1550, 0.0078125
      %v2038 = vmul.f32 %v1552, 0.0078125
      %v2039 = vmul.f32 %v1554, 0.0078125
      %v2040 = vmul.f32 %v1556, 0.0078125
      %v2041 = vmul.f32 %v1558, 0.0078125
      %v2042 = vmul.f32 %v1560, 0.0078125
      %v2043 = vmul.f32 %v1562, 0.0078125
      %v2044 = vmul.f32 %v1564, 0.0078125
      %v2045 = vmul.f32 %v1566, 0.0078125
      %v2046 = vmul.f32 %v1568, 0.0078125
      %v2047 = vmul.f32 %v1570, 0.0078125
      %v2048 = vmul.f32 %v1572, 0.0078125
      %v2049 = vmul.f32 %v1574, 0.0078125
      %v2050 = vmul.f32 %v1576, 0.0078125
      %v2051 = vmul.f32 %v1578, 0.0078125
      %v2052 = vmul.f32 %v1580, 0.0078125
      %v2053 = vmul.f32 %v1582, 0.0078125
      %v2054 = vmul.f32 %v1584, 0.0078125
      %v2055 = vmul.f32 %v1586, 0.0078125
      %v2056 = vmul.f32 %v1588, 0.0078125
      %v2057 = vmul.f32 %v1590, 0.0078125
      %v2058 = vmul.f32 %v1592, 0.0078125
      %v2059 = vmul.f32 %v1594, 0.0078125
      %v2060 = vmul.f32 %v1596, 0.0078125
      %v2061 = vmul.f32 %v1598, 0.0078125
      %v2062 = vmul.f32 %v1600, 0.0078125
      %v2063 = vmul.f32 %v1602, 0.0078125
      %v2064 = vmul.f32 %v1604, 0.0078125
      %v2065 = vmul.f32 %v1606, 0.0078125
      %v2066 = vmul.f32 %v1608, 0.0078125
      %v2067 = vmul.f32 %v1610, 0.0078125
      %v2068 = vmul.f32 %v1612, 0.0078125
      %v2069 = vmul.f32 %v1614, 0.0078125
      %v2070 = vmul.f32 %v1616, 0.0078125
      %v2071 = vmul.f32 %v1618, 0.0078125
      %v2072 = vmul.f32 %v1620, 0.0078125
      %v2073 = vmul.f32 %v1622, 0.0078125
      %v2074 = vmul.f32 %v1624, 0.0078125
      %v2075 = vmul.f32 %v1626, 0.0078125
      %v2076 = vmul.f32 %v1628, 0.0078125
      %v2077 = vmul.f32 %v1742, 0.0078125
      %v2078 = vmul.f32 %v1744, 0.0078125
      %v2079 = vmul.f32 %v1746, 0.0078125
      %v2080 = vmul.f32 %v1748, 0.0078125
      %v2081 = vmul.f32 %v1750, 0.0078125
      %v2082 = vmul.f32 %v1752, 0.0078125
      %v2083 = vmul.f32 %v1754, 0.0078125
      %v2084 = vmul.f32 %v1756, 0.0078125
      %v2085 = vmul.f32 %v1758, 0.0078125
      %v2086 = vmul.f32 %v1760, 0.0078125
      %v2087 = vmul.f32 %v1762, 0.0078125
      %v2088 = vmul.f32 %v1764, 0.0078125
      %v2089 = vmul.f32 %v1766, 0.0078125
      %v2090 = vmul.f32 %v1768, 0.0078125
      %v2091 = vmul.f32 %v1770, 0.0078125
      %v2092 = vmul.f32 %v1772, 0.0078125
      %v2093 = vmul.f32 %v1774, 0.0078125
      %v2094 = vmul.f32 %v1776, 0.0078125
      %v2095 = vmul.f32 %v1778, 0.0078125
      %v2096 = vmul.f32 %v1780, 0.0078125
      %v2097 = vmul.f32 %v1782, 0.0078125
      %v2098 = vmul.f32 %v1784, 0.0078125
      %v2099 = vmul.f32 %v1786, 0.0078125
      %v2100 = vmul.f32 %v1788, 0.0078125
      %v2101 = vmul.f32 %v1790, 0.0078125
      %v2102 = vmul.f32 %v1792, 0.0078125
      %v2103 = vmul.f32 %v1794, 0.0078125
      %v2104 = vmul.f32 %v1796, 0.0078125
      %v2105 = vmul.f32 %v1798, 0.0078125
      %v2106 = vmul.f32 %v1800, 0.0078125
      %v2107 = vmul.f32 %v1802, 0.0078125
      %v2108 = vmul.f32 %v1804, 0.0078125
      %v2109 = vmul.f32 %v1806, 0.0078125
      %v2110 = vmul.f32 %v1808, 0.0078125
      %v2111 = vmul.f32 %v1810, 0.0078125
      %v2112 = vmul.f32 %v1812, 0.0078125
      %v2113 = vmul.f32 %v1814, 0.0078125
      %v2114 = vmul.f32 %v1816, 0.0078125
      %v2115 = vmul.f32 %v1818, 0.0078125
      %v2116 = vmul.f32 %v1820, 0.0078125
      %v2117 = vmul.f32 %v1822, 0.0078125
      %v2118 = vmul.f32 %v1824, 0.0078125
      %v2119 = vmul.f32 %v1826, 0.0078125
      %v2120 = vmul.f32 %v1828, 0.0078125
      %v2121 = vmul.f32 %v1830, 0.0078125
      %v2122 = vmul.f32 %v1832, 0.0078125
      %v2123 = vmul.f32 %v1834, 0.0078125
      %v2124 = vmul.f32 %v1836, 0.0078125
      %v2125 = vmul.f32 %v1838, 0.0078125
      %v2126 = vmul.f32 %v1840, 0.0078125
      %v2127 = vmul.f32 %v1842, 0.0078125
      %v2128 = vmul.f32 %v1844, 0.0078125
      %v2129 = vmul.f32 %v1846, 0.0078125
      %v2130 = vmul.f32 %v1848, 0.0078125
      %v2131 = vmul.f32 %v1850, 0.0078125
      %v2132 = vmul.f32 %v1852, 0.0078125
      %v2133 = vmul.f32 %v1854, 0.0078125
      %v2134 = vmul.f32 %v1856, 0.0078125
      %v2135 = vmul.f32 %v1858, 0.0078125
      %v2136 = vmul.f32 %v1860, 0.0078125
      %v2137 = vmul.f32 %v1862, 0.0078125
      %v2138 = vmul.f32 %v1864, 0.0078125
      %v2139 = vmul.f32 %v1866, 0.0078125
      %v2140 = vmul.f32 %v1868, 0.0078125
      %v2141 = vmul.f32 %v1870, 0.0078125
      %v2142 = vmul.f32 %v1872, 0.0078125
      %v2143 = vmul.f32 %v1874, 0.0078125
      %v2144 = vmul.f32 %v1876, 0.0078125
      %v2145 = vmul.f32 %v1878, 0.0078125
      %v2146 = vmul.f32 %v1880, 0.0078125
      %v2147 = vmul.f32 %v1882, 0.0078125
      %v2148 = vmul.f32 %v1884, 0.0078125
      %v2149 = vmul.f32 %v1886, 0.0078125
      %v2150 = vmul.f32 %v1888, 0.0078125
      %v2151 = vmul.f32 %v1890, 0.0078125
      %v2152 = vmul.f32 %v1892, 0.0078125
      %v2153 = vmul.f32 %v1894, 0.0078125
      %v2154 = vmul.f32 %v1896, 0.0078125
      %v2155 = vmul.f32 %v1898, 0.0078125
      %v2156 = vmul.f32 %v1900, 0.0078125
      %v2157 = vmul.f32 %v1902, 0.0078125
      %v2158 = vmul.f32 %v1904, 0.0078125
      %v2159 = vmul.f32 %v1906, 0.0078125
      %v2160 = vmul.f32 %v1908, 0.0078125
      %v2161 = vmul.f32 %v1910, 0.0078125
      %v2162 = vmul.f32 %v1912, 0.0078125
      %v2163 = vmul.f32 %v1914, 0.0078125
      %v2164 = vmul.f32 %v1916, 0.0078125
      %v2165 = vmul.f32 %v1918, 0.0078125
      %v2166 = vmul.f32 %v1920, 0.0078125
      %v2167 = vmul.f32 %v1922, 0.0078125
      %v2168 = vmul.f32 %v1924, 0.0078125
      %v2169 = vmul.f32 %v1926, 0.0078125
      %v2170 = vmul.f32 %v1928, 0.0078125
      %v2171 = vmul.f32 %v1930, 0.0078125
      %v2172 = vmul.f32 %v1932, 0.0078125
      %v2173 = vmul.f32 %v1934, 0.0078125
      %v2174 = vmul.f32 %v1936, 0.0078125
      %v2175 = vmul.f32 %v1938, 0.0078125
      %v2176 = vmul.f32 %v1940, 0.0078125
      %v2177 = vmul.f32 %v1942, 0.0078125
      %v2178 = vmul.f32 %v1944, 0.0078125
      %v2179 = vmul.f32 %v1946, 0.0078125
      %v2180 = vmul.f32 %v1948, 0.0078125
      %v2181 = vmul.f32 %v1950, 0.0078125
      %v2182 = vmul.f32 %v1952, 0.0078125
      %v2183 = vmul.f32 %v1954, 0.0078125
      %v2184 = vmul.f32 %v1956, 0.0078125
      %v2185 = vmul.f32 %v1958, 0.0078125
      %v2186 = vmul.f32 %v1960, 0.0078125
      %v2187 = vmul.f32 %v1962, 0.0078125
      %v2188 = vmul.f32 %v1964, 0.0078125
      %v2189 = vmul.f32 %v1965, %v1965
      %v2190 = vmul.f32 %v1966, %v1966
      %v2191 = vmul.f32 %v1967, %v1967
      %v2192 = vmul.f32 %v1968, %v1968
      %v2193 = vmul.f32 %v1969, %v1969
      %v2194 = vmul.f32 %v1970, %v1970
      %v2195 = vmul.f32 %v1971, %v1971
      %v2196 = vmul.f32 %v1972, %v1972
      %v2197 = vmul.f32 %v1973, %v1973
      %v2198 = vmul.f32 %v1974, %v1974
      %v2199 = vmul.f32 %v1975, %v1975
      %v2200 = vmul.f32 %v1976, %v1976
      %v2201 = vmul.f32 %v1977, %v1977
      %v2202 = vmul.f32 %v1978, %v1978
      %v2203 = vmul.f32 %v1979, %v1979
      %v2204 = vmul.f32 %v1980, %v1980
      %v2205 = vmul.f32 %v1981, %v1981
      %v2206 = vmul.f32 %v1982, %v1982
      %v2207 = vmul.f32 %v1983, %v1983
      %v2208 = vmul.f32 %v1984, %v1984
      %v2209 = vmul.f32 %v1985, %v1985
      %v2210 = vmul.f32 %v1986, %v1986
      %v2211 = vmul.f32 %v1987, %v1987
      %v2212 = vmul.f32 %v1988, %v1988
      %v2213 = vmul.f32 %v1989, %v1989
      %v2214 = vmul.f32 %v1990, %v1990
      %v2215 = vmul.f32 %v1991, %v1991
      %v2216 = vmul.f32 %v1992, %v1992
      %v2217 = vmul.f32 %v1993, %v1993
      %v2218 = vmul.f32 %v1994, %v1994
      %v2219 = vmul.f32 %v1995, %v1995
      %v2220 = vmul.f32 %v1996, %v1996
      %v2221 = vmul.f32 %v1997, %v1997
      %v2222 = vmul.f32 %v1998, %v1998
      %v2223 = vmul.f32 %v1999, %v1999
      %v2224 = vmul.f32 %v2000, %v2000
      %v2225 = vmul.f32 %v2001, %v2001
      %v2226 = vmul.f32 %v2002, %v2002
      %v2227 = vmul.f32 %v2003, %v2003
      %v2228 = vmul.f32 %v2004, %v2004
      %v2229 = vmul.f32 %v2005, %v2005
      %v2230 = vmul.f32 %v2006, %v2006
      %v2231 = vmul.f32 %v2007, %v2007
      %v2232 = vmul.f32 %v2008, %v2008
      %v2233 = vmul.f32 %v2009, %v2009
      %v2234 = vmul.f32 %v2010, %v2010
      %v2235 = vmul.f32 %v2011, %v2011
      %v2236 = vmul.f32 %v2012, %v2012
      %v2237 = vmul.f32 %v2013, %v2013
      %v2238 = vmul.f32 %v2014, %v2014
      %v2239 = vmul.f32 %v2015, %v2015
      %v2240 = vmul.f32 %v2016, %v2016
      %v2241 = vmul.f32 %v2017, %v2017
      %v2242 = vmul.f32 %v2018, %v2018
      %v2243 = vmul.f32 %v2019, %v2019
      %v2244 = vmul.f32 %v2020, %v2020
      %v2245 = vmul.f32 %v2021, %v2021
      %v2246 = vmul.f32 %v2022, %v2022
      %v2247 = vmul.f32 %v2023, %v2023
      %v2248 = vmul.f32 %v2024, %v2024
      %v2249 = vmul.f32 %v2025, %v2025
      %v2250 = vmul.f32 %v2026, %v2026
      %v2251 = vmul.f32 %v2027, %v2027
      %v2252 = vmul.f32 %v2028, %v2028
      %v2253 = vmul.f32 %v2029, %v2029
      %v2254 = vmul.f32 %v2030, %v2030
      %v2255 = vmul.f32 %v2031, %v2031
      %v2256 = vmul.f32 %v2032, %v2032
      %v2257 = vmul.f32 %v2033, %v2033
      %v2258 = vmul.f32 %v2034, %v2034
      %v2259 = vmul.f32 %v2035, %v2035
      %v2260 = vmul.f32 %v2036, %v2036
      %v2261 = vmul.f32 %v2037, %v2037
      %v2262 = vmul.f32 %v2038, %v2038
      %v2263 = vmul.f32 %v2039, %v2039
      %v2264 = vmul.f32 %v2040, %v2040
      %v2265 = vmul.f32 %v2041, %v2041
      %v2266 = vmul.f32 %v2042, %v2042
      %v2267 = vmul.f32 %v2043, %v2043
      %v2268 = vmul.f32 %v2044, %v2044
      %v2269 = vmul.f32 %v2045, %v2045
      %v2270 = vmul.f32 %v2046, %v2046
      %v2271 = vmul.f32 %v2047, %v2047
      %v2272 = vmul.f32 %v2048, %v2048
      %v2273 = vmul.f32 %v2049, %v2049
      %v2274 = vmul.f32 %v2050, %v2050
      %v2275 = vmul.f32 %v2051, %v2051
      %v2276 = vmul.f32 %v2052, %v2052
      %v2277 = vmul.f32 %v2053, %v2053
      %v2278 = vmul.f32 %v2054, %v2054
      %v2279 = vmul.f32 %v2055, %v2055
      %v2280 = vmul.f32 %v2056, %v2056
      %v2281 = vmul.f32 %v2057, %v2057
      %v2282 = vmul.f32 %v2058, %v2058
      %v2283 = vmul.f32 %v2059, %v2059
      %v2284 = vmul.f32 %v2060, %v2060
      %v2285 = vmul.f32 %v2061, %v2061
      %v2286 = vmul.f32 %v2062, %v2062
      %v2287 = vmul.f32 %v2063, %v2063
      %v2288 = vmul.f32 %v2064, %v2064
      %v2289 = vmul.f32 %v2065, %v2065
      %v2290 = vmul.f32 %v2066, %v2066
      %v2291 = vmul.f32 %v2067, %v2067
      %v2292 = vmul.f32 %v2068, %v2068
      %v2293 = vmul.f32 %v2069, %v2069
      %v2294 = vmul.f32 %v2070, %v2070
      %v2295 = vmul.f32 %v2071, %v2071
      %v2296 = vmul.f32 %v2072, %v2072
      %v2297 = vmul.f32 %v2073, %v2073
      %v2298 = vmul.f32 %v2074, %v2074
      %v2299 = vmul.f32 %v2075, %v2075
      %v2300 = vmul.f32 %v2076, %v2076
      %v2301 = vsub.f32 %v2077, %v2189
      %v2302 = vsub.f32 %v2078, %v2190
      %v2303 = vsub.f32 %v2079, %v2191
      %v2304 = vsub.f32 %v2080, %v2192
      %v2305 = vsub.f32 %v2081, %v2193
      %v2306 = vsub.f32 %v2082, %v2194
      %v2307 = vsub.f32 %v2083, %v2195
      %v2308 = vsub.f32 %v2084, %v2196
      %v2309 = vsub.f32 %v2085, %v2197
      %v2310 = vsub.f32 %v2086, %v2198
      %v2311 = vsub.f32 %v2087, %v2199
      %v2312 = vsub.f32 %v2088, %v2200
      %v2313 = vsub.f32 %v2089, %v2201
      %v2314 = vsub.f32 %v2090, %v2202
      %v2315 = vsub.f32 %v2091, %v2203
      %v2316 = vsub.f32 %v2092, %v2204
      %v2317 = vsub.f32 %v2093, %v2205
      %v2318 = vsub.f32 %v2094, %v2206
      %v2319 = vsub.f32 %v2095, %v2207
      %v2320 = vsub.f32 %v2096, %v2208
      %v2321 = vsub.f32 %v2097, %v2209
      %v2322 = vsub.f32 %v2098, %v2210
      %v2323 = vsub.f32 %v2099, %v2211
      %v2324 = vsub.f32 %v2100, %v2212
      %v2325 = vsub.f32 %v2101, %v2213
      %v2326 = vsub.f32 %v2102, %v2214
      %v2327 = vsub.f32 %v2103, %v2215
      %v2328 = vsub.f32 %v2104, %v2216
      %v2329 = vsub.f32 %v2105, %v2217
      %v2330 = vsub.f32 %v2106, %v2218
      %v2331 = vsub.f32 %v2107, %v2219
      %v2332 = vsub.f32 %v2108, %v2220
      %v2333 = vsub.f32 %v2109, %v2221
      %v2334 = vsub.f32 %v2110, %v2222
      %v2335 = vsub.f32 %v2111, %v2223
      %v2336 = vsub.f32 %v2112, %v2224
      %v2337 = vsub.f32 %v2113, %v2225
      %v2338 = vsub.f32 %v2114, %v2226
      %v2339 = vsub.f32 %v2115, %v2227
      %v2340 = vsub.f32 %v2116, %v2228
      %v2341 = vsub.f32 %v2117, %v2229
      %v2342 = vsub.f32 %v2118, %v2230
      %v2343 = vsub.f32 %v2119, %v2231
      %v2344 = vsub.f32 %v2120, %v2232
      %v2345 = vsub.f32 %v2121, %v2233
      %v2346 = vsub.f32 %v2122, %v2234
      %v2347 = vsub.f32 %v2123, %v2235
      %v2348 = vsub.f32 %v2124, %v2236
      %v2349 = vsub.f32 %v2125, %v2237
      %v2350 = vsub.f32 %v2126, %v2238
      %v2351 = vsub.f32 %v2127, %v2239
      %v2352 = vsub.f32 %v2128, %v2240
      %v2353 = vsub.f32 %v2129, %v2241
      %v2354 = vsub.f32 %v2130, %v2242
      %v2355 = vsub.f32 %v2131, %v2243
      %v2356 = vsub.f32 %v2132, %v2244
      %v2357 = vsub.f32 %v2133, %v2245
      %v2358 = vsub.f32 %v2134, %v2246
      %v2359 = vsub.f32 %v2135, %v2247
      %v2360 = vsub.f32 %v2136, %v2248
      %v2361 = vsub.f32 %v2137, %v2249
      %v2362 = vsub.f32 %v2138, %v2250
      %v2363 = vsub.f32 %v2139, %v2251
      %v2364 = vsub.f32 %v2140, %v2252
      %v2365 = vsub.f32 %v2141, %v2253
      %v2366 = vsub.f32 %v2142, %v2254
      %v2367 = vsub.f32 %v2143, %v2255
      %v2368 = vsub.f32 %v2144, %v2256
      %v2369 = vsub.f32 %v2145, %v2257
      %v2370 = vsub.f32 %v2146, %v2258
      %v2371 = vsub.f32 %v2147, %v2259
      %v2372 = vsub.f32 %v2148, %v2260
      %v2373 = vsub.f32 %v2149, %v2261
      %v2374 = vsub.f32 %v2150, %v2262
      %v2375 = vsub.f32 %v2151, %v2263
      %v2376 = vsub.f32 %v2152, %v2264
      %v2377 = vsub.f32 %v2153, %v2265
      %v2378 = vsub.f32 %v2154, %v2266
      %v2379 = vsub.f32 %v2155, %v2267
      %v2380 = vsub.f32 %v2156, %v2268
      %v2381 = vsub.f32 %v2157, %v2269
      %v2382 = vsub.f32 %v2158, %v2270
      %v2383 = vsub.f32 %v2159, %v2271
      %v2384 = vsub.f32 %v2160, %v2272
      %v2385 = vsub.f32 %v2161, %v2273
      %v2386 = vsub.f32 %v2162, %v2274
      %v2387 = vsub.f32 %v2163, %v2275
      %v2388 = vsub.f32 %v2164, %v2276
      %v2389 = vsub.f32 %v2165, %v2277
      %v2390 = vsub.f32 %v2166, %v2278
      %v2391 = vsub.f32 %v2167, %v2279
      %v2392 = vsub.f32 %v2168, %v2280
      %v2393 = vsub.f32 %v2169, %v2281
      %v2394 = vsub.f32 %v2170, %v2282
      %v2395 = vsub.f32 %v2171, %v2283
      %v2396 = vsub.f32 %v2172, %v2284
      %v2397 = vsub.f32 %v2173, %v2285
      %v2398 = vsub.f32 %v2174, %v2286
      %v2399 = vsub.f32 %v2175, %v2287
      %v2400 = vsub.f32 %v2176, %v2288
      %v2401 = vsub.f32 %v2177, %v2289
      %v2402 = vsub.f32 %v2178, %v2290
      %v2403 = vsub.f32 %v2179, %v2291
      %v2404 = vsub.f32 %v2180, %v2292
      %v2405 = vsub.f32 %v2181, %v2293
      %v2406 = vsub.f32 %v2182, %v2294
      %v2407 = vsub.f32 %v2183, %v2295
      %v2408 = vsub.f32 %v2184, %v2296
      %v2409 = vsub.f32 %v2185, %v2297
      %v2410 = vsub.f32 %v2186, %v2298
      %v2411 = vsub.f32 %v2187, %v2299
      %v2412 = vsub.f32 %v2188, %v2300
      %v2413 = vsub.f32 %v959, %v1965
      %v2414 = vsub.f32 %v962, %v1966
      %v2415 = vsub.f32 %v967, %v1967
      %v2416 = vsub.f32 %v970, %v1968
      %v2417 = vsub.f32 %v975, %v1969
      %v2418 = vsub.f32 %v978, %v1970
      %v2419 = vsub.f32 %v983, %v1971
      %v2420 = vsub.f32 %v986, %v1972
      %v2421 = vsub.f32 %v991, %v1973
      %v2422 = vsub.f32 %v994, %v1974
      %v2423 = vsub.f32 %v999, %v1975
      %v2424 = vsub.f32 %v1002, %v1976
      %v2425 = vsub.f32 %v1007, %v1977
      %v2426 = vsub.f32 %v1010, %v1978
      %v2427 = vsub.f32 %v1015, %v1979
      %v2428 = vsub.f32 %v1018, %v1980
      %v2429 = vsub.f32 %v1023, %v1981
      %v2430 = vsub.f32 %v1026, %v1982
      %v2431 = vsub.f32 %v1031, %v1983
      %v2432 = vsub.f32 %v1034, %v1984
      %v2433 = vsub.f32 %v1039, %v1985
      %v2434 = vsub.f32 %v1042, %v1986
      %v2435 = vsub.f32 %v1047, %v1987
      %v2436 = vsub.f32 %v1050, %v1988
      %v2437 = vsub.f32 %v1055, %v1989
      %v2438 = vsub.f32 %v1058, %v1990
      %v2439 = vsub.f32 %v1063, %v1991
      %v2440 = vsub.f32 %v1066, %v1992
      %v2441 = vsub.f32 %v1071, %v1993
      %v2442 = vsub.f32 %v1074, %v1994
      %v2443 = vsub.f32 %v1079, %v1995
      %v2444 = vsub.f32 %v1082, %v1996
      %v2445 = vsub.f32 %v1087, %v1997
      %v2446 = vsub.f32 %v1090, %v1998
      %v2447 = vsub.f32 %v1095, %v1999
      %v2448 = vsub.f32 %v1098, %v2000
      %v2449 = vsub.f32 %v1103, %v2001
      %v2450 = vsub.f32 %v1106, %v2002
      %v2451 = vsub.f32 %v1111, %v2003
      %v2452 = vsub.f32 %v1114, %v2004
      %v2453 = vsub.f32 %v1119, %v2005
      %v2454 = vsub.f32 %v1122, %v2006
      %v2455 = vsub.f32 %v1127, %v2007
      %v2456 = vsub.f32 %v1130, %v2008
      %v2457 = vsub.f32 %v1135, %v2009
      %v2458 = vsub.f32 %v1138, %v2010
      %v2459 = vsub.f32 %v1143, %v2011
      %v2460 = vsub.f32 %v1146, %v2012
      %v2461 = vsub.f32 %v1151, %v2013
      %v2462 = vsub.f32 %v1154, %v2014
      %v2463 = vsub.f32 %v1159, %v2015
      %v2464 = vsub.f32 %v1162, %v2016
      %v2465 = vsub.f32 %v1167, %v2017
      %v2466 = vsub.f32 %v1170, %v2018
      %v2467 = vsub.f32 %v1175, %v2019
      %v2468 = vsub.f32 %v1178, %v2020
      %v2469 = vsub.f32 %v1183, %v2021
      %v2470 = vsub.f32 %v1186, %v2022
      %v2471 = vsub.f32 %v1191, %v2023
      %v2472 = vsub.f32 %v1194, %v2024
      %v2473 = vsub.f32 %v1199, %v2025
      %v2474 = vsub.f32 %v1202, %v2026
      %v2475 = vsub.f32 %v1207, %v2027
      %v2476 = vsub.f32 %v1210, %v2028
      %v2477 = vsub.f32 %v1215, %v2029
      %v2478 = vsub.f32 %v1218, %v2030
      %v2479 = vsub.f32 %v1223, %v2031
      %v2480 = vsub.f32 %v1226, %v2032
      %v2481 = vsub.f32 %v1231, %v2033
      %v2482 = vsub.f32 %v1234, %v2034
      %v2483 = vsub.f32 %v1239, %v2035
      %v2484 = vsub.f32 %v1242, %v2036
      %v2485 = vsub.f32 %v1247, %v2037
      %v2486 = vsub.f32 %v1250, %v2038
      %v2487 = vsub.f32 %v1255, %v2039
      %v2488 = vsub.f32 %v1258, %v2040
      %v2489 = vsub.f32 %v1263, %v2041
      %v2490 = vsub.f32 %v1266, %v2042
      %v2491 = vsub.f32 %v1271, %v2043
      %v2492 = vsub.f32 %v1274, %v2044
      %v2493 = vsub.f32 %v1279, %v2045
      %v2494 = vsub.f32 %v1282, %v2046
      %v2495 = vsub.f32 %v1287, %v2047
      %v2496 = vsub.f32 %v1290, %v2048
      %v2497 = vsub.f32 %v1295, %v2049
      %v2498 = vsub.f32 %v1298, %v2050
      %v2499 = vsub.f32 %v1303, %v2051
      %v2500 = vsub.f32 %v1306, %v2052
      %v2501 = vsub.f32 %v1311, %v2053
      %v2502 = vsub.f32 %v1314, %v2054
      %v2503 = vsub.f32 %v1319, %v2055
      %v2504 = vsub.f32 %v1322, %v2056
      %v2505 = vsub.f32 %v1327, %v2057
      %v2506 = vsub.f32 %v1330, %v2058
      %v2507 = vsub.f32 %v1335, %v2059
      %v2508 = vsub.f32 %v1338, %v2060
      %v2509 = vsub.f32 %v1343, %v2061
      %v2510 = vsub.f32 %v1346, %v2062
      %v2511 = vsub.f32 %v1351, %v2063
      %v2512 = vsub.f32 %v1354, %v2064
      %v2513 = vsub.f32 %v1359, %v2065
      %v2514 = vsub.f32 %v1362, %v2066
      %v2515 = vsub.f32 %v1367, %v2067
      %v2516 = vsub.f32 %v1370, %v2068
      %v2517 = vsub.f32 %v1375, %v2069
      %v2518 = vsub.f32 %v1378, %v2070
      %v2519 = vsub.f32 %v1383, %v2071
      %v2520 = vsub.f32 %v1386, %v2072
      %v2521 = vsub.f32 %v1391, %v2073
      %v2522 = vsub.f32 %v1394, %v2074
      %v2523 = vsub.f32 %v1399, %v2075
      %v2524 = vsub.f32 %v1402, %v2076
      %v2525 = vadd.f32 %v2301, 1e-05
      %v2526 = vadd.f32 %v2302, 1e-05
      %v2527 = vadd.f32 %v2303, 1e-05
      %v2528 = vadd.f32 %v2304, 1e-05
      %v2529 = vadd.f32 %v2305, 1e-05
      %v2530 = vadd.f32 %v2306, 1e-05
      %v2531 = vadd.f32 %v2307, 1e-05
      %v2532 = vadd.f32 %v2308, 1e-05
      %v2533 = vadd.f32 %v2309, 1e-05
      %v2534 = vadd.f32 %v2310, 1e-05
      %v2535 = vadd.f32 %v2311, 1e-05
      %v2536 = vadd.f32 %v2312, 1e-05
      %v2537 = vadd.f32 %v2313, 1e-05
      %v2538 = vadd.f32 %v2314, 1e-05
      %v2539 = vadd.f32 %v2315, 1e-05
      %v2540 = vadd.f32 %v2316, 1e-05
      %v2541 = vadd.f32 %v2317, 1e-05
      %v2542 = vadd.f32 %v2318, 1e-05
      %v2543 = vadd.f32 %v2319, 1e-05
      %v2544 = vadd.f32 %v2320, 1e-05
      %v2545 = vadd.f32 %v2321, 1e-05
      %v2546 = vadd.f32 %v2322, 1e-05
      %v2547 = vadd.f32 %v2323, 1e-05
      %v2548 = vadd.f32 %v2324, 1e-05
      %v2549 = vadd.f32 %v2325, 1e-05
      %v2550 = vadd.f32 %v2326, 1e-05
      %v2551 = vadd.f32 %v2327, 1e-05
      %v2552 = vadd.f32 %v2328, 1e-05
      %v2553 = vadd.f32 %v2329, 1e-05
      %v2554 = vadd.f32 %v2330, 1e-05
      %v2555 = vadd.f32 %v2331, 1e-05
      %v2556 = vadd.f32 %v2332, 1e-05
      %v2557 = vadd.f32 %v2333, 1e-05
      %v2558 = vadd.f32 %v2334, 1e-05
      %v2559 = vadd.f32 %v2335, 1e-05
      %v2560 = vadd.f32 %v2336, 1e-05
      %v2561 = vadd.f32 %v2337, 1e-05
      %v2562 = vadd.f32 %v2338, 1e-05
      %v2563 = vadd.f32 %v2339, 1e-05
      %v2564 = vadd.f32 %v2340, 1e-05
      %v2565 = vadd.f32 %v2341, 1e-05
      %v2566 = vadd.f32 %v2342, 1e-05
      %v2567 = vadd.f32 %v2343, 1e-05
      %v2568 = vadd.f32 %v2344, 1e-05
      %v2569 = vadd.f32 %v2345, 1e-05
      %v2570 = vadd.f32 %v2346, 1e-05
      %v2571 = vadd.f32 %v2347, 1e-05
      %v2572 = vadd.f32 %v2348, 1e-05
      %v2573 = vadd.f32 %v2349, 1e-05
      %v2574 = vadd.f32 %v2350, 1e-05
      %v2575 = vadd.f32 %v2351, 1e-05
      %v2576 = vadd.f32 %v2352, 1e-05
      %v2577 = vadd.f32 %v2353, 1e-05
      %v2578 = vadd.f32 %v2354, 1e-05
      %v2579 = vadd.f32 %v2355, 1e-05
      %v2580 = vadd.f32 %v2356, 1e-05
      %v2581 = vadd.f32 %v2357, 1e-05
      %v2582 = vadd.f32 %v2358, 1e-05
      %v2583 = vadd.f32 %v2359, 1e-05
      %v2584 = vadd.f32 %v2360, 1e-05
      %v2585 = vadd.f32 %v2361, 1e-05
      %v2586 = vadd.f32 %v2362, 1e-05
      %v2587 = vadd.f32 %v2363, 1e-05
      %v2588 = vadd.f32 %v2364, 1e-05
      %v2589 = vadd.f32 %v2365, 1e-05
      %v2590 = vadd.f32 %v2366, 1e-05
      %v2591 = vadd.f32 %v2367, 1e-05
      %v2592 = vadd.f32 %v2368, 1e-05
      %v2593 = vadd.f32 %v2369, 1e-05
      %v2594 = vadd.f32 %v2370, 1e-05
      %v2595 = vadd.f32 %v2371, 1e-05
      %v2596 = vadd.f32 %v2372, 1e-05
      %v2597 = vadd.f32 %v2373, 1e-05
      %v2598 = vadd.f32 %v2374, 1e-05
      %v2599 = vadd.f32 %v2375, 1e-05
      %v2600 = vadd.f32 %v2376, 1e-05
      %v2601 = vadd.f32 %v2377, 1e-05
      %v2602 = vadd.f32 %v2378, 1e-05
      %v2603 = vadd.f32 %v2379, 1e-05
      %v2604 = vadd.f32 %v2380, 1e-05
      %v2605 = vadd.f32 %v2381, 1e-05
      %v2606 = vadd.f32 %v2382, 1e-05
      %v2607 = vadd.f32 %v2383, 1e-05
      %v2608 = vadd.f32 %v2384, 1e-05
      %v2609 = vadd.f32 %v2385, 1e-05
      %v2610 = vadd.f32 %v2386, 1e-05
      %v2611 = vadd.f32 %v2387, 1e-05
      %v2612 = vadd.f32 %v2388, 1e-05
      %v2613 = vadd.f32 %v2389, 1e-05
      %v2614 = vadd.f32 %v2390, 1e-05
      %v2615 = vadd.f32 %v2391, 1e-05
      %v2616 = vadd.f32 %v2392, 1e-05
      %v2617 = vadd.f32 %v2393, 1e-05
      %v2618 = vadd.f32 %v2394, 1e-05
      %v2619 = vadd.f32 %v2395, 1e-05
      %v2620 = vadd.f32 %v2396, 1e-05
      %v2621 = vadd.f32 %v2397, 1e-05
      %v2622 = vadd.f32 %v2398, 1e-05
      %v2623 = vadd.f32 %v2399, 1e-05
      %v2624 = vadd.f32 %v2400, 1e-05
      %v2625 = vadd.f32 %v2401, 1e-05
      %v2626 = vadd.f32 %v2402, 1e-05
      %v2627 = vadd.f32 %v2403, 1e-05
      %v2628 = vadd.f32 %v2404, 1e-05
      %v2629 = vadd.f32 %v2405, 1e-05
      %v2630 = vadd.f32 %v2406, 1e-05
      %v2631 = vadd.f32 %v2407, 1e-05
      %v2632 = vadd.f32 %v2408, 1e-05
      %v2633 = vadd.f32 %v2409, 1e-05
      %v2634 = vadd.f32 %v2410, 1e-05
      %v2635 = vadd.f32 %v2411, 1e-05
      %v2636 = vadd.f32 %v2412, 1e-05
      %v2637 = vrsqrt.pop %v2525
      %v2638 = vrsqrt.pop %v2526
      %v2639 = vrsqrt.pop %v2527
      %v2640 = vrsqrt.pop %v2528
      %v2641 = vrsqrt.pop %v2529
      %v2642 = vrsqrt.pop %v2530
      %v2643 = vrsqrt.pop %v2531
      %v2644 = vrsqrt.pop %v2532
      %v2645 = vrsqrt.pop %v2533
      %v2646 = vrsqrt.pop %v2534
      %v2647 = vrsqrt.pop %v2535
      %v2648 = vrsqrt.pop %v2536
      %v2649 = vrsqrt.pop %v2537
      %v2650 = vrsqrt.pop %v2538
      %v2651 = vrsqrt.pop %v2539
      %v2652 = vrsqrt.pop %v2540
      %v2653 = vrsqrt.pop %v2541
      %v2654 = vrsqrt.pop %v2542
      %v2655 = vrsqrt.pop %v2543
      %v2656 = vrsqrt.pop %v2544
      %v2657 = vrsqrt.pop %v2545
      %v2658 = vrsqrt.pop %v2546
      %v2659 = vrsqrt.pop %v2547
      %v2660 = vrsqrt.pop %v2548
      %v2661 = vrsqrt.pop %v2549
      %v2662 = vrsqrt.pop %v2550
      %v2663 = vrsqrt.pop %v2551
      %v2664 = vrsqrt.pop %v2552
      %v2665 = vrsqrt.pop %v2553
      %v2666 = vrsqrt.pop %v2554
      %v2667 = vrsqrt.pop %v2555
      %v2668 = vrsqrt.pop %v2556
      %v2669 = vrsqrt.pop %v2557
      %v2670 = vrsqrt.pop %v2558
      %v2671 = vrsqrt.pop %v2559
      %v2672 = vrsqrt.pop %v2560
      %v2673 = vrsqrt.pop %v2561
      %v2674 = vrsqrt.pop %v2562
      %v2675 = vrsqrt.pop %v2563
      %v2676 = vrsqrt.pop %v2564
      %v2677 = vrsqrt.pop %v2565
      %v2678 = vrsqrt.pop %v2566
      %v2679 = vrsqrt.pop %v2567
      %v2680 = vrsqrt.pop %v2568
      %v2681 = vrsqrt.pop %v2569
      %v2682 = vrsqrt.pop %v2570
      %v2683 = vrsqrt.pop %v2571
      %v2684 = vrsqrt.pop %v2572
      %v2685 = vrsqrt.pop %v2573
      %v2686 = vrsqrt.pop %v2574
      %v2687 = vrsqrt.pop %v2575
      %v2688 = vrsqrt.pop %v2576
      %v2689 = vrsqrt.pop %v2577
      %v2690 = vrsqrt.pop %v2578
      %v2691 = vrsqrt.pop %v2579
      %v2692 = vrsqrt.pop %v2580
      %v2693 = vrsqrt.pop %v2581
      %v2694 = vrsqrt.pop %v2582
      %v2695 = vrsqrt.pop %v2583
      %v2696 = vrsqrt.pop %v2584
      %v2697 = vrsqrt.pop %v2585
      %v2698 = vrsqrt.pop %v2586
      %v2699 = vrsqrt.pop %v2587
      %v2700 = vrsqrt.pop %v2588
      %v2701 = vrsqrt.pop %v2589
      %v2702 = vrsqrt.pop %v2590
      %v2703 = vrsqrt.pop %v2591
      %v2704 = vrsqrt.pop %v2592
      %v2705 = vrsqrt.pop %v2593
      %v2706 = vrsqrt.pop %v2594
      %v2707 = vrsqrt.pop %v2595
      %v2708 = vrsqrt.pop %v2596
      %v2709 = vrsqrt.pop %v2597
      %v2710 = vrsqrt.pop %v2598
      %v2711 = vrsqrt.pop %v2599
      %v2712 = vrsqrt.pop %v2600
      %v2713 = vrsqrt.pop %v2601
      %v2714 = vrsqrt.pop %v2602
      %v2715 = vrsqrt.pop %v2603
      %v2716 = vrsqrt.pop %v2604
      %v2717 = vrsqrt.pop %v2605
      %v2718 = vrsqrt.pop %v2606
      %v2719 = vrsqrt.pop %v2607
      %v2720 = vrsqrt.pop %v2608
      %v2721 = vrsqrt.pop %v2609
      %v2722 = vrsqrt.pop %v2610
      %v2723 = vrsqrt.pop %v2611
      %v2724 = vrsqrt.pop %v2612
      %v2725 = vrsqrt.pop %v2613
      %v2726 = vrsqrt.pop %v2614
      %v2727 = vrsqrt.pop %v2615
      %v2728 = vrsqrt.pop %v2616
      %v2729 = vrsqrt.pop %v2617
      %v2730 = vrsqrt.pop %v2618
      %v2731 = vrsqrt.pop %v2619
      %v2732 = vrsqrt.pop %v2620
      %v2733 = vrsqrt.pop %v2621
      %v2734 = vrsqrt.pop %v2622
      %v2735 = vrsqrt.pop %v2623
      %v2736 = vrsqrt.pop %v2624
      %v2737 = vrsqrt.pop %v2625
      %v2738 = vrsqrt.pop %v2626
      %v2739 = vrsqrt.pop %v2627
      %v2740 = vrsqrt.pop %v2628
      %v2741 = vrsqrt.pop %v2629
      %v2742 = vrsqrt.pop %v2630
      %v2743 = vrsqrt.pop %v2631
      %v2744 = vrsqrt.pop %v2632
      %v2745 = vrsqrt.pop %v2633
      %v2746 = vrsqrt.pop %v2634
      %v2747 = vrsqrt.pop %v2635
      %v2748 = vrsqrt.pop %v2636
      %v2749 = vmul.f32 %v2413, %v2637
      %v2750 = vmul.f32 %v2414, %v2638
      %v2751 = vmul.f32 %v2415, %v2639
      %v2752 = vmul.f32 %v2416, %v2640
      %v2753 = vmul.f32 %v2417, %v2641
      %v2754 = vmul.f32 %v2418, %v2642
      %v2755 = vmul.f32 %v2419, %v2643
      %v2756 = vmul.f32 %v2420, %v2644
      %v2757 = vmul.f32 %v2421, %v2645
      %v2758 = vmul.f32 %v2422, %v2646
      %v2759 = vmul.f32 %v2423, %v2647
      %v2760 = vmul.f32 %v2424, %v2648
      %v2761 = vmul.f32 %v2425, %v2649
      %v2762 = vmul.f32 %v2426, %v2650
      %v2763 = vmul.f32 %v2427, %v2651
      %v2764 = vmul.f32 %v2428, %v2652
      %v2765 = vmul.f32 %v2429, %v2653
      %v2766 = vmul.f32 %v2430, %v2654
      %v2767 = vmul.f32 %v2431, %v2655
      %v2768 = vmul.f32 %v2432, %v2656
      %v2769 = vmul.f32 %v2433, %v2657
      %v2770 = vmul.f32 %v2434, %v2658
      %v2771 = vmul.f32 %v2435, %v2659
      %v2772 = vmul.f32 %v2436, %v2660
      %v2773 = vmul.f32 %v2437, %v2661
      %v2774 = vmul.f32 %v2438, %v2662
      %v2775 = vmul.f32 %v2439, %v2663
      %v2776 = vmul.f32 %v2440, %v2664
      %v2777 = vmul.f32 %v2441, %v2665
      %v2778 = vmul.f32 %v2442, %v2666
      %v2779 = vmul.f32 %v2443, %v2667
      %v2780 = vmul.f32 %v2444, %v2668
      %v2781 = vmul.f32 %v2445, %v2669
      %v2782 = vmul.f32 %v2446, %v2670
      %v2783 = vmul.f32 %v2447, %v2671
      %v2784 = vmul.f32 %v2448, %v2672
      %v2785 = vmul.f32 %v2449, %v2673
      %v2786 = vmul.f32 %v2450, %v2674
      %v2787 = vmul.f32 %v2451, %v2675
      %v2788 = vmul.f32 %v2452, %v2676
      %v2789 = vmul.f32 %v2453, %v2677
      %v2790 = vmul.f32 %v2454, %v2678
      %v2791 = vmul.f32 %v2455, %v2679
      %v2792 = vmul.f32 %v2456, %v2680
      %v2793 = vmul.f32 %v2457, %v2681
      %v2794 = vmul.f32 %v2458, %v2682
      %v2795 = vmul.f32 %v2459, %v2683
      %v2796 = vmul.f32 %v2460, %v2684
      %v2797 = vmul.f32 %v2461, %v2685
      %v2798 = vmul.f32 %v2462, %v2686
      %v2799 = vmul.f32 %v2463, %v2687
      %v2800 = vmul.f32 %v2464, %v2688
      %v2801 = vmul.f32 %v2465, %v2689
      %v2802 = vmul.f32 %v2466, %v2690
      %v2803 = vmul.f32 %v2467, %v2691
      %v2804 = vmul.f32 %v2468, %v2692
      %v2805 = vmul.f32 %v2469, %v2693
      %v2806 = vmul.f32 %v2470, %v2694
      %v2807 = vmul.f32 %v2471, %v2695
      %v2808 = vmul.f32 %v2472, %v2696
      %v2809 = vmul.f32 %v2473, %v2697
      %v2810 = vmul.f32 %v2474, %v2698
      %v2811 = vmul.f32 %v2475, %v2699
      %v2812 = vmul.f32 %v2476, %v2700
      %v2813 = vmul.f32 %v2477, %v2701
      %v2814 = vmul.f32 %v2478, %v2702
      %v2815 = vmul.f32 %v2479, %v2703
      %v2816 = vmul.f32 %v2480, %v2704
      %v2817 = vmul.f32 %v2481, %v2705
      %v2818 = vmul.f32 %v2482, %v2706
      %v2819 = vmul.f32 %v2483, %v2707
      %v2820 = vmul.f32 %v2484, %v2708
      %v2821 = vmul.f32 %v2485, %v2709
      %v2822 = vmul.f32 %v2486, %v2710
      %v2823 = vmul.f32 %v2487, %v2711
      %v2824 = vmul.f32 %v2488, %v2712
      %v2825 = vmul.f32 %v2489, %v2713
      %v2826 = vmul.f32 %v2490, %v2714
      %v2827 = vmul.f32 %v2491, %v2715
      %v2828 = vmul.f32 %v2492, %v2716
      %v2829 = vmul.f32 %v2493, %v2717
      %v2830 = vmul.f32 %v2494, %v2718
      %v2831 = vmul.f32 %v2495, %v2719
      %v2832 = vmul.f32 %v2496, %v2720
      %v2833 = vmul.f32 %v2497, %v2721
      %v2834 = vmul.f32 %v2498, %v2722
      %v2835 = vmul.f32 %v2499, %v2723
      %v2836 = vmul.f32 %v2500, %v2724
      %v2837 = vmul.f32 %v2501, %v2725
      %v2838 = vmul.f32 %v2502, %v2726
      %v2839 = vmul.f32 %v2503, %v2727
      %v2840 = vmul.f32 %v2504, %v2728
      %v2841 = vmul.f32 %v2505, %v2729
      %v2842 = vmul.f32 %v2506, %v2730
      %v2843 = vmul.f32 %v2507, %v2731
      %v2844 = vmul.f32 %v2508, %v2732
      %v2845 = vmul.f32 %v2509, %v2733
      %v2846 = vmul.f32 %v2510, %v2734
      %v2847 = vmul.f32 %v2511, %v2735
      %v2848 = vmul.f32 %v2512, %v2736
      %v2849 = vmul.f32 %v2513, %v2737
      %v2850 = vmul.f32 %v2514, %v2738
      %v2851 = vmul.f32 %v2515, %v2739
      %v2852 = vmul.f32 %v2516, %v2740
      %v2853 = vmul.f32 %v2517, %v2741
      %v2854 = vmul.f32 %v2518, %v2742
      %v2855 = vmul.f32 %v2519, %v2743
      %v2856 = vmul.f32 %v2520, %v2744
      %v2857 = vmul.f32 %v2521, %v2745
      %v2858 = vmul.f32 %v2522, %v2746
      %v2859 = vmul.f32 %v2523, %v2747
      %v2860 = vmul.f32 %v2524, %v2748
      %v2861 = vld [vmem:[%s3] sm:$0x1]
      %v2863 = vlaneseq
      %v2864 = vshrl.u32 %v2863, 7
      %v2865 = vsub.s32 0, %v2864
      %v2866 = vrot.slane %v2861, %v2865
      %v2868 = vmul.f32 %v2749, %v2866
      %v2869 = vmul.f32 %v2750, %v2866
      %v2870 = vmul.f32 %v2751, %v2866
      %v2871 = vmul.f32 %v2752, %v2866
      %v2872 = vmul.f32 %v2753, %v2866
      %v2873 = vmul.f32 %v2754, %v2866
      %v2874 = vmul.f32 %v2755, %v2866
      %v2875 = vmul.f32 %v2756, %v2866
      %v2876 = vmul.f32 %v2757, %v2866
      %v2877 = vmul.f32 %v2758, %v2866
      %v2878 = vmul.f32 %v2759, %v2866
      %v2879 = vmul.f32 %v2760, %v2866
      %v2880 = vmul.f32 %v2761, %v2866
      %v2881 = vmul.f32 %v2762, %v2866
      %v2882 = vmul.f32 %v2763, %v2866
      %v2883 = vmul.f32 %v2764, %v2866
      %v2884 = vmul.f32 %v2765, %v2866
      %v2885 = vmul.f32 %v2766, %v2866
      %v2886 = vmul.f32 %v2767, %v2866
      %v2887 = vmul.f32 %v2768, %v2866
      %v2888 = vmul.f32 %v2769, %v2866
      %v2889 = vmul.f32 %v2770, %v2866
      %v2890 = vmul.f32 %v2771, %v2866
      %v2891 = vmul.f32 %v2772, %v2866
      %v2892 = vmul.f32 %v2773, %v2866
      %v2893 = vmul.f32 %v2774, %v2866
      %v2894 = vmul.f32 %v2775, %v2866
      %v2895 = vmul.f32 %v2776, %v2866
      %v2896 = vmul.f32 %v2777, %v2866
      %v2897 = vmul.f32 %v2778, %v2866
      %v2898 = vmul.f32 %v2779, %v2866
      %v2899 = vmul.f32 %v2780, %v2866
      %v2900 = vmul.f32 %v2781, %v2866
      %v2901 = vmul.f32 %v2782, %v2866
      %v2902 = vmul.f32 %v2783, %v2866
      %v2903 = vmul.f32 %v2784, %v2866
      %v2904 = vmul.f32 %v2785, %v2866
      %v2905 = vmul.f32 %v2786, %v2866
      %v2906 = vmul.f32 %v2787, %v2866
      %v2907 = vmul.f32 %v2788, %v2866
      %v2908 = vmul.f32 %v2789, %v2866
      %v2909 = vmul.f32 %v2790, %v2866
      %v2910 = vmul.f32 %v2791, %v2866
      %v2911 = vmul.f32 %v2792, %v2866
      %v2912 = vmul.f32 %v2793, %v2866
      %v2913 = vmul.f32 %v2794, %v2866
      %v2914 = vmul.f32 %v2795, %v2866
      %v2915 = vmul.f32 %v2796, %v2866
      %v2916 = vmul.f32 %v2797, %v2866
      %v2917 = vmul.f32 %v2798, %v2866
      %v2918 = vmul.f32 %v2799, %v2866
      %v2919 = vmul.f32 %v2800, %v2866
      %v2920 = vmul.f32 %v2801, %v2866
      %v2921 = vmul.f32 %v2802, %v2866
      %v2922 = vmul.f32 %v2803, %v2866
      %v2923 = vmul.f32 %v2804, %v2866
      %v2924 = vmul.f32 %v2805, %v2866
      %v2925 = vmul.f32 %v2806, %v2866
      %v2926 = vmul.f32 %v2807, %v2866
      %v2927 = vmul.f32 %v2808, %v2866
      %v2928 = vmul.f32 %v2809, %v2866
      %v2929 = vmul.f32 %v2810, %v2866
      %v2930 = vmul.f32 %v2811, %v2866
      %v2931 = vmul.f32 %v2812, %v2866
      %v2932 = vmul.f32 %v2813, %v2866
      %v2933 = vmul.f32 %v2814, %v2866
      %v2934 = vmul.f32 %v2815, %v2866
      %v2935 = vmul.f32 %v2816, %v2866
      %v2936 = vmul.f32 %v2817, %v2866
      %v2937 = vmul.f32 %v2818, %v2866
      %v2938 = vmul.f32 %v2819, %v2866
      %v2939 = vmul.f32 %v2820, %v2866
      %v2940 = vmul.f32 %v2821, %v2866
      %v2941 = vmul.f32 %v2822, %v2866
      %v2942 = vmul.f32 %v2823, %v2866
      %v2943 = vmul.f32 %v2824, %v2866
      %v2944 = vmul.f32 %v2825, %v2866
      %v2945 = vmul.f32 %v2826, %v2866
      %v2946 = vmul.f32 %v2827, %v2866
      %v2947 = vmul.f32 %v2828, %v2866
      %v2948 = vmul.f32 %v2829, %v2866
      %v2949 = vmul.f32 %v2830, %v2866
      %v2950 = vmul.f32 %v2831, %v2866
      %v2951 = vmul.f32 %v2832, %v2866
      %v2952 = vmul.f32 %v2833, %v2866
      %v2953 = vmul.f32 %v2834, %v2866
      %v2954 = vmul.f32 %v2835, %v2866
      %v2955 = vmul.f32 %v2836, %v2866
      %v2956 = vmul.f32 %v2837, %v2866
      %v2957 = vmul.f32 %v2838, %v2866
      %v2958 = vmul.f32 %v2839, %v2866
      %v2959 = vmul.f32 %v2840, %v2866
      %v2960 = vmul.f32 %v2841, %v2866
      %v2961 = vmul.f32 %v2842, %v2866
      %v2962 = vmul.f32 %v2843, %v2866
      %v2963 = vmul.f32 %v2844, %v2866
      %v2964 = vmul.f32 %v2845, %v2866
      %v2965 = vmul.f32 %v2846, %v2866
      %v2966 = vmul.f32 %v2847, %v2866
      %v2967 = vmul.f32 %v2848, %v2866
      %v2968 = vmul.f32 %v2849, %v2866
      %v2969 = vmul.f32 %v2850, %v2866
      %v2970 = vmul.f32 %v2851, %v2866
      %v2971 = vmul.f32 %v2852, %v2866
      %v2972 = vmul.f32 %v2853, %v2866
      %v2973 = vmul.f32 %v2854, %v2866
      %v2974 = vmul.f32 %v2855, %v2866
      %v2975 = vmul.f32 %v2856, %v2866
      %v2976 = vmul.f32 %v2857, %v2866
      %v2977 = vmul.f32 %v2858, %v2866
      %v2978 = vmul.f32 %v2859, %v2866
      %v2979 = vmul.f32 %v2860, %v2866
      %v2980 = vld [vmem:[%s4] sm:$0x1]
      %v2982 = vlaneseq
      %v2983 = vshrl.u32 %v2982, 7
      %v2984 = vsub.s32 0, %v2983
      %v2985 = vrot.slane %v2980, %v2984
      %v2987 = vadd.f32 %v2868, %v2985
      %v2988 = vadd.f32 %v2869, %v2985
      %v2989 = vadd.f32 %v2870, %v2985
      %v2990 = vadd.f32 %v2871, %v2985
      %v2991 = vadd.f32 %v2872, %v2985
      %v2992 = vadd.f32 %v2873, %v2985
      %v2993 = vadd.f32 %v2874, %v2985
      %v2994 = vadd.f32 %v2875, %v2985
      %v2995 = vadd.f32 %v2876, %v2985
      %v2996 = vadd.f32 %v2877, %v2985
      %v2997 = vadd.f32 %v2878, %v2985
      %v2998 = vadd.f32 %v2879, %v2985
      %v2999 = vadd.f32 %v2880, %v2985
      %v3000 = vadd.f32 %v2881, %v2985
      %v3001 = vadd.f32 %v2882, %v2985
      %v3002 = vadd.f32 %v2883, %v2985
      %v3003 = vadd.f32 %v2884, %v2985
      %v3004 = vadd.f32 %v2885, %v2985
      %v3005 = vadd.f32 %v2886, %v2985
      %v3006 = vadd.f32 %v2887, %v2985
      %v3007 = vadd.f32 %v2888, %v2985
      %v3008 = vadd.f32 %v2889, %v2985
      %v3009 = vadd.f32 %v2890, %v2985
      %v3010 = vadd.f32 %v2891, %v2985
      %v3011 = vadd.f32 %v2892, %v2985
      %v3012 = vadd.f32 %v2893, %v2985
      %v3013 = vadd.f32 %v2894, %v2985
      %v3014 = vadd.f32 %v2895, %v2985
      %v3015 = vadd.f32 %v2896, %v2985
      %v3016 = vadd.f32 %v2897, %v2985
      %v3017 = vadd.f32 %v2898, %v2985
      %v3018 = vadd.f32 %v2899, %v2985
      %v3019 = vadd.f32 %v2900, %v2985
      %v3020 = vadd.f32 %v2901, %v2985
      %v3021 = vadd.f32 %v2902, %v2985
      %v3022 = vadd.f32 %v2903, %v2985
      %v3023 = vadd.f32 %v2904, %v2985
      %v3024 = vadd.f32 %v2905, %v2985
      %v3025 = vadd.f32 %v2906, %v2985
      %v3026 = vadd.f32 %v2907, %v2985
      %v3027 = vadd.f32 %v2908, %v2985
      %v3028 = vadd.f32 %v2909, %v2985
      %v3029 = vadd.f32 %v2910, %v2985
      %v3030 = vadd.f32 %v2911, %v2985
      %v3031 = vadd.f32 %v2912, %v2985
      %v3032 = vadd.f32 %v2913, %v2985
      %v3033 = vadd.f32 %v2914, %v2985
      %v3034 = vadd.f32 %v2915, %v2985
      %v3035 = vadd.f32 %v2916, %v2985
      %v3036 = vadd.f32 %v2917, %v2985
      %v3037 = vadd.f32 %v2918, %v2985
      %v3038 = vadd.f32 %v2919, %v2985
      %v3039 = vadd.f32 %v2920, %v2985
      %v3040 = vadd.f32 %v2921, %v2985
      %v3041 = vadd.f32 %v2922, %v2985
      %v3042 = vadd.f32 %v2923, %v2985
      %v3043 = vadd.f32 %v2924, %v2985
      %v3044 = vadd.f32 %v2925, %v2985
      %v3045 = vadd.f32 %v2926, %v2985
      %v3046 = vadd.f32 %v2927, %v2985
      %v3047 = vadd.f32 %v2928, %v2985
      %v3048 = vadd.f32 %v2929, %v2985
      %v3049 = vadd.f32 %v2930, %v2985
      %v3050 = vadd.f32 %v2931, %v2985
      %v3051 = vadd.f32 %v2932, %v2985
      %v3052 = vadd.f32 %v2933, %v2985
      %v3053 = vadd.f32 %v2934, %v2985
      %v3054 = vadd.f32 %v2935, %v2985
      %v3055 = vadd.f32 %v2936, %v2985
      %v3056 = vadd.f32 %v2937, %v2985
      %v3057 = vadd.f32 %v2938, %v2985
      %v3058 = vadd.f32 %v2939, %v2985
      %v3059 = vadd.f32 %v2940, %v2985
      %v3060 = vadd.f32 %v2941, %v2985
      %v3061 = vadd.f32 %v2942, %v2985
      %v3062 = vadd.f32 %v2943, %v2985
      %v3063 = vadd.f32 %v2944, %v2985
      %v3064 = vadd.f32 %v2945, %v2985
      %v3065 = vadd.f32 %v2946, %v2985
      %v3066 = vadd.f32 %v2947, %v2985
      %v3067 = vadd.f32 %v2948, %v2985
      %v3068 = vadd.f32 %v2949, %v2985
      %v3069 = vadd.f32 %v2950, %v2985
      %v3070 = vadd.f32 %v2951, %v2985
      %v3071 = vadd.f32 %v2952, %v2985
      %v3072 = vadd.f32 %v2953, %v2985
      %v3073 = vadd.f32 %v2954, %v2985
      %v3074 = vadd.f32 %v2955, %v2985
      %v3075 = vadd.f32 %v2956, %v2985
      %v3076 = vadd.f32 %v2957, %v2985
      %v3077 = vadd.f32 %v2958, %v2985
      %v3078 = vadd.f32 %v2959, %v2985
      %v3079 = vadd.f32 %v2960, %v2985
      %v3080 = vadd.f32 %v2961, %v2985
      %v3081 = vadd.f32 %v2962, %v2985
      %v3082 = vadd.f32 %v2963, %v2985
      %v3083 = vadd.f32 %v2964, %v2985
      %v3084 = vadd.f32 %v2965, %v2985
      %v3085 = vadd.f32 %v2966, %v2985
      %v3086 = vadd.f32 %v2967, %v2985
      %v3087 = vadd.f32 %v2968, %v2985
      %v3088 = vadd.f32 %v2969, %v2985
      %v3089 = vadd.f32 %v2970, %v2985
      %v3090 = vadd.f32 %v2971, %v2985
      %v3091 = vadd.f32 %v2972, %v2985
      %v3092 = vadd.f32 %v2973, %v2985
      %v3093 = vadd.f32 %v2974, %v2985
      %v3094 = vadd.f32 %v2975, %v2985
      %v3095 = vadd.f32 %v2976, %v2985
      %v3096 = vadd.f32 %v2977, %v2985
      %v3097 = vadd.f32 %v2978, %v2985
      %v3098 = vadd.f32 %v2979, %v2985
      %v3099 = vpack.c.bf16 %v2988, %v2987
      %v3100 = vpack.c.bf16 %v2990, %v2989
      %v3101 = vpack.c.bf16 %v2992, %v2991
      %v3102 = vpack.c.bf16 %v2994, %v2993
      %v3103 = vpack.c.bf16 %v2996, %v2995
      %v3104 = vpack.c.bf16 %v2998, %v2997
      %v3105 = vpack.c.bf16 %v3000, %v2999
      %v3106 = vpack.c.bf16 %v3002, %v3001
      %v3107 = vpack.c.bf16 %v3004, %v3003
      %v3108 = vpack.c.bf16 %v3006, %v3005
      %v3109 = vpack.c.bf16 %v3008, %v3007
      %v3110 = vpack.c.bf16 %v3010, %v3009
      %v3111 = vpack.c.bf16 %v3012, %v3011
      %v3112 = vpack.c.bf16 %v3014, %v3013
      %v3113 = vpack.c.bf16 %v3016, %v3015
      %v3114 = vpack.c.bf16 %v3018, %v3017
      %v3115 = vpack.c.bf16 %v3020, %v3019
      %v3116 = vpack.c.bf16 %v3022, %v3021
      %v3117 = vpack.c.bf16 %v3024, %v3023
      %v3118 = vpack.c.bf16 %v3026, %v3025
      %v3119 = vpack.c.bf16 %v3028, %v3027
      %v3120 = vpack.c.bf16 %v3030, %v3029
      %v3121 = vpack.c.bf16 %v3032, %v3031
      %v3122 = vpack.c.bf16 %v3034, %v3033
      %v3123 = vpack.c.bf16 %v3036, %v3035
      %v3124 = vpack.c.bf16 %v3038, %v3037
      %v3125 = vpack.c.bf16 %v3040, %v3039
      %v3126 = vpack.c.bf16 %v3042, %v3041
      %v3127 = vpack.c.bf16 %v3044, %v3043
      %v3128 = vpack.c.bf16 %v3046, %v3045
      %v3129 = vpack.c.bf16 %v3048, %v3047
      %v3130 = vpack.c.bf16 %v3050, %v3049
      %v3131 = vpack.c.bf16 %v3052, %v3051
      %v3132 = vpack.c.bf16 %v3054, %v3053
      %v3133 = vpack.c.bf16 %v3056, %v3055
      %v3134 = vpack.c.bf16 %v3058, %v3057
      %v3135 = vpack.c.bf16 %v3060, %v3059
      %v3136 = vpack.c.bf16 %v3062, %v3061
      %v3137 = vpack.c.bf16 %v3064, %v3063
      %v3138 = vpack.c.bf16 %v3066, %v3065
      %v3139 = vpack.c.bf16 %v3068, %v3067
      %v3140 = vpack.c.bf16 %v3070, %v3069
      %v3141 = vpack.c.bf16 %v3072, %v3071
      %v3142 = vpack.c.bf16 %v3074, %v3073
      %v3143 = vpack.c.bf16 %v3076, %v3075
      %v3144 = vpack.c.bf16 %v3078, %v3077
      %v3145 = vpack.c.bf16 %v3080, %v3079
      %v3146 = vpack.c.bf16 %v3082, %v3081
      %v3147 = vpack.c.bf16 %v3084, %v3083
      %v3148 = vpack.c.bf16 %v3086, %v3085
      %v3149 = vpack.c.bf16 %v3088, %v3087
      %v3150 = vpack.c.bf16 %v3090, %v3089
      %v3151 = vpack.c.bf16 %v3092, %v3091
      %v3152 = vpack.c.bf16 %v3094, %v3093
      %v3153 = vpack.c.bf16 %v3096, %v3095
      %v3154 = vpack.c.bf16 %v3098, %v3097
      %v3155 = vld [vmem:[%s5] sm:$0xf]
      %3156 = vmatprep.subr.bf16.mxu0 0
      %3157 = vmatpush1.bf16.xpose.msra.mxu0 %v3106
      %3158 = vmatprep.subr.bf16.mxu0 0
      %3159 = vmatpush1.bf16.xpose.msra.mxu0 %v3105
      %3160 = vmatprep.subr.bf16.mxu0 0
      %3161 = vmatpush1.bf16.xpose.msra.mxu0 %v3104
      %3162 = vmatprep.subr.bf16.mxu0 0
      %3163 = vmatpush1.bf16.xpose.msra.mxu0 %v3103
      %3164 = vmatprep.subr.bf16.mxu0 0
      %3165 = vmatpush1.bf16.xpose.msra.mxu0 %v3102
      %3166 = vmatprep.subr.bf16.mxu0 0
      %3167 = vmatpush1.bf16.xpose.msra.mxu0 %v3101
      %3168 = vmatprep.subr.bf16.mxu0 0
      %3169 = vmatpush1.bf16.xpose.msra.mxu0 %v3100
      %3170 = vmatprep.subr.bf16.mxu0 0
      %3171 = vmatpush1.bf16.xpose.msra.mxu0 %v3099
      %3172 = vmatprep.subr.bf16.mxu0 0
      %3173 = vmatpush2.bf16.xpose.msra.mxu0 %v3114
      %3174 = vmatprep.subr.bf16.mxu0 0
      %3175 = vmatpush2.bf16.xpose.msra.mxu0 %v3113
      %3176 = vmatprep.subr.bf16.mxu0 0
      %3177 = vmatpush2.bf16.xpose.msra.mxu0 %v3112
      %3178 = vmatprep.subr.bf16.mxu0 0
      %3179 = vmatpush2.bf16.xpose.msra.mxu0 %v3111
      %3180 = vmatprep.subr.bf16.mxu0 0
      %3181 = vmatpush2.bf16.xpose.msra.mxu0 %v3110
      %3182 = vmatprep.subr.bf16.mxu0 0
      %3183 = vmatpush2.bf16.xpose.msra.mxu0 %v3109
      %3184 = vmatprep.subr.bf16.mxu0 0
      %3185 = vmatpush2.bf16.xpose.msra.mxu0 %v3108
      %3186 = vmatprep.subr.bf16.mxu0 0
      %3187 = vmatpush2.bf16.xpose.msra.mxu0 %v3107
      %3188 = vmatprep.mubr.bf16.mxu0 0
      %3189 = vmatmul.mubr.bf16.gmra.mxu0 %v3155
      %v3190 = vpop.f32.mrf.mxu0
      %v3191 = vadd.f32 0.0, %v3190
      %v3192 = vpop.f32.mrf.mxu0
      %v3193 = vadd.f32 0.0, %v3192
      %v3194 = vpop.f32.mrf.mxu0
      %v3195 = vpop.f32.mrf.mxu0
      %3196 = vdwg.mxu0
      %3197 = vmatprep.subr.bf16.mxu0 0
      %3198 = vmatpush1.bf16.xpose.msra.mxu0 %v3122
      %3199 = vmatprep.subr.bf16.mxu0 0
      %3200 = vmatpush1.bf16.xpose.msra.mxu0 %v3121
      %3201 = vmatprep.subr.bf16.mxu0 0
      %3202 = vmatpush1.bf16.xpose.msra.mxu0 %v3120
      %3203 = vmatprep.subr.bf16.mxu0 0
      %3204 = vmatpush1.bf16.xpose.msra.mxu0 %v3119
      %3205 = vmatprep.subr.bf16.mxu0 0
      %3206 = vmatpush1.bf16.xpose.msra.mxu0 %v3118
      %3207 = vmatprep.subr.bf16.mxu0 0
      %3208 = vmatpush1.bf16.xpose.msra.mxu0 %v3117
      %3209 = vmatprep.subr.bf16.mxu0 0
      %3210 = vmatpush1.bf16.xpose.msra.mxu0 %v3116
      %3211 = vmatprep.subr.bf16.mxu0 0
      %3212 = vmatpush1.bf16.xpose.msra.mxu0 %v3115
      %3213 = vmatprep.subr.bf16.mxu0 0
      %3214 = vmatpush2.bf16.xpose.msra.mxu0 %v3130
      %3215 = vmatprep.subr.bf16.mxu0 0
      %3216 = vmatpush2.bf16.xpose.msra.mxu0 %v3129
      %3217 = vmatprep.subr.bf16.mxu0 0
      %3218 = vmatpush2.bf16.xpose.msra.mxu0 %v3128
      %3219 = vmatprep.subr.bf16.mxu0 0
      %3220 = vmatpush2.bf16.xpose.msra.mxu0 %v3127
      %3221 = vmatprep.subr.bf16.mxu0 0
      %3222 = vmatpush2.bf16.xpose.msra.mxu0 %v3126
      %3223 = vmatprep.subr.bf16.mxu0 0
      %3224 = vmatpush2.bf16.xpose.msra.mxu0 %v3125
      %3225 = vmatprep.subr.bf16.mxu0 0
      %3226 = vmatpush2.bf16.xpose.msra.mxu0 %v3124
      %3227 = vmatprep.subr.bf16.mxu0 0
      %3228 = vmatpush2.bf16.xpose.msra.mxu0 %v3123
      %3229 = vmatprep.mubr.bf16.mxu0 0
      %3230 = vmatmul.mubr.bf16.gmra.mxu0 %v3155
      %v3231 = vpop.f32.mrf.mxu0
      %v3232 = vadd.f32 0.0, %v3231
      %v3233 = vpop.f32.mrf.mxu0
      %v3234 = vadd.f32 0.0, %v3233
      %v3235 = vpop.f32.mrf.mxu0
      %v3236 = vpop.f32.mrf.mxu0
      %3237 = vdwg.mxu0
      %3238 = vmatprep.subr.bf16.mxu0 0
      %3239 = vmatpush1.bf16.xpose.msra.mxu0 %v3138
      %3240 = vmatprep.subr.bf16.mxu0 0
      %3241 = vmatpush1.bf16.xpose.msra.mxu0 %v3137
      %3242 = vmatprep.subr.bf16.mxu0 0
      %3243 = vmatpush1.bf16.xpose.msra.mxu0 %v3136
      %3244 = vmatprep.subr.bf16.mxu0 0
      %3245 = vmatpush1.bf16.xpose.msra.mxu0 %v3135
      %3246 = vmatprep.subr.bf16.mxu0 0
      %3247 = vmatpush1.bf16.xpose.msra.mxu0 %v3134
      %3248 = vmatprep.subr.bf16.mxu0 0
      %3249 = vmatpush1.bf16.xpose.msra.mxu0 %v3133
      %3250 = vmatprep.subr.bf16.mxu0 0
      %3251 = vmatpush1.bf16.xpose.msra.mxu0 %v3132
      %3252 = vmatprep.subr.bf16.mxu0 0
      %3253 = vmatpush1.bf16.xpose.msra.mxu0 %v3131
      %3254 = vmatprep.subr.bf16.mxu0 0
      %3255 = vmatpush2.bf16.xpose.msra.mxu0 %v3146
      %3256 = vmatprep.subr.bf16.mxu0 0
      %3257 = vmatpush2.bf16.xpose.msra.mxu0 %v3145
      %3258 = vmatprep.subr.bf16.mxu0 0
      %3259 = vmatpush2.bf16.xpose.msra.mxu0 %v3144
      %3260 = vmatprep.subr.bf16.mxu0 0
      %3261 = vmatpush2.bf16.xpose.msra.mxu0 %v3143
      %3262 = vmatprep.subr.bf16.mxu0 0
      %3263 = vmatpush2.bf16.xpose.msra.mxu0 %v3142
      %3264 = vmatprep.subr.bf16.mxu0 0
      %3265 = vmatpush2.bf16.xpose.msra.mxu0 %v3141
      %3266 = vmatprep.subr.bf16.mxu0 0
      %3267 = vmatpush2.bf16.xpose.msra.mxu0 %v3140
      %3268 = vmatprep.subr.bf16.mxu0 0
      %3269 = vmatpush2.bf16.xpose.msra.mxu0 %v3139
      %3270 = vmatprep.mubr.bf16.mxu0 0
      %3271 = vmatmul.mubr.bf16.gmra.mxu0 %v3155
      %v3272 = vpop.f32.mrf.mxu0
      %v3273 = vadd.f32 0.0, %v3272
      %v3274 = vpop.f32.mrf.mxu0
      %v3275 = vadd.f32 0.0, %v3274
      %v3276 = vpop.f32.mrf.mxu0
      %v3277 = vpop.f32.mrf.mxu0
      %3278 = vdwg.mxu0
      %3279 = vmatprep.subr.bf16.mxu0 0
      %3280 = vmatpush1.bf16.xpose.msra.mxu0 %v3154
      %3281 = vmatprep.subr.bf16.mxu0 0
      %3282 = vmatpush1.bf16.xpose.msra.mxu0 %v3153
      %3283 = vmatprep.subr.bf16.mxu0 0
      %3284 = vmatpush1.bf16.xpose.msra.mxu0 %v3152
      %3285 = vmatprep.subr.bf16.mxu0 0
      %3286 = vmatpush1.bf16.xpose.msra.mxu0 %v3151
      %3287 = vmatprep.subr.bf16.mxu0 0
      %3288 = vmatpush1.bf16.xpose.msra.mxu0 %v3150
      %3289 = vmatprep.subr.bf16.mxu0 0
      %3290 = vmatpush1.bf16.xpose.msra.mxu0 %v3149
      %3291 = vmatprep.subr.bf16.mxu0 0
      %3292 = vmatpush1.bf16.xpose.msra.mxu0 %v3148
      %3293 = vmatprep.subr.bf16.mxu0 0
      %3294 = vmatpush1.bf16.xpose.msra.mxu0 %v3147
      %3295 = vmatprep.subr.bf16.mxu0 0
      %3296 = vmatpush2.bf16.xpose.msra.mxu0 0
      %3297 = vmatprep.subr.bf16.mxu0 0
      %3298 = vmatpush2.bf16.xpose.msra.mxu0 0
      %3299 = vmatprep.subr.bf16.mxu0 0
      %3300 = vmatpush2.bf16.xpose.msra.mxu0 0
      %3301 = vmatprep.subr.bf16.mxu0 0
      %3302 = vmatpush2.bf16.xpose.msra.mxu0 0
      %3303 = vmatprep.subr.bf16.mxu0 0
      %3304 = vmatpush2.bf16.xpose.msra.mxu0 0
      %3305 = vmatprep.subr.bf16.mxu0 0
      %3306 = vmatpush2.bf16.xpose.msra.mxu0 0
      %3307 = vmatprep.subr.bf16.mxu0 0
      %3308 = vmatpush2.bf16.xpose.msra.mxu0 0
      %3309 = vmatprep.subr.bf16.mxu0 0
      %3310 = vmatpush2.bf16.xpose.msra.mxu0 0
      %3311 = vmatprep.mubr.bf16.mxu0 0
      %3312 = vmatmul.mubr.bf16.gmra.mxu0 %v3155
      %v3313 = vpop.f32.mrf.mxu0
      %v3314 = vadd.f32 0.0, %v3313
      %v3315 = vpop.f32.mrf.mxu0
      %v3316 = vpop.f32.mrf.mxu0
      %v3317 = vpop.f32.mrf.mxu0
      %3318 = vdwg.mxu0
      %3319 = vst [vmem:[%s321] sm:$0xff] %v3191
      %3320 = vst [vmem:[%s321 + $0x8] sm:$0xff] %v3193
      %3321 = vst [vmem:[%s321 + $0x10] sm:$0xff] %v3232
      %3322 = vst [vmem:[%s321 + $0x18] sm:$0xff] %v3234
      %3323 = vst [vmem:[%s321 + $0x20] sm:$0xff] %v3273
      %3324 = vst [vmem:[%s321 + $0x28] sm:$0xff] %v3275
      %3325 = vst [vmem:[%s321 + $0x30] sm:$0xff] %v3314
      %v3326 = vlaneseq
      %v3327 = vand.u32 %v3326, 127
      %v3328 = vadd.s32 %v3327, 128
      %v3329 = vadd.s32 %v3327, 256
      %v3330 = vadd.s32 %v3327, 384
      %v3331 = vadd.s32 %v3327, 512
      %v3332 = vadd.s32 %v3327, 640
      %v3333 = vadd.s32 %v3327, 768
      %v3334 = vlaneseq
      %v3335 = vshrl.u32 %v3334, 7
      %v3336 = vadd.s32 %v3335, 8
      %v3337 = vmul.u32 %v3335, 56
      %v3338 = vmul.u32 %v3336, 56
      %vm3339 = vcmp.ge.s32.totalorder %v3327, %v3337
      %vm3340 = vcmp.ge.s32.totalorder %v3328, %v3337
      %vm3341 = vcmp.ge.s32.totalorder %v3329, %v3337
      %vm3342 = vcmp.ge.s32.totalorder %v3330, %v3337
      %vm3343 = vcmp.ge.s32.totalorder %v3331, %v3337
      %vm3344 = vcmp.ge.s32.totalorder %v3332, %v3337
      %vm3345 = vcmp.ge.s32.totalorder %v3333, %v3337
      %vm3346 = vcmp.ge.s32.totalorder %v3327, %v3338
      %vm3347 = vcmp.ge.s32.totalorder %v3328, %v3338
      %vm3348 = vcmp.ge.s32.totalorder %v3329, %v3338
      %vm3349 = vcmp.ge.s32.totalorder %v3330, %v3338
      %vm3350 = vcmp.ge.s32.totalorder %v3331, %v3338
      %vm3351 = vcmp.ge.s32.totalorder %v3332, %v3338
      %vm3352 = vcmp.ge.s32.totalorder %v3333, %v3338
      %v3353 = vadd.s32 %v3337, 49
      %v3354 = vadd.s32 %v3338, 49
      %vm3355 = vcmp.lt.s32.totalorder %v3327, %v3353
      %vm3356 = vcmp.lt.s32.totalorder %v3328, %v3353
      %vm3357 = vcmp.lt.s32.totalorder %v3329, %v3353
      %vm3358 = vcmp.lt.s32.totalorder %v3330, %v3353
      %vm3359 = vcmp.lt.s32.totalorder %v3331, %v3353
      %vm3360 = vcmp.lt.s32.totalorder %v3332, %v3353
      %vm3361 = vcmp.lt.s32.totalorder %v3333, %v3353
      %vm3362 = vcmp.lt.s32.totalorder %v3327, %v3354
      %vm3363 = vcmp.lt.s32.totalorder %v3328, %v3354
      %vm3364 = vcmp.lt.s32.totalorder %v3329, %v3354
      %vm3365 = vcmp.lt.s32.totalorder %v3330, %v3354
      %vm3366 = vcmp.lt.s32.totalorder %v3331, %v3354
      %vm3367 = vcmp.lt.s32.totalorder %v3332, %v3354
      %vm3368 = vcmp.lt.s32.totalorder %v3333, %v3354
      %vm3369 = vmand %vm3339, %vm3355
      %vm3370 = vmand %vm3340, %vm3356
      %vm3371 = vmand %vm3341, %vm3357
      %vm3372 = vmand %vm3342, %vm3358
      %vm3373 = vmand %vm3343, %vm3359
      %vm3374 = vmand %vm3344, %vm3360
      %vm3375 = vmand %vm3345, %vm3361
      %vm3376 = vmand %vm3346, %vm3362
      %vm3377 = vmand %vm3347, %vm3363
      %vm3378 = vmand %vm3348, %vm3364
      %vm3379 = vmand %vm3349, %vm3365
      %vm3380 = vmand %vm3350, %vm3366
      %vm3381 = vmand %vm3351, %vm3367
      %vm3382 = vmand %vm3352, %vm3368
      %v3383 = vsel %vm3369, 1.0, 0.0
      %v3384 = vsel %vm3370, 1.0, 0.0
      %v3385 = vsel %vm3371, 1.0, 0.0
      %v3386 = vsel %vm3372, 1.0, 0.0
      %v3387 = vsel %vm3373, 1.0, 0.0
      %v3388 = vsel %vm3374, 1.0, 0.0
      %v3389 = vsel %vm3375, 1.0, 0.0
      %v3390 = vsel %vm3376, 1.0, 0.0
      %v3391 = vsel %vm3377, 1.0, 0.0
      %v3392 = vsel %vm3378, 1.0, 0.0
      %v3393 = vsel %vm3379, 1.0, 0.0
      %v3394 = vsel %vm3380, 1.0, 0.0
      %v3395 = vsel %vm3381, 1.0, 0.0
      %v3396 = vsel %vm3382, 1.0, 0.0
      %v3397 = vpack.c.bf16 %v3390, %v3383
      %v3398 = vpack.c.bf16 %v3391, %v3384
      %v3399 = vpack.c.bf16 %v3392, %v3385
      %v3400 = vpack.c.bf16 %v3393, %v3386
      %v3401 = vpack.c.bf16 %v3394, %v3387
      %v3402 = vpack.c.bf16 %v3395, %v3388
      %v3403 = vpack.c.bf16 %v3396, %v3389
      %3404 = vmatprep.subr.bf16.mxu0 0
      %3405 = vmatpush1.bf16.msra.mxu0 %v3106
      %3406 = vmatprep.subr.bf16.mxu0 0
      %3407 = vmatpush1.bf16.msra.mxu0 %v3105
      %3408 = vmatprep.subr.bf16.mxu0 0
      %3409 = vmatpush1.bf16.msra.mxu0 %v3104
      %3410 = vmatprep.subr.bf16.mxu0 0
      %3411 = vmatpush1.bf16.msra.mxu0 %v3103
      %3412 = vmatprep.subr.bf16.mxu0 0
      %3413 = vmatpush1.bf16.msra.mxu0 %v3102
      %3414 = vmatprep.subr.bf16.mxu0 0
      %3415 = vmatpush1.bf16.msra.mxu0 %v3101
      %3416 = vmatprep.subr.bf16.mxu0 0
      %3417 = vmatpush1.bf16.msra.mxu0 %v3100
      %3418 = vmatprep.subr.bf16.mxu0 0
      %3419 = vmatpush1.bf16.msra.mxu0 %v3099
      %3420 = vmatprep.subr.bf16.mxu0 0
      %3421 = vmatpush2.bf16.msra.mxu0 %v3114
      %3422 = vmatprep.subr.bf16.mxu0 0
      %3423 = vmatpush2.bf16.msra.mxu0 %v3113
      %3424 = vmatprep.subr.bf16.mxu0 0
      %3425 = vmatpush2.bf16.msra.mxu0 %v3112
      %3426 = vmatprep.subr.bf16.mxu0 0
      %3427 = vmatpush2.bf16.msra.mxu0 %v3111
      %3428 = vmatprep.subr.bf16.mxu0 0
      %3429 = vmatpush2.bf16.msra.mxu0 %v3110
      %3430 = vmatprep.subr.bf16.mxu0 0
      %3431 = vmatpush2.bf16.msra.mxu0 %v3109
      %3432 = vmatprep.subr.bf16.mxu0 0
      %3433 = vmatpush2.bf16.msra.mxu0 %v3108
      %3434 = vmatprep.subr.bf16.mxu0 0
      %3435 = vmatpush2.bf16.msra.mxu0 %v3107
      %3436 = vmatprep.mubr.bf16.mxu0 %v3398
      %3437 = vmatmul.mubr.bf16.gmra.mxu0 %v3397
      %v3438 = vpop.f32.mrf.mxu0
      %v3439 = vadd.f32 0.0, %v3438
      %v3440 = vpop.f32.mrf.mxu0
      %v3441 = vpop.f32.mrf.mxu0
      %v3442 = vadd.f32 0.0, %v3441
      %v3443 = vpop.f32.mrf.mxu0
      %3444 = vdwg.mxu0
      %3445 = vmatprep.subr.bf16.mxu0 0
      %3446 = vmatpush1.bf16.msra.mxu0 %v3122
      %3447 = vmatprep.subr.bf16.mxu0 0
      %3448 = vmatpush1.bf16.msra.mxu0 %v3121
      %3449 = vmatprep.subr.bf16.mxu0 0
      %3450 = vmatpush1.bf16.msra.mxu0 %v3120
      %3451 = vmatprep.subr.bf16.mxu0 0
      %3452 = vmatpush1.bf16.msra.mxu0 %v3119
      %3453 = vmatprep.subr.bf16.mxu0 0
      %3454 = vmatpush1.bf16.msra.mxu0 %v3118
      %3455 = vmatprep.subr.bf16.mxu0 0
      %3456 = vmatpush1.bf16.msra.mxu0 %v3117
      %3457 = vmatprep.subr.bf16.mxu0 0
      %3458 = vmatpush1.bf16.msra.mxu0 %v3116
      %3459 = vmatprep.subr.bf16.mxu0 0
      %3460 = vmatpush1.bf16.msra.mxu0 %v3115
      %3461 = vmatprep.subr.bf16.mxu0 0
      %3462 = vmatpush2.bf16.msra.mxu0 %v3130
      %3463 = vmatprep.subr.bf16.mxu0 0
      %3464 = vmatpush2.bf16.msra.mxu0 %v3129
      %3465 = vmatprep.subr.bf16.mxu0 0
      %3466 = vmatpush2.bf16.msra.mxu0 %v3128
      %3467 = vmatprep.subr.bf16.mxu0 0
      %3468 = vmatpush2.bf16.msra.mxu0 %v3127
      %3469 = vmatprep.subr.bf16.mxu0 0
      %3470 = vmatpush2.bf16.msra.mxu0 %v3126
      %3471 = vmatprep.subr.bf16.mxu0 0
      %3472 = vmatpush2.bf16.msra.mxu0 %v3125
      %3473 = vmatprep.subr.bf16.mxu0 0
      %3474 = vmatpush2.bf16.msra.mxu0 %v3124
      %3475 = vmatprep.subr.bf16.mxu0 0
      %3476 = vmatpush2.bf16.msra.mxu0 %v3123
      %3477 = vmatprep.mubr.bf16.mxu0 %v3400
      %3478 = vmatmul.mubr.bf16.gmra.mxu0 %v3399
      %v3479 = vpop.f32.mrf.mxu0
      %v3480 = vadd.f32 %v3439, %v3479
      %v3481 = vpop.f32.mrf.mxu0
      %v3482 = vpop.f32.mrf.mxu0
      %v3483 = vadd.f32 %v3442, %v3482
      %v3484 = vpop.f32.mrf.mxu0
      %3485 = vdwg.mxu0
      %3486 = vmatprep.subr.bf16.mxu0 0
      %3487 = vmatpush1.bf16.msra.mxu0 %v3138
      %3488 = vmatprep.subr.bf16.mxu0 0
      %3489 = vmatpush1.bf16.msra.mxu0 %v3137
      %3490 = vmatprep.subr.bf16.mxu0 0
      %3491 = vmatpush1.bf16.msra.mxu0 %v3136
      %3492 = vmatprep.subr.bf16.mxu0 0
      %3493 = vmatpush1.bf16.msra.mxu0 %v3135
      %3494 = vmatprep.subr.bf16.mxu0 0
      %3495 = vmatpush1.bf16.msra.mxu0 %v3134
      %3496 = vmatprep.subr.bf16.mxu0 0
      %3497 = vmatpush1.bf16.msra.mxu0 %v3133
      %3498 = vmatprep.subr.bf16.mxu0 0
      %3499 = vmatpush1.bf16.msra.mxu0 %v3132
      %3500 = vmatprep.subr.bf16.mxu0 0
      %3501 = vmatpush1.bf16.msra.mxu0 %v3131
      %3502 = vmatprep.subr.bf16.mxu0 0
      %3503 = vmatpush2.bf16.msra.mxu0 %v3146
      %3504 = vmatprep.subr.bf16.mxu0 0
      %3505 = vmatpush2.bf16.msra.mxu0 %v3145
      %3506 = vmatprep.subr.bf16.mxu0 0
      %3507 = vmatpush2.bf16.msra.mxu0 %v3144
      %3508 = vmatprep.subr.bf16.mxu0 0
      %3509 = vmatpush2.bf16.msra.mxu0 %v3143
      %3510 = vmatprep.subr.bf16.mxu0 0
      %3511 = vmatpush2.bf16.msra.mxu0 %v3142
      %3512 = vmatprep.subr.bf16.mxu0 0
      %3513 = vmatpush2.bf16.msra.mxu0 %v3141
      %3514 = vmatprep.subr.bf16.mxu0 0
      %3515 = vmatpush2.bf16.msra.mxu0 %v3140
      %3516 = vmatprep.subr.bf16.mxu0 0
      %3517 = vmatpush2.bf16.msra.mxu0 %v3139
      %3518 = vmatprep.mubr.bf16.mxu0 %v3402
      %3519 = vmatmul.mubr.bf16.gmra.mxu0 %v3401
      %v3520 = vpop.f32.mrf.mxu0
      %v3521 = vadd.f32 %v3480, %v3520
      %v3522 = vpop.f32.mrf.mxu0
      %v3523 = vpop.f32.mrf.mxu0
      %v3524 = vadd.f32 %v3483, %v3523
      %v3525 = vpop.f32.mrf.mxu0
      %3526 = vdwg.mxu0
      %3527 = vmatprep.subr.bf16.mxu0 0
      %3528 = vmatpush1.bf16.msra.mxu0 %v3154
      %3529 = vmatprep.subr.bf16.mxu0 0
      %3530 = vmatpush1.bf16.msra.mxu0 %v3153
      %3531 = vmatprep.subr.bf16.mxu0 0
      %3532 = vmatpush1.bf16.msra.mxu0 %v3152
      %3533 = vmatprep.subr.bf16.mxu0 0
      %3534 = vmatpush1.bf16.msra.mxu0 %v3151
      %3535 = vmatprep.subr.bf16.mxu0 0
      %3536 = vmatpush1.bf16.msra.mxu0 %v3150
      %3537 = vmatprep.subr.bf16.mxu0 0
      %3538 = vmatpush1.bf16.msra.mxu0 %v3149
      %3539 = vmatprep.subr.bf16.mxu0 0
      %3540 = vmatpush1.bf16.msra.mxu0 %v3148
      %3541 = vmatprep.subr.bf16.mxu0 0
      %3542 = vmatpush1.bf16.msra.mxu0 %v3147
      %3543 = vmatprep.subr.bf16.mxu0 0
      %3544 = vmatpush2.bf16.msra.mxu0 0
      %3545 = vmatprep.subr.bf16.mxu0 0
      %3546 = vmatpush2.bf16.msra.mxu0 0
      %3547 = vmatprep.subr.bf16.mxu0 0
      %3548 = vmatpush2.bf16.msra.mxu0 0
      %3549 = vmatprep.subr.bf16.mxu0 0
      %3550 = vmatpush2.bf16.msra.mxu0 0
      %3551 = vmatprep.subr.bf16.mxu0 0
      %3552 = vmatpush2.bf16.msra.mxu0 0
      %3553 = vmatprep.subr.bf16.mxu0 0
      %3554 = vmatpush2.bf16.msra.mxu0 0
      %3555 = vmatprep.subr.bf16.mxu0 0
      %3556 = vmatpush2.bf16.msra.mxu0 0
      %3557 = vmatprep.subr.bf16.mxu0 0
      %3558 = vmatpush2.bf16.msra.mxu0 0
      %3559 = vmatprep.mubr.bf16.mxu0 0
      %3560 = vmatmul.mubr.bf16.gmra.mxu0 %v3403
      %v3561 = vpop.f32.mrf.mxu0
      %v3562 = vadd.f32 %v3521, %v3561
      %v3563 = vpop.f32.mrf.mxu0
      %v3564 = vpop.f32.mrf.mxu0
      %v3565 = vadd.f32 %v3524, %v3564
      %v3566 = vpop.f32.mrf.mxu0
      %3567 = vdwg.mxu0
      %v3568 = vmul.f32 %v3562, 0.020408163
      %v3569 = vmul.f32 %v3565, 0.020408163
      %v3570 = vpack.c.bf16 %v3569, %v3568
      %v3571 = vld [vmem:[%s5] sm:$0xf]
      %v3572 = vld [vmem:[%s6] sm:$0x1]
      %v3574 = vlaneseq
      %v3575 = vshrl.u32 %v3574, 7
      %v3576 = vsub.s32 0, %v3575
      %v3577 = vrot.slane %v3572, %v3576
      %3579 = vmatprep.subr.bf16.mxu0 0
      %3580 = vmatpush1.bf16.xpose.msra.mxu0 0
      %3581 = vmatprep.subr.bf16.mxu0 0
      %3582 = vmatpush1.bf16.xpose.msra.mxu0 0
      %3583 = vmatprep.subr.bf16.mxu0 0
      %3584 = vmatpush1.bf16.xpose.msra.mxu0 0
      %3585 = vmatprep.subr.bf16.mxu0 0
      %3586 = vmatpush1.bf16.xpose.msra.mxu0 0
      %3587 = vmatprep.subr.bf16.mxu0 0
      %3588 = vmatpush1.bf16.xpose.msra.mxu0 0
      %3589 = vmatprep.subr.bf16.mxu0 0
      %3590 = vmatpush1.bf16.xpose.msra.mxu0 0
      %3591 = vmatprep.subr.bf16.mxu0 0
      %3592 = vmatpush1.bf16.xpose.msra.mxu0 0
      %3593 = vmatprep.subr.bf16.mxu0 0
      %3594 = vmatpush1.bf16.xpose.msra.mxu0 %v3571
      %3595 = vmatprep.subr.bf16.mxu0 0
      %3596 = vmatpush2.bf16.xpose.msra.mxu0 0
      %3597 = vmatprep.subr.bf16.mxu0 0
      %3598 = vmatpush2.bf16.xpose.msra.mxu0 0
      %3599 = vmatprep.subr.bf16.mxu0 0
      %3600 = vmatpush2.bf16.xpose.msra.mxu0 0
      %3601 = vmatprep.subr.bf16.mxu0 0
      %3602 = vmatpush2.bf16.xpose.msra.mxu0 0
      %3603 = vmatprep.subr.bf16.mxu0 0
      %3604 = vmatpush2.bf16.xpose.msra.mxu0 0
      %3605 = vmatprep.subr.bf16.mxu0 0
      %3606 = vmatpush2.bf16.xpose.msra.mxu0 0
      %3607 = vmatprep.subr.bf16.mxu0 0
      %3608 = vmatpush2.bf16.xpose.msra.mxu0 0
      %3609 = vmatprep.subr.bf16.mxu0 0
      %3610 = vmatpush2.bf16.xpose.msra.mxu0 0
      %3611 = vmatprep.mubr.bf16.mxu0 0
      %3612 = vmatmul.mubr.bf16.gmra.mxu0 %v3570
      %v3613 = vpop.f32.mrf.mxu0
      %v3614 = vadd.f32 %v3577, %v3613
      %v3615 = vpop.f32.mrf.mxu0
      %v3616 = vpop.f32.mrf.mxu0
      %v3617 = vadd.f32 %v3577, %v3616
      %v3618 = vpop.f32.mrf.mxu0
      %3619 = vdwg.mxu0
      %vm3620 = vcmask 64512
      %3621 = vst.msk [vmem:[%s315] sm:$0xff] %vm3620, %v3614
      %3622 = vst.msk [vmem:[%s315 + $0x8] sm:$0xff] %vm3620, %v3617
      %s3623 = smul.u32 2, %s20
      %p3624 = scmp.lt.s32.totalorder %s3623, 3
      %s3625 = scalar_select %p3624, %s3623, 3
      %s3626 = smul.addr %s3625, 8
      %s3627 = scalar_lea.vmem %s7, %s3626
      %s3628 = smul.u32 7, %s20
      %p3629 = scmp.lt.s32.totalorder %s3628, 13
      %s3630 = scalar_select %p3629, %s3628, 13
      %s3631 = smul.addr %s3630, 8
      %s3632 = scalar_lea.vmem %s8, %s3631
      // Predicated region
      $region49: #{swin_trans_fer_forward.1} parent=47 // pred_check
        %p3633 = pneg %p190
      $region50: #{swin_trans_fer_forward.1} parent=47 // pred_check_branch
        %3635 = sbr.rel (%p3633) target = $region52
      $region51: #{swin_trans_fer_forward.1} parent=47 // pred_region
        %s3636 = smul.u32 2, %s20
      $region52: #{swin_trans_fer_forward.1} parent=47 // pred_fallthru
        _
      // Predicated region
      $region53: #{swin_trans_fer_forward.1} parent=47 // pred_check
        %p3637 = pneg %p216
      $region54: #{swin_trans_fer_forward.1} parent=47 // pred_check_branch
        %3639 = sbr.rel (%p3637) target = $region56
      $region55: #{swin_trans_fer_forward.1} parent=47 // pred_region
        %s3640 = smul.u32 7, %s20
      $region56: #{swin_trans_fer_forward.1} parent=47 // pred_fallthru
        _
    $region48: #{swin_trans_fer_forward.1} parent=5 // pred_fallthru
      _
    %p3641 = scmp.le.s32.totalorder 2, %s15
    // Predicated region
    $region57: #{swin_trans_fer_forward.1} parent=5 // pred_check
      %p3642 = pneg %p3641
    $region58: #{swin_trans_fer_forward.1} parent=5 // pred_check_branch
      %3644 = sbr.rel (%p3642) target = $region60
    $region59: #{swin_trans_fer_forward.1} parent=5 // pred_region
      %s3645 = ssub.s32 %s15, 2
      // Predicated region
      $region61: #{swin_trans_fer_forward.1} parent=59 // pred_check
        %p3646 = pneg %p196
      $region62: #{swin_trans_fer_forward.1} parent=59 // pred_check_branch
        %3648 = sbr.rel (%p3646) target = $region64
      $region63: #{swin_trans_fer_forward.1} parent=59 // pred_region
        %s3649 = smul.u32 2, %s21
        %p3650 = scmp.lt.s32.totalorder %s3649, 3
        %s3651 = scalar_select %p3650, %s3649, 3
        %s3652 = smul.addr %s3651, 8
        %s3653 = scalar_lea.vmem %s7, %s3652
      $region64: #{swin_trans_fer_forward.1} parent=59 // pred_fallthru
        _
      // Predicated region
      $region65: #{swin_trans_fer_forward.1} parent=59 // pred_check
        %p3654 = pneg %p222
      $region66: #{swin_trans_fer_forward.1} parent=59 // pred_check_branch
        %3656 = sbr.rel (%p3654) target = $region68
      $region67: #{swin_trans_fer_forward.1} parent=59 // pred_region
        %s3657 = smul.u32 7, %s21
        %p3658 = scmp.lt.s32.totalorder %s3657, 13
        %s3659 = scalar_select %p3658, %s3657, 13
        %s3660 = smul.addr %s3659, 8
        %s3661 = scalar_lea.vmem %s8, %s3660
      $region68: #{swin_trans_fer_forward.1} parent=59 // pred_fallthru
        _
    $region60: #{swin_trans_fer_forward.1} parent=5 // pred_fallthru
      _
  $region6: #{swin_trans_fer_forward.1} parent=0 // loop_footer
    %s19 = sadd.s32 1, %s15
  $region7: #{swin_trans_fer_forward.1} parent=0 // loop_footer_branch
    %14 = sbr.rel target = $region3
  $region8: #{swin_trans_fer_forward.1} parent=0 // loop_exit
    _

</llo_original>
